<compile_context>
chip_gen: v7x
topology: tpu7x:2x2x1
jax: 0.10.0
libtpu: 0.0.40
codegen_flags: <defaults>
</compile_context>

<pallas_src>
import numpy as np
import jax
import jax.numpy as jnp
from jax.experimental import pallas as pl
from jax.experimental.pallas import tpu as pltpu

D_MODEL = 128
NHEAD = 4
HEAD_DIM = D_MODEL // NHEAD
D_FF = 512
NUM_LAYERS = 2
LN_EPS = 1e-5


def _layer_norm(x, g, b):
    mu = jnp.mean(x, axis=-1, keepdims=True)
    var = jnp.mean((x - mu) ** 2, axis=-1, keepdims=True)
    return (x - mu) * jax.lax.rsqrt(var + LN_EPS) * g + b


def denoiser_kernel(x_ref, pe_ref, w_in_ref, b_in_ref,
                    wqkv_ref, bqkv_ref, wo_ref,
                    wff1_ref, bff1_ref, wff2_ref,
                    vecs_ref, w_out_ref, b_out_ref, o_ref):
    x = x_ref[0]                                                     # (L, 2) f32

    # input linear (K=2 -> VPU broadcasts, skip MXU) + positional encoding, f32
    h = (x[:, 0:1] * w_in_ref[0:1, :] + x[:, 1:2] * w_in_ref[1:2, :]
         + b_in_ref[...] + pe_ref[...])                              # (L, D) f32

    scale = 1.0 / float(np.sqrt(HEAD_DIM))

    for l in range(NUM_LAYERS):                                      # unrolled
        vec = vecs_ref[l]                                            # (6, D) f32
        bo, ln1g, ln1b = vec[0:1, :], vec[1:2, :], vec[2:3, :]
        bff2, ln2g, ln2b = vec[3:4, :], vec[4:5, :], vec[5:6, :]

        # --- multi-head self-attention (post-norm encoder layer) ---
        qkv = jnp.dot(h.astype(jnp.bfloat16), wqkv_ref[l],
                      preferred_element_type=jnp.float32) + bqkv_ref[l]
        q = (qkv[:, 0:D_MODEL] * scale).astype(jnp.bfloat16)         # scale folded
        k = qkv[:, D_MODEL:2 * D_MODEL].astype(jnp.bfloat16)
        v = qkv[:, 2 * D_MODEL:3 * D_MODEL].astype(jnp.bfloat16)

        heads = []
        for hi in range(NHEAD):
            s0 = hi * HEAD_DIM
            qh = q[:, s0:s0 + HEAD_DIM]
            kh = k[:, s0:s0 + HEAD_DIM]
            vh = v[:, s0:s0 + HEAD_DIM]
            s = jax.lax.dot_general(qh, kh, (((1,), (1,)), ((), ())),
                                    preferred_element_type=jnp.float32)
            s = s - jnp.max(s, axis=-1, keepdims=True)
            p = jnp.exp(s)                                           # unnormalized
            denom = jnp.sum(p, axis=-1, keepdims=True)
            oh = jnp.dot(p.astype(jnp.bfloat16), vh,
                         preferred_element_type=jnp.float32)         # (L, hd) f32
            heads.append(oh * pl.reciprocal(denom, approx=True))
        attn_cat = jnp.concatenate(heads, axis=-1)                   # (L, D) f32
        attn = jnp.dot(attn_cat.astype(jnp.bfloat16), wo_ref[l],
                       preferred_element_type=jnp.float32) + bo      # one K=128 dot
        h = _layer_norm(h + attn, ln1g, ln1b)

        # --- feed-forward (relu) ---
        ff = jnp.dot(h.astype(jnp.bfloat16), wff1_ref[l],
                     preferred_element_type=jnp.float32) + bff1_ref[l]
        ff = jnp.maximum(ff, 0.0)
        ff = jnp.dot(ff.astype(jnp.bfloat16), wff2_ref[l],
                     preferred_element_type=jnp.float32) + bff2
        h = _layer_norm(h + ff, ln2g, ln2b)

    # output linear, emitted lane-dense as (2, L): w_out (2, D) . h^T
    out_t = jax.lax.dot_general(w_out_ref[...], h.astype(jnp.bfloat16),
                                (((1,), (1,)), ((), ())),
                                preferred_element_type=jnp.float32) + b_out_ref[...]
    o_ref[0] = out_t                                                 # (2, L)


def transformer_denoiser(x, params):
    """x: (B, 2, L) float32 -> (B, 2, L) float32."""
    B, C, L = x.shape
    assert C == 2
    # Input is tiny; one cheap transpose keeps kernel activations in (L, D).
    x_blc = jnp.transpose(x, (0, 2, 1)).astype(jnp.float32)          # (B, L, 2)

    weights = list(params)

    def full_spec(a):
        nd = a.ndim
        return pl.BlockSpec(a.shape, lambda b, _nd=nd: (0,) * _nd)

    in_specs = [pl.BlockSpec((1, L, 2), lambda b: (b, 0, 0))]
    in_specs += [full_spec(w) for w in weights]

    out = pl.pallas_call(
        denoiser_kernel,
        out_shape=jax.ShapeDtypeStruct((B, 2, L), jnp.float32),
        grid=(B,),
        in_specs=in_specs,
        out_specs=pl.BlockSpec((1, 2, L), lambda b: (b, 0, 0)),
        compiler_params=pltpu.CompilerParams(dimension_semantics=("parallel",)),
    )(x_blc, *weights)

    return out                                                       # (B, 2, L)


def init_params(key, L):
    """Deterministic synthetic parameters. Matmul weights stored bf16 (MXU-native);
    biases / LN params / PE stay f32 (VPU path)."""
    ks = jax.random.split(key, 12)

    def w(k, shape, scale=0.05):
        return jax.random.normal(k, shape, dtype=jnp.float32) * scale

    # positional encoding buffer (first L rows of the max_len=512 table)
    position = np.arange(L, dtype=np.float32)[:, None]
    div_term = np.exp(np.arange(0, D_MODEL, 2, dtype=np.float32)
                      * (-np.log(10000.0) / D_MODEL))
    pe_np = np.zeros((L, D_MODEL), np.float32)
    pe_np[:, 0::2] = np.sin(position * div_term)
    pe_np[:, 1::2] = np.cos(position * div_term)
    pe = jnp.asarray(pe_np)

    w_in = w(ks[0], (2, D_MODEL))                            # Linear(2, d_model), f32 (VPU)
    b_in = w(ks[1], (1, D_MODEL))
    wqkv = w(ks[2], (NUM_LAYERS, D_MODEL, 3 * D_MODEL)).astype(jnp.bfloat16)  # MHA in_proj
    bqkv = w(ks[3], (NUM_LAYERS, 1, 3 * D_MODEL))
    wo = w(ks[4], (NUM_LAYERS, D_MODEL, D_MODEL)).astype(jnp.bfloat16)        # MHA out_proj
    bo = w(ks[5], (NUM_LAYERS, D_MODEL))
    wff1 = w(ks[6], (NUM_LAYERS, D_MODEL, D_FF)).astype(jnp.bfloat16)         # FFN linear1
    bff1 = w(ks[7], (NUM_LAYERS, 1, D_FF))
    wff2 = w(ks[8], (NUM_LAYERS, D_FF, D_MODEL)).astype(jnp.bfloat16)         # FFN linear2
    bff2 = w(ks[9], (NUM_LAYERS, D_MODEL))
    ln1g = jnp.ones((NUM_LAYERS, D_MODEL), jnp.float32)
    ln1b = jnp.zeros((NUM_LAYERS, D_MODEL), jnp.float32)
    ln2g = jnp.ones((NUM_LAYERS, D_MODEL), jnp.float32)
    ln2b = jnp.zeros((NUM_LAYERS, D_MODEL), jnp.float32)
    # pack the six d_model-wide per-layer vectors into one array (fewer inputs)
    vecs = jnp.stack([bo, ln1g, ln1b, bff2, ln2g, ln2b], axis=1)     # (NL, 6, D) f32
    w_out = w(ks[10], (2, D_MODEL)).astype(jnp.bfloat16)             # Linear(d_model, 2), torch layout
    b_out = w(ks[11], (2, 1))

    return (pe, w_in, b_in, wqkv, bqkv, wo, wff1, bff1, wff2, vecs, w_out, b_out)


# ------------------------- pure-JAX reference ------------------------------
def _ref_single(xb, params):
    (pe, w_in, b_in, wqkv, bqkv, wo, wff1, bff1, wff2, vecs, w_out, b_out) = params
    L = xb.shape[0]
    h = xb @ w_in + b_in + pe
    for l in range(NUM_LAYERS):
        bo, ln1g, ln1b, bff2, ln2g, ln2b = [vecs[l, i:i + 1, :] for i in range(6)]
        qkv = h @ wqkv[l].astype(jnp.float32) + bqkv[l]
        q, k, v = (qkv[:, :D_MODEL], qkv[:, D_MODEL:2 * D_MODEL],
                   qkv[:, 2 * D_MODEL:])
        qh = q.reshape(L, NHEAD, HEAD_DIM).transpose(1, 0, 2)
        kh = k.reshape(L, NHEAD, HEAD_DIM).transpose(1, 0, 2)
        vh = v.reshape(L, NHEAD, HEAD_DIM).transpose(1, 0, 2)
        s = jnp.einsum('hqd,hkd->hqk', qh, kh) / np.sqrt(HEAD_DIM)
        p = jax.nn.softmax(s, axis=-1)
        o = jnp.einsum('hqk,hkd->hqd', p, vh).transpose(1, 0, 2).reshape(L, D_MODEL)
        attn = o @ wo[l].astype(jnp.float32) + bo
        h = _layer_norm(h + attn, ln1g, ln1b)
        ff = jnp.maximum(h @ wff1[l].astype(jnp.float32) + bff1[l], 0.0)
        ff = ff @ wff2[l].astype(jnp.float32) + bff2
        h = _layer_norm(h + ff, ln2g, ln2b)
    return h @ w_out.astype(jnp.float32).T + b_out.T                 # (L, 2)


def ref_forward(x, params):
    x_blc = jnp.transpose(x, (0, 2, 1)).astype(jnp.float32)
    out = jax.vmap(lambda xb: _ref_single(xb, params))(x_blc)        # (B, L, 2)
    return jnp.transpose(out, (0, 2, 1))                             # (B, 2, L)


if __name__ == "__main__":
    B, L = 2, 8
    key = jax.random.PRNGKey(0)
    k_x, k_p = jax.random.split(key)
    x = jax.random.normal(k_x, (B, 2, L), dtype=jnp.float32)
    params = init_params(k_p, L)

    out = transformer_denoiser(x, params)
    out = jax.block_until_ready(out)
    assert out.shape == (B, 2, L)

    ref = ref_forward(x, params)
    np.testing.assert_allclose(np.asarray(out), np.asarray(ref),
                               rtol=2e-2, atol=2e-2)
    print("KERNEL_OK")
</pallas_src>

<mosaic_0001>
module attributes {stable_mosaic.version = 11 : i64} {
  func.func @denoiser_kernel(%arg0: i32, %arg1: memref<1x8x2xf32, #tpu.memory_space<vmem>>, %arg2: memref<8x128xf32, #tpu.memory_space<vmem>>, %arg3: memref<2x128xf32, #tpu.memory_space<vmem>>, %arg4: memref<1x128xf32, #tpu.memory_space<vmem>>, %arg5: memref<2x128x384xbf16, #tpu.memory_space<vmem>>, %arg6: memref<2x1x384xf32, #tpu.memory_space<vmem>>, %arg7: memref<2x128x128xbf16, #tpu.memory_space<vmem>>, %arg8: memref<2x128x512xbf16, #tpu.memory_space<vmem>>, %arg9: memref<2x1x512xf32, #tpu.memory_space<vmem>>, %arg10: memref<2x512x128xbf16, #tpu.memory_space<vmem>>, %arg11: memref<2x6x128xf32, #tpu.memory_space<vmem>>, %arg12: memref<2x128xbf16, #tpu.memory_space<vmem>>, %arg13: memref<2x1xf32, #tpu.memory_space<vmem>>, %arg14: memref<1x2x8xf32, #tpu.memory_space<vmem>>) attributes {dimension_semantics = [#tpu.dimension_semantics<parallel>], iteration_bounds = array<i64: 2>, scalar_prefetch = 0 : i64, scratch_operands = 0 : i64, tpu.core_type = #tpu.core_type<tc>, window_params = [{transform_indices = @transform_0, window_bounds = array<i64: 1, 8, 2>}, {pipeline_mode = #tpu.pipeline_mode<synchronous>, transform_indices = @transform_1, window_bounds = array<i64: 8, 128>}, {pipeline_mode = #tpu.pipeline_mode<synchronous>, transform_indices = @transform_2, window_bounds = array<i64: 2, 128>}, {pipeline_mode = #tpu.pipeline_mode<synchronous>, transform_indices = @transform_3, window_bounds = array<i64: 1, 128>}, {pipeline_mode = #tpu.pipeline_mode<synchronous>, transform_indices = @transform_4, window_bounds = array<i64: 2, 128, 384>}, {pipeline_mode = #tpu.pipeline_mode<synchronous>, transform_indices = @transform_5, window_bounds = array<i64: 2, 1, 384>}, {pipeline_mode = #tpu.pipeline_mode<synchronous>, transform_indices = @transform_6, window_bounds = array<i64: 2, 128, 128>}, {pipeline_mode = #tpu.pipeline_mode<synchronous>, transform_indices = @transform_7, window_bounds = array<i64: 2, 128, 512>}, {pipeline_mode = #tpu.pipeline_mode<synchronous>, transform_indices = @transform_8, window_bounds = array<i64: 2, 1, 512>}, {pipeline_mode = #tpu.pipeline_mode<synchronous>, transform_indices = @transform_9, window_bounds = array<i64: 2, 512, 128>}, {pipeline_mode = #tpu.pipeline_mode<synchronous>, transform_indices = @transform_10, window_bounds = array<i64: 2, 6, 128>}, {pipeline_mode = #tpu.pipeline_mode<synchronous>, transform_indices = @transform_11, window_bounds = array<i64: 2, 128>}, {pipeline_mode = #tpu.pipeline_mode<synchronous>, transform_indices = @transform_12, window_bounds = array<i64: 2, 1>}, {transform_indices = @transform_13, window_bounds = array<i64: 1, 2, 8>}]} {
    %c0 = arith.constant 0 : index
    %c0_0 = arith.constant 0 : index
    %c0_1 = arith.constant 0 : index
    %0 = vector.load %arg1[%c0, %c0_0, %c0_1] : memref<1x8x2xf32, #tpu.memory_space<vmem>>, vector<1x8x2xf32>
    %1 = vector.shape_cast %0 : vector<1x8x2xf32> to vector<8x2xf32>
    %2 = vector.extract_strided_slice %1 {offsets = [0, 0], sizes = [8, 1], strides = [1, 1]} : vector<8x2xf32> to vector<8x1xf32>
    %c0_2 = arith.constant 0 : index
    %c0_3 = arith.constant 0 : index
    %3 = vector.load %arg3[%c0_2, %c0_3] : memref<2x128xf32, #tpu.memory_space<vmem>>, vector<1x128xf32>
    %4 = vector.broadcast %2 : vector<8x1xf32> to vector<8x128xf32>
    %5 = vector.broadcast %3 : vector<1x128xf32> to vector<8x128xf32>
    %6 = arith.mulf %4, %5 : vector<8x128xf32>
    %7 = vector.extract_strided_slice %1 {offsets = [0, 1], sizes = [8, 1], strides = [1, 1]} : vector<8x2xf32> to vector<8x1xf32>
    %c1 = arith.constant 1 : index
    %c0_4 = arith.constant 0 : index
    %8 = vector.load %arg3[%c1, %c0_4] : memref<2x128xf32, #tpu.memory_space<vmem>>, vector<1x128xf32>
    %9 = vector.broadcast %7 : vector<8x1xf32> to vector<8x128xf32>
    %10 = vector.broadcast %8 : vector<1x128xf32> to vector<8x128xf32>
    %11 = arith.mulf %9, %10 : vector<8x128xf32>
    %12 = arith.addf %6, %11 : vector<8x128xf32>
    %c0_5 = arith.constant 0 : index
    %c0_6 = arith.constant 0 : index
    %13 = vector.load %arg4[%c0_5, %c0_6] : memref<1x128xf32, #tpu.memory_space<vmem>>, vector<1x128xf32>
    %14 = vector.broadcast %13 : vector<1x128xf32> to vector<8x128xf32>
    %15 = arith.addf %12, %14 : vector<8x128xf32>
    %c0_7 = arith.constant 0 : index
    %c0_8 = arith.constant 0 : index
    %16 = vector.load %arg2[%c0_7, %c0_8] : memref<8x128xf32, #tpu.memory_space<vmem>>, vector<8x128xf32>
    %17 = arith.addf %15, %16 : vector<8x128xf32>
    %c0_9 = arith.constant 0 : index
    %c0_10 = arith.constant 0 : index
    %c0_11 = arith.constant 0 : index
    %18 = vector.load %arg11[%c0_9, %c0_10, %c0_11] : memref<2x6x128xf32, #tpu.memory_space<vmem>>, vector<1x6x128xf32>
    %19 = vector.shape_cast %18 : vector<1x6x128xf32> to vector<6x128xf32>
    %20 = vector.extract_strided_slice %19 {offsets = [0, 0], sizes = [1, 128], strides = [1, 1]} : vector<6x128xf32> to vector<1x128xf32>
    %21 = vector.extract_strided_slice %19 {offsets = [1, 0], sizes = [1, 128], strides = [1, 1]} : vector<6x128xf32> to vector<1x128xf32>
    %22 = vector.extract_strided_slice %19 {offsets = [2, 0], sizes = [1, 128], strides = [1, 1]} : vector<6x128xf32> to vector<1x128xf32>
    %23 = vector.extract_strided_slice %19 {offsets = [3, 0], sizes = [1, 128], strides = [1, 1]} : vector<6x128xf32> to vector<1x128xf32>
    %24 = vector.extract_strided_slice %19 {offsets = [4, 0], sizes = [1, 128], strides = [1, 1]} : vector<6x128xf32> to vector<1x128xf32>
    %25 = vector.extract_strided_slice %19 {offsets = [5, 0], sizes = [1, 128], strides = [1, 1]} : vector<6x128xf32> to vector<1x128xf32>
    %26 = arith.truncf %17 : vector<8x128xf32> to vector<8x128xbf16>
    %c0_12 = arith.constant 0 : index
    %c0_13 = arith.constant 0 : index
    %c0_14 = arith.constant 0 : index
    %27 = vector.load %arg5[%c0_12, %c0_13, %c0_14] : memref<2x128x384xbf16, #tpu.memory_space<vmem>>, vector<1x128x384xbf16>
    %28 = vector.shape_cast %27 : vector<1x128x384xbf16> to vector<128x384xbf16>
    %cst = arith.constant dense<0.000000e+00> : vector<8x384xf32>
    %29 = tpu.matmul %26, %28, %cst {dimension_numbers = #tpu.dot_dimension_numbers<[1], [0], [0], [1], [0, 0, 1, 1], [], []>} : vector<8x128xbf16>, vector<128x384xbf16>, vector<8x384xf32> -> vector<8x384xf32>
    %c0_15 = arith.constant 0 : index
    %c0_16 = arith.constant 0 : index
    %c0_17 = arith.constant 0 : index
    %30 = vector.load %arg6[%c0_15, %c0_16, %c0_17] : memref<2x1x384xf32, #tpu.memory_space<vmem>>, vector<1x1x384xf32>
    %31 = vector.shape_cast %30 : vector<1x1x384xf32> to vector<1x384xf32>
    %32 = vector.broadcast %31 : vector<1x384xf32> to vector<8x384xf32>
    %33 = arith.addf %29, %32 : vector<8x384xf32>
    %34 = vector.extract_strided_slice %33 {offsets = [0, 0], sizes = [8, 128], strides = [1, 1]} : vector<8x384xf32> to vector<8x128xf32>
    %cst_18 = arith.constant 0.176776692 : f32
    %35 = vector.broadcast %cst_18 : f32 to vector<8x128xf32>
    %36 = arith.mulf %34, %35 : vector<8x128xf32>
    %37 = arith.truncf %36 : vector<8x128xf32> to vector<8x128xbf16>
    %38 = vector.extract_strided_slice %33 {offsets = [0, 128], sizes = [8, 128], strides = [1, 1]} : vector<8x384xf32> to vector<8x128xf32>
    %39 = arith.truncf %38 : vector<8x128xf32> to vector<8x128xbf16>
    %40 = vector.extract_strided_slice %33 {offsets = [0, 256], sizes = [8, 128], strides = [1, 1]} : vector<8x384xf32> to vector<8x128xf32>
    %41 = arith.truncf %40 : vector<8x128xf32> to vector<8x128xbf16>
    %42 = vector.extract_strided_slice %37 {offsets = [0, 0], sizes = [8, 32], strides = [1, 1]} : vector<8x128xbf16> to vector<8x32xbf16>
    %43 = vector.extract_strided_slice %39 {offsets = [0, 0], sizes = [8, 32], strides = [1, 1]} : vector<8x128xbf16> to vector<8x32xbf16>
    %44 = vector.extract_strided_slice %41 {offsets = [0, 0], sizes = [8, 32], strides = [1, 1]} : vector<8x128xbf16> to vector<8x32xbf16>
    %cst_19 = arith.constant dense<0.000000e+00> : vector<8x8xf32>
    %45 = tpu.matmul %42, %43, %cst_19 {dimension_numbers = #tpu.dot_dimension_numbers<[1], [1], [0], [0], [0, 0, 1, 0], [], []>} : vector<8x32xbf16>, vector<8x32xbf16>, vector<8x8xf32> -> vector<8x8xf32>
    %cst_20 = arith.constant dense<0xFF800000> : vector<8xf32>
    %46 = vector.multi_reduction <maximumf>, %45, %cst_20 [1] : vector<8x8xf32> to vector<8xf32>
    %47 = vector.shape_cast %46 : vector<8xf32> to vector<8x1xf32>
    %48 = vector.broadcast %47 : vector<8x1xf32> to vector<8x8xf32>
    %49 = arith.subf %45, %48 : vector<8x8xf32>
    %50 = math.exp %49 : vector<8x8xf32>
    %cst_21 = arith.constant dense<0.000000e+00> : vector<8xf32>
    %51 = vector.multi_reduction <add>, %50, %cst_21 [1] : vector<8x8xf32> to vector<8xf32>
    %52 = vector.shape_cast %51 : vector<8xf32> to vector<8x1xf32>
    %53 = arith.truncf %50 : vector<8x8xf32> to vector<8x8xbf16>
    %cst_22 = arith.constant dense<0.000000e+00> : vector<8x32xf32>
    %54 = tpu.matmul %53, %44, %cst_22 {dimension_numbers = #tpu.dot_dimension_numbers<[1], [0], [0], [1], [0, 0, 1, 1], [], []>} : vector<8x8xbf16>, vector<8x32xbf16>, vector<8x32xf32> -> vector<8x32xf32>
    %55 = tpu.reciprocal %52 {approx = true} : vector<8x1xf32> -> vector<8x1xf32>
    %56 = vector.broadcast %55 : vector<8x1xf32> to vector<8x32xf32>
    %57 = arith.mulf %54, %56 : vector<8x32xf32>
    %58 = vector.extract_strided_slice %37 {offsets = [0, 32], sizes = [8, 32], strides = [1, 1]} : vector<8x128xbf16> to vector<8x32xbf16>
    %59 = vector.extract_strided_slice %39 {offsets = [0, 32], sizes = [8, 32], strides = [1, 1]} : vector<8x128xbf16> to vector<8x32xbf16>
    %60 = vector.extract_strided_slice %41 {offsets = [0, 32], sizes = [8, 32], strides = [1, 1]} : vector<8x128xbf16> to vector<8x32xbf16>
    %cst_23 = arith.constant dense<0.000000e+00> : vector<8x8xf32>
    %61 = tpu.matmul %58, %59, %cst_23 {dimension_numbers = #tpu.dot_dimension_numbers<[1], [1], [0], [0], [0, 0, 1, 0], [], []>} : vector<8x32xbf16>, vector<8x32xbf16>, vector<8x8xf32> -> vector<8x8xf32>
    %cst_24 = arith.constant dense<0xFF800000> : vector<8xf32>
    %62 = vector.multi_reduction <maximumf>, %61, %cst_24 [1] : vector<8x8xf32> to vector<8xf32>
    %63 = vector.shape_cast %62 : vector<8xf32> to vector<8x1xf32>
    %64 = vector.broadcast %63 : vector<8x1xf32> to vector<8x8xf32>
    %65 = arith.subf %61, %64 : vector<8x8xf32>
    %66 = math.exp %65 : vector<8x8xf32>
    %cst_25 = arith.constant dense<0.000000e+00> : vector<8xf32>
    %67 = vector.multi_reduction <add>, %66, %cst_25 [1] : vector<8x8xf32> to vector<8xf32>
    %68 = vector.shape_cast %67 : vector<8xf32> to vector<8x1xf32>
    %69 = arith.truncf %66 : vector<8x8xf32> to vector<8x8xbf16>
    %cst_26 = arith.constant dense<0.000000e+00> : vector<8x32xf32>
    %70 = tpu.matmul %69, %60, %cst_26 {dimension_numbers = #tpu.dot_dimension_numbers<[1], [0], [0], [1], [0, 0, 1, 1], [], []>} : vector<8x8xbf16>, vector<8x32xbf16>, vector<8x32xf32> -> vector<8x32xf32>
    %71 = tpu.reciprocal %68 {approx = true} : vector<8x1xf32> -> vector<8x1xf32>
    %72 = vector.broadcast %71 : vector<8x1xf32> to vector<8x32xf32>
    %73 = arith.mulf %70, %72 : vector<8x32xf32>
    %74 = vector.extract_strided_slice %37 {offsets = [0, 64], sizes = [8, 32], strides = [1, 1]} : vector<8x128xbf16> to vector<8x32xbf16>
    %75 = vector.extract_strided_slice %39 {offsets = [0, 64], sizes = [8, 32], strides = [1, 1]} : vector<8x128xbf16> to vector<8x32xbf16>
    %76 = vector.extract_strided_slice %41 {offsets = [0, 64], sizes = [8, 32], strides = [1, 1]} : vector<8x128xbf16> to vector<8x32xbf16>
    %cst_27 = arith.constant dense<0.000000e+00> : vector<8x8xf32>
    %77 = tpu.matmul %74, %75, %cst_27 {dimension_numbers = #tpu.dot_dimension_numbers<[1], [1], [0], [0], [0, 0, 1, 0], [], []>} : vector<8x32xbf16>, vector<8x32xbf16>, vector<8x8xf32> -> vector<8x8xf32>
    %cst_28 = arith.constant dense<0xFF800000> : vector<8xf32>
    %78 = vector.multi_reduction <maximumf>, %77, %cst_28 [1] : vector<8x8xf32> to vector<8xf32>
    %79 = vector.shape_cast %78 : vector<8xf32> to vector<8x1xf32>
    %80 = vector.broadcast %79 : vector<8x1xf32> to vector<8x8xf32>
    %81 = arith.subf %77, %80 : vector<8x8xf32>
    %82 = math.exp %81 : vector<8x8xf32>
    %cst_29 = arith.constant dense<0.000000e+00> : vector<8xf32>
    %83 = vector.multi_reduction <add>, %82, %cst_29 [1] : vector<8x8xf32> to vector<8xf32>
    %84 = vector.shape_cast %83 : vector<8xf32> to vector<8x1xf32>
    %85 = arith.truncf %82 : vector<8x8xf32> to vector<8x8xbf16>
    %cst_30 = arith.constant dense<0.000000e+00> : vector<8x32xf32>
    %86 = tpu.matmul %85, %76, %cst_30 {dimension_numbers = #tpu.dot_dimension_numbers<[1], [0], [0], [1], [0, 0, 1, 1], [], []>} : vector<8x8xbf16>, vector<8x32xbf16>, vector<8x32xf32> -> vector<8x32xf32>
    %87 = tpu.reciprocal %84 {approx = true} : vector<8x1xf32> -> vector<8x1xf32>
    %88 = vector.broadcast %87 : vector<8x1xf32> to vector<8x32xf32>
    %89 = arith.mulf %86, %88 : vector<8x32xf32>
    %90 = vector.extract_strided_slice %37 {offsets = [0, 96], sizes = [8, 32], strides = [1, 1]} : vector<8x128xbf16> to vector<8x32xbf16>
    %91 = vector.extract_strided_slice %39 {offsets = [0, 96], sizes = [8, 32], strides = [1, 1]} : vector<8x128xbf16> to vector<8x32xbf16>
    %92 = vector.extract_strided_slice %41 {offsets = [0, 96], sizes = [8, 32], strides = [1, 1]} : vector<8x128xbf16> to vector<8x32xbf16>
    %cst_31 = arith.constant dense<0.000000e+00> : vector<8x8xf32>
    %93 = tpu.matmul %90, %91, %cst_31 {dimension_numbers = #tpu.dot_dimension_numbers<[1], [1], [0], [0], [0, 0, 1, 0], [], []>} : vector<8x32xbf16>, vector<8x32xbf16>, vector<8x8xf32> -> vector<8x8xf32>
    %cst_32 = arith.constant dense<0xFF800000> : vector<8xf32>
    %94 = vector.multi_reduction <maximumf>, %93, %cst_32 [1] : vector<8x8xf32> to vector<8xf32>
    %95 = vector.shape_cast %94 : vector<8xf32> to vector<8x1xf32>
    %96 = vector.broadcast %95 : vector<8x1xf32> to vector<8x8xf32>
    %97 = arith.subf %93, %96 : vector<8x8xf32>
    %98 = math.exp %97 : vector<8x8xf32>
    %cst_33 = arith.constant dense<0.000000e+00> : vector<8xf32>
    %99 = vector.multi_reduction <add>, %98, %cst_33 [1] : vector<8x8xf32> to vector<8xf32>
    %100 = vector.shape_cast %99 : vector<8xf32> to vector<8x1xf32>
    %101 = arith.truncf %98 : vector<8x8xf32> to vector<8x8xbf16>
    %cst_34 = arith.constant dense<0.000000e+00> : vector<8x32xf32>
    %102 = tpu.matmul %101, %92, %cst_34 {dimension_numbers = #tpu.dot_dimension_numbers<[1], [0], [0], [1], [0, 0, 1, 1], [], []>} : vector<8x8xbf16>, vector<8x32xbf16>, vector<8x32xf32> -> vector<8x32xf32>
    %103 = tpu.reciprocal %100 {approx = true} : vector<8x1xf32> -> vector<8x1xf32>
    %104 = vector.broadcast %103 : vector<8x1xf32> to vector<8x32xf32>
    %105 = arith.mulf %102, %104 : vector<8x32xf32>
    %106 = tpu.concatenate %57, %73, %89, %105 in 1 : vector<8x32xf32>, vector<8x32xf32>, vector<8x32xf32>, vector<8x32xf32> -> vector<8x128xf32>
    %107 = arith.truncf %106 : vector<8x128xf32> to vector<8x128xbf16>
    %c0_35 = arith.constant 0 : index
    %c0_36 = arith.constant 0 : index
    %c0_37 = arith.constant 0 : index
    %108 = vector.load %arg7[%c0_35, %c0_36, %c0_37] : memref<2x128x128xbf16, #tpu.memory_space<vmem>>, vector<1x128x128xbf16>
    %109 = vector.shape_cast %108 : vector<1x128x128xbf16> to vector<128x128xbf16>
    %cst_38 = arith.constant dense<0.000000e+00> : vector<8x128xf32>
    %110 = tpu.matmul %107, %109, %cst_38 {dimension_numbers = #tpu.dot_dimension_numbers<[1], [0], [0], [1], [0, 0, 1, 1], [], []>} : vector<8x128xbf16>, vector<128x128xbf16>, vector<8x128xf32> -> vector<8x128xf32>
    %111 = vector.broadcast %20 : vector<1x128xf32> to vector<8x128xf32>
    %112 = arith.addf %110, %111 : vector<8x128xf32>
    %113 = arith.addf %17, %112 : vector<8x128xf32>
    %cst_39 = arith.constant dense<0.000000e+00> : vector<8xf32>
    %114 = vector.multi_reduction <add>, %113, %cst_39 [1] : vector<8x128xf32> to vector<8xf32>
    %115 = vector.shape_cast %114 : vector<8xf32> to vector<8x1xf32>
    %cst_40 = arith.constant 1.280000e+02 : f32
    %116 = vector.broadcast %cst_40 : f32 to vector<8x1xf32>
    %117 = arith.divf %115, %116 : vector<8x1xf32>
    %118 = vector.broadcast %117 : vector<8x1xf32> to vector<8x128xf32>
    %119 = arith.subf %113, %118 : vector<8x128xf32>
    %120 = arith.mulf %119, %119 : vector<8x128xf32>
    %cst_41 = arith.constant dense<0.000000e+00> : vector<8xf32>
    %121 = vector.multi_reduction <add>, %120, %cst_41 [1] : vector<8x128xf32> to vector<8xf32>
    %122 = vector.shape_cast %121 : vector<8xf32> to vector<8x1xf32>
    %cst_42 = arith.constant 1.280000e+02 : f32
    %123 = vector.broadcast %cst_42 : f32 to vector<8x1xf32>
    %124 = arith.divf %122, %123 : vector<8x1xf32>
    %125 = vector.broadcast %117 : vector<8x1xf32> to vector<8x128xf32>
    %126 = arith.subf %113, %125 : vector<8x128xf32>
    %cst_43 = arith.constant 9.99999974E-6 : f32
    %127 = vector.broadcast %cst_43 : f32 to vector<8x1xf32>
    %128 = arith.addf %124, %127 : vector<8x1xf32>
    %129 = math.rsqrt %128 : vector<8x1xf32>
    %130 = vector.broadcast %129 : vector<8x1xf32> to vector<8x128xf32>
    %131 = arith.mulf %126, %130 : vector<8x128xf32>
    %132 = vector.broadcast %21 : vector<1x128xf32> to vector<8x128xf32>
    %133 = arith.mulf %131, %132 : vector<8x128xf32>
    %134 = vector.broadcast %22 : vector<1x128xf32> to vector<8x128xf32>
    %135 = arith.addf %133, %134 : vector<8x128xf32>
    %136 = arith.truncf %135 : vector<8x128xf32> to vector<8x128xbf16>
    %c0_44 = arith.constant 0 : index
    %c0_45 = arith.constant 0 : index
    %c0_46 = arith.constant 0 : index
    %137 = vector.load %arg8[%c0_44, %c0_45, %c0_46] : memref<2x128x512xbf16, #tpu.memory_space<vmem>>, vector<1x128x512xbf16>
    %138 = vector.shape_cast %137 : vector<1x128x512xbf16> to vector<128x512xbf16>
    %cst_47 = arith.constant dense<0.000000e+00> : vector<8x512xf32>
    %139 = tpu.matmul %136, %138, %cst_47 {dimension_numbers = #tpu.dot_dimension_numbers<[1], [0], [0], [1], [0, 0, 1, 1], [], []>} : vector<8x128xbf16>, vector<128x512xbf16>, vector<8x512xf32> -> vector<8x512xf32>
    %c0_48 = arith.constant 0 : index
    %c0_49 = arith.constant 0 : index
    %c0_50 = arith.constant 0 : index
    %140 = vector.load %arg9[%c0_48, %c0_49, %c0_50] : memref<2x1x512xf32, #tpu.memory_space<vmem>>, vector<1x1x512xf32>
    %141 = vector.shape_cast %140 : vector<1x1x512xf32> to vector<1x512xf32>
    %142 = vector.broadcast %141 : vector<1x512xf32> to vector<8x512xf32>
    %143 = arith.addf %139, %142 : vector<8x512xf32>
    %cst_51 = arith.constant 0.000000e+00 : f32
    %144 = vector.broadcast %cst_51 : f32 to vector<8x512xf32>
    %145 = arith.maximumf %143, %144 : vector<8x512xf32>
    %146 = arith.truncf %145 : vector<8x512xf32> to vector<8x512xbf16>
    %c0_52 = arith.constant 0 : index
    %c0_53 = arith.constant 0 : index
    %c0_54 = arith.constant 0 : index
    %147 = vector.load %arg10[%c0_52, %c0_53, %c0_54] : memref<2x512x128xbf16, #tpu.memory_space<vmem>>, vector<1x512x128xbf16>
    %148 = vector.shape_cast %147 : vector<1x512x128xbf16> to vector<512x128xbf16>
    %cst_55 = arith.constant dense<0.000000e+00> : vector<8x128xf32>
    %149 = tpu.matmul %146, %148, %cst_55 {dimension_numbers = #tpu.dot_dimension_numbers<[1], [0], [0], [1], [0, 0, 1, 1], [], []>} : vector<8x512xbf16>, vector<512x128xbf16>, vector<8x128xf32> -> vector<8x128xf32>
    %150 = vector.broadcast %23 : vector<1x128xf32> to vector<8x128xf32>
    %151 = arith.addf %149, %150 : vector<8x128xf32>
    %152 = arith.addf %135, %151 : vector<8x128xf32>
    %cst_56 = arith.constant dense<0.000000e+00> : vector<8xf32>
    %153 = vector.multi_reduction <add>, %152, %cst_56 [1] : vector<8x128xf32> to vector<8xf32>
    %154 = vector.shape_cast %153 : vector<8xf32> to vector<8x1xf32>
    %cst_57 = arith.constant 1.280000e+02 : f32
    %155 = vector.broadcast %cst_57 : f32 to vector<8x1xf32>
    %156 = arith.divf %154, %155 : vector<8x1xf32>
    %157 = vector.broadcast %156 : vector<8x1xf32> to vector<8x128xf32>
    %158 = arith.subf %152, %157 : vector<8x128xf32>
    %159 = arith.mulf %158, %158 : vector<8x128xf32>
    %cst_58 = arith.constant dense<0.000000e+00> : vector<8xf32>
    %160 = vector.multi_reduction <add>, %159, %cst_58 [1] : vector<8x128xf32> to vector<8xf32>
    %161 = vector.shape_cast %160 : vector<8xf32> to vector<8x1xf32>
    %cst_59 = arith.constant 1.280000e+02 : f32
    %162 = vector.broadcast %cst_59 : f32 to vector<8x1xf32>
    %163 = arith.divf %161, %162 : vector<8x1xf32>
    %164 = vector.broadcast %156 : vector<8x1xf32> to vector<8x128xf32>
    %165 = arith.subf %152, %164 : vector<8x128xf32>
    %cst_60 = arith.constant 9.99999974E-6 : f32
    %166 = vector.broadcast %cst_60 : f32 to vector<8x1xf32>
    %167 = arith.addf %163, %166 : vector<8x1xf32>
    %168 = math.rsqrt %167 : vector<8x1xf32>
    %169 = vector.broadcast %168 : vector<8x1xf32> to vector<8x128xf32>
    %170 = arith.mulf %165, %169 : vector<8x128xf32>
    %171 = vector.broadcast %24 : vector<1x128xf32> to vector<8x128xf32>
    %172 = arith.mulf %170, %171 : vector<8x128xf32>
    %173 = vector.broadcast %25 : vector<1x128xf32> to vector<8x128xf32>
    %174 = arith.addf %172, %173 : vector<8x128xf32>
    %c1_61 = arith.constant 1 : index
    %c0_62 = arith.constant 0 : index
    %c0_63 = arith.constant 0 : index
    %175 = vector.load %arg11[%c1_61, %c0_62, %c0_63] : memref<2x6x128xf32, #tpu.memory_space<vmem>>, vector<1x6x128xf32>
    %176 = vector.shape_cast %175 : vector<1x6x128xf32> to vector<6x128xf32>
    %177 = vector.extract_strided_slice %176 {offsets = [0, 0], sizes = [1, 128], strides = [1, 1]} : vector<6x128xf32> to vector<1x128xf32>
    %178 = vector.extract_strided_slice %176 {offsets = [1, 0], sizes = [1, 128], strides = [1, 1]} : vector<6x128xf32> to vector<1x128xf32>
    %179 = vector.extract_strided_slice %176 {offsets = [2, 0], sizes = [1, 128], strides = [1, 1]} : vector<6x128xf32> to vector<1x128xf32>
    %180 = vector.extract_strided_slice %176 {offsets = [3, 0], sizes = [1, 128], strides = [1, 1]} : vector<6x128xf32> to vector<1x128xf32>
    %181 = vector.extract_strided_slice %176 {offsets = [4, 0], sizes = [1, 128], strides = [1, 1]} : vector<6x128xf32> to vector<1x128xf32>
    %182 = vector.extract_strided_slice %176 {offsets = [5, 0], sizes = [1, 128], strides = [1, 1]} : vector<6x128xf32> to vector<1x128xf32>
    %183 = arith.truncf %174 : vector<8x128xf32> to vector<8x128xbf16>
    %c1_64 = arith.constant 1 : index
    %c0_65 = arith.constant 0 : index
    %c0_66 = arith.constant 0 : index
    %184 = vector.load %arg5[%c1_64, %c0_65, %c0_66] : memref<2x128x384xbf16, #tpu.memory_space<vmem>>, vector<1x128x384xbf16>
    %185 = vector.shape_cast %184 : vector<1x128x384xbf16> to vector<128x384xbf16>
    %cst_67 = arith.constant dense<0.000000e+00> : vector<8x384xf32>
    %186 = tpu.matmul %183, %185, %cst_67 {dimension_numbers = #tpu.dot_dimension_numbers<[1], [0], [0], [1], [0, 0, 1, 1], [], []>} : vector<8x128xbf16>, vector<128x384xbf16>, vector<8x384xf32> -> vector<8x384xf32>
    %c1_68 = arith.constant 1 : index
    %c0_69 = arith.constant 0 : index
    %c0_70 = arith.constant 0 : index
    %187 = vector.load %arg6[%c1_68, %c0_69, %c0_70] : memref<2x1x384xf32, #tpu.memory_space<vmem>>, vector<1x1x384xf32>
    %188 = vector.shape_cast %187 : vector<1x1x384xf32> to vector<1x384xf32>
    %189 = vector.broadcast %188 : vector<1x384xf32> to vector<8x384xf32>
    %190 = arith.addf %186, %189 : vector<8x384xf32>
    %191 = vector.extract_strided_slice %190 {offsets = [0, 0], sizes = [8, 128], strides = [1, 1]} : vector<8x384xf32> to vector<8x128xf32>
    %cst_71 = arith.constant 0.176776692 : f32
    %192 = vector.broadcast %cst_71 : f32 to vector<8x128xf32>
    %193 = arith.mulf %191, %192 : vector<8x128xf32>
    %194 = arith.truncf %193 : vector<8x128xf32> to vector<8x128xbf16>
    %195 = vector.extract_strided_slice %190 {offsets = [0, 128], sizes = [8, 128], strides = [1, 1]} : vector<8x384xf32> to vector<8x128xf32>
    %196 = arith.truncf %195 : vector<8x128xf32> to vector<8x128xbf16>
    %197 = vector.extract_strided_slice %190 {offsets = [0, 256], sizes = [8, 128], strides = [1, 1]} : vector<8x384xf32> to vector<8x128xf32>
    %198 = arith.truncf %197 : vector<8x128xf32> to vector<8x128xbf16>
    %199 = vector.extract_strided_slice %194 {offsets = [0, 0], sizes = [8, 32], strides = [1, 1]} : vector<8x128xbf16> to vector<8x32xbf16>
    %200 = vector.extract_strided_slice %196 {offsets = [0, 0], sizes = [8, 32], strides = [1, 1]} : vector<8x128xbf16> to vector<8x32xbf16>
    %201 = vector.extract_strided_slice %198 {offsets = [0, 0], sizes = [8, 32], strides = [1, 1]} : vector<8x128xbf16> to vector<8x32xbf16>
    %cst_72 = arith.constant dense<0.000000e+00> : vector<8x8xf32>
    %202 = tpu.matmul %199, %200, %cst_72 {dimension_numbers = #tpu.dot_dimension_numbers<[1], [1], [0], [0], [0, 0, 1, 0], [], []>} : vector<8x32xbf16>, vector<8x32xbf16>, vector<8x8xf32> -> vector<8x8xf32>
    %cst_73 = arith.constant dense<0xFF800000> : vector<8xf32>
    %203 = vector.multi_reduction <maximumf>, %202, %cst_73 [1] : vector<8x8xf32> to vector<8xf32>
    %204 = vector.shape_cast %203 : vector<8xf32> to vector<8x1xf32>
    %205 = vector.broadcast %204 : vector<8x1xf32> to vector<8x8xf32>
    %206 = arith.subf %202, %205 : vector<8x8xf32>
    %207 = math.exp %206 : vector<8x8xf32>
    %cst_74 = arith.constant dense<0.000000e+00> : vector<8xf32>
    %208 = vector.multi_reduction <add>, %207, %cst_74 [1] : vector<8x8xf32> to vector<8xf32>
    %209 = vector.shape_cast %208 : vector<8xf32> to vector<8x1xf32>
    %210 = arith.truncf %207 : vector<8x8xf32> to vector<8x8xbf16>
    %cst_75 = arith.constant dense<0.000000e+00> : vector<8x32xf32>
    %211 = tpu.matmul %210, %201, %cst_75 {dimension_numbers = #tpu.dot_dimension_numbers<[1], [0], [0], [1], [0, 0, 1, 1], [], []>} : vector<8x8xbf16>, vector<8x32xbf16>, vector<8x32xf32> -> vector<8x32xf32>
    %212 = tpu.reciprocal %209 {approx = true} : vector<8x1xf32> -> vector<8x1xf32>
    %213 = vector.broadcast %212 : vector<8x1xf32> to vector<8x32xf32>
    %214 = arith.mulf %211, %213 : vector<8x32xf32>
    %215 = vector.extract_strided_slice %194 {offsets = [0, 32], sizes = [8, 32], strides = [1, 1]} : vector<8x128xbf16> to vector<8x32xbf16>
    %216 = vector.extract_strided_slice %196 {offsets = [0, 32], sizes = [8, 32], strides = [1, 1]} : vector<8x128xbf16> to vector<8x32xbf16>
    %217 = vector.extract_strided_slice %198 {offsets = [0, 32], sizes = [8, 32], strides = [1, 1]} : vector<8x128xbf16> to vector<8x32xbf16>
    %cst_76 = arith.constant dense<0.000000e+00> : vector<8x8xf32>
    %218 = tpu.matmul %215, %216, %cst_76 {dimension_numbers = #tpu.dot_dimension_numbers<[1], [1], [0], [0], [0, 0, 1, 0], [], []>} : vector<8x32xbf16>, vector<8x32xbf16>, vector<8x8xf32> -> vector<8x8xf32>
    %cst_77 = arith.constant dense<0xFF800000> : vector<8xf32>
    %219 = vector.multi_reduction <maximumf>, %218, %cst_77 [1] : vector<8x8xf32> to vector<8xf32>
    %220 = vector.shape_cast %219 : vector<8xf32> to vector<8x1xf32>
    %221 = vector.broadcast %220 : vector<8x1xf32> to vector<8x8xf32>
    %222 = arith.subf %218, %221 : vector<8x8xf32>
    %223 = math.exp %222 : vector<8x8xf32>
    %cst_78 = arith.constant dense<0.000000e+00> : vector<8xf32>
    %224 = vector.multi_reduction <add>, %223, %cst_78 [1] : vector<8x8xf32> to vector<8xf32>
    %225 = vector.shape_cast %224 : vector<8xf32> to vector<8x1xf32>
    %226 = arith.truncf %223 : vector<8x8xf32> to vector<8x8xbf16>
    %cst_79 = arith.constant dense<0.000000e+00> : vector<8x32xf32>
    %227 = tpu.matmul %226, %217, %cst_79 {dimension_numbers = #tpu.dot_dimension_numbers<[1], [0], [0], [1], [0, 0, 1, 1], [], []>} : vector<8x8xbf16>, vector<8x32xbf16>, vector<8x32xf32> -> vector<8x32xf32>
    %228 = tpu.reciprocal %225 {approx = true} : vector<8x1xf32> -> vector<8x1xf32>
    %229 = vector.broadcast %228 : vector<8x1xf32> to vector<8x32xf32>
    %230 = arith.mulf %227, %229 : vector<8x32xf32>
    %231 = vector.extract_strided_slice %194 {offsets = [0, 64], sizes = [8, 32], strides = [1, 1]} : vector<8x128xbf16> to vector<8x32xbf16>
    %232 = vector.extract_strided_slice %196 {offsets = [0, 64], sizes = [8, 32], strides = [1, 1]} : vector<8x128xbf16> to vector<8x32xbf16>
    %233 = vector.extract_strided_slice %198 {offsets = [0, 64], sizes = [8, 32], strides = [1, 1]} : vector<8x128xbf16> to vector<8x32xbf16>
    %cst_80 = arith.constant dense<0.000000e+00> : vector<8x8xf32>
    %234 = tpu.matmul %231, %232, %cst_80 {dimension_numbers = #tpu.dot_dimension_numbers<[1], [1], [0], [0], [0, 0, 1, 0], [], []>} : vector<8x32xbf16>, vector<8x32xbf16>, vector<8x8xf32> -> vector<8x8xf32>
    %cst_81 = arith.constant dense<0xFF800000> : vector<8xf32>
    %235 = vector.multi_reduction <maximumf>, %234, %cst_81 [1] : vector<8x8xf32> to vector<8xf32>
    %236 = vector.shape_cast %235 : vector<8xf32> to vector<8x1xf32>
    %237 = vector.broadcast %236 : vector<8x1xf32> to vector<8x8xf32>
    %238 = arith.subf %234, %237 : vector<8x8xf32>
    %239 = math.exp %238 : vector<8x8xf32>
    %cst_82 = arith.constant dense<0.000000e+00> : vector<8xf32>
    %240 = vector.multi_reduction <add>, %239, %cst_82 [1] : vector<8x8xf32> to vector<8xf32>
    %241 = vector.shape_cast %240 : vector<8xf32> to vector<8x1xf32>
    %242 = arith.truncf %239 : vector<8x8xf32> to vector<8x8xbf16>
    %cst_83 = arith.constant dense<0.000000e+00> : vector<8x32xf32>
    %243 = tpu.matmul %242, %233, %cst_83 {dimension_numbers = #tpu.dot_dimension_numbers<[1], [0], [0], [1], [0, 0, 1, 1], [], []>} : vector<8x8xbf16>, vector<8x32xbf16>, vector<8x32xf32> -> vector<8x32xf32>
    %244 = tpu.reciprocal %241 {approx = true} : vector<8x1xf32> -> vector<8x1xf32>
    %245 = vector.broadcast %244 : vector<8x1xf32> to vector<8x32xf32>
    %246 = arith.mulf %243, %245 : vector<8x32xf32>
    %247 = vector.extract_strided_slice %194 {offsets = [0, 96], sizes = [8, 32], strides = [1, 1]} : vector<8x128xbf16> to vector<8x32xbf16>
    %248 = vector.extract_strided_slice %196 {offsets = [0, 96], sizes = [8, 32], strides = [1, 1]} : vector<8x128xbf16> to vector<8x32xbf16>
    %249 = vector.extract_strided_slice %198 {offsets = [0, 96], sizes = [8, 32], strides = [1, 1]} : vector<8x128xbf16> to vector<8x32xbf16>
    %cst_84 = arith.constant dense<0.000000e+00> : vector<8x8xf32>
    %250 = tpu.matmul %247, %248, %cst_84 {dimension_numbers = #tpu.dot_dimension_numbers<[1], [1], [0], [0], [0, 0, 1, 0], [], []>} : vector<8x32xbf16>, vector<8x32xbf16>, vector<8x8xf32> -> vector<8x8xf32>
    %cst_85 = arith.constant dense<0xFF800000> : vector<8xf32>
    %251 = vector.multi_reduction <maximumf>, %250, %cst_85 [1] : vector<8x8xf32> to vector<8xf32>
    %252 = vector.shape_cast %251 : vector<8xf32> to vector<8x1xf32>
    %253 = vector.broadcast %252 : vector<8x1xf32> to vector<8x8xf32>
    %254 = arith.subf %250, %253 : vector<8x8xf32>
    %255 = math.exp %254 : vector<8x8xf32>
    %cst_86 = arith.constant dense<0.000000e+00> : vector<8xf32>
    %256 = vector.multi_reduction <add>, %255, %cst_86 [1] : vector<8x8xf32> to vector<8xf32>
    %257 = vector.shape_cast %256 : vector<8xf32> to vector<8x1xf32>
    %258 = arith.truncf %255 : vector<8x8xf32> to vector<8x8xbf16>
    %cst_87 = arith.constant dense<0.000000e+00> : vector<8x32xf32>
    %259 = tpu.matmul %258, %249, %cst_87 {dimension_numbers = #tpu.dot_dimension_numbers<[1], [0], [0], [1], [0, 0, 1, 1], [], []>} : vector<8x8xbf16>, vector<8x32xbf16>, vector<8x32xf32> -> vector<8x32xf32>
    %260 = tpu.reciprocal %257 {approx = true} : vector<8x1xf32> -> vector<8x1xf32>
    %261 = vector.broadcast %260 : vector<8x1xf32> to vector<8x32xf32>
    %262 = arith.mulf %259, %261 : vector<8x32xf32>
    %263 = tpu.concatenate %214, %230, %246, %262 in 1 : vector<8x32xf32>, vector<8x32xf32>, vector<8x32xf32>, vector<8x32xf32> -> vector<8x128xf32>
    %264 = arith.truncf %263 : vector<8x128xf32> to vector<8x128xbf16>
    %c1_88 = arith.constant 1 : index
    %c0_89 = arith.constant 0 : index
    %c0_90 = arith.constant 0 : index
    %265 = vector.load %arg7[%c1_88, %c0_89, %c0_90] : memref<2x128x128xbf16, #tpu.memory_space<vmem>>, vector<1x128x128xbf16>
    %266 = vector.shape_cast %265 : vector<1x128x128xbf16> to vector<128x128xbf16>
    %cst_91 = arith.constant dense<0.000000e+00> : vector<8x128xf32>
    %267 = tpu.matmul %264, %266, %cst_91 {dimension_numbers = #tpu.dot_dimension_numbers<[1], [0], [0], [1], [0, 0, 1, 1], [], []>} : vector<8x128xbf16>, vector<128x128xbf16>, vector<8x128xf32> -> vector<8x128xf32>
    %268 = vector.broadcast %177 : vector<1x128xf32> to vector<8x128xf32>
    %269 = arith.addf %267, %268 : vector<8x128xf32>
    %270 = arith.addf %174, %269 : vector<8x128xf32>
    %cst_92 = arith.constant dense<0.000000e+00> : vector<8xf32>
    %271 = vector.multi_reduction <add>, %270, %cst_92 [1] : vector<8x128xf32> to vector<8xf32>
    %272 = vector.shape_cast %271 : vector<8xf32> to vector<8x1xf32>
    %cst_93 = arith.constant 1.280000e+02 : f32
    %273 = vector.broadcast %cst_93 : f32 to vector<8x1xf32>
    %274 = arith.divf %272, %273 : vector<8x1xf32>
    %275 = vector.broadcast %274 : vector<8x1xf32> to vector<8x128xf32>
    %276 = arith.subf %270, %275 : vector<8x128xf32>
    %277 = arith.mulf %276, %276 : vector<8x128xf32>
    %cst_94 = arith.constant dense<0.000000e+00> : vector<8xf32>
    %278 = vector.multi_reduction <add>, %277, %cst_94 [1] : vector<8x128xf32> to vector<8xf32>
    %279 = vector.shape_cast %278 : vector<8xf32> to vector<8x1xf32>
    %cst_95 = arith.constant 1.280000e+02 : f32
    %280 = vector.broadcast %cst_95 : f32 to vector<8x1xf32>
    %281 = arith.divf %279, %280 : vector<8x1xf32>
    %282 = vector.broadcast %274 : vector<8x1xf32> to vector<8x128xf32>
    %283 = arith.subf %270, %282 : vector<8x128xf32>
    %cst_96 = arith.constant 9.99999974E-6 : f32
    %284 = vector.broadcast %cst_96 : f32 to vector<8x1xf32>
    %285 = arith.addf %281, %284 : vector<8x1xf32>
    %286 = math.rsqrt %285 : vector<8x1xf32>
    %287 = vector.broadcast %286 : vector<8x1xf32> to vector<8x128xf32>
    %288 = arith.mulf %283, %287 : vector<8x128xf32>
    %289 = vector.broadcast %178 : vector<1x128xf32> to vector<8x128xf32>
    %290 = arith.mulf %288, %289 : vector<8x128xf32>
    %291 = vector.broadcast %179 : vector<1x128xf32> to vector<8x128xf32>
    %292 = arith.addf %290, %291 : vector<8x128xf32>
    %293 = arith.truncf %292 : vector<8x128xf32> to vector<8x128xbf16>
    %c1_97 = arith.constant 1 : index
    %c0_98 = arith.constant 0 : index
    %c0_99 = arith.constant 0 : index
    %294 = vector.load %arg8[%c1_97, %c0_98, %c0_99] : memref<2x128x512xbf16, #tpu.memory_space<vmem>>, vector<1x128x512xbf16>
    %295 = vector.shape_cast %294 : vector<1x128x512xbf16> to vector<128x512xbf16>
    %cst_100 = arith.constant dense<0.000000e+00> : vector<8x512xf32>
    %296 = tpu.matmul %293, %295, %cst_100 {dimension_numbers = #tpu.dot_dimension_numbers<[1], [0], [0], [1], [0, 0, 1, 1], [], []>} : vector<8x128xbf16>, vector<128x512xbf16>, vector<8x512xf32> -> vector<8x512xf32>
    %c1_101 = arith.constant 1 : index
    %c0_102 = arith.constant 0 : index
    %c0_103 = arith.constant 0 : index
    %297 = vector.load %arg9[%c1_101, %c0_102, %c0_103] : memref<2x1x512xf32, #tpu.memory_space<vmem>>, vector<1x1x512xf32>
    %298 = vector.shape_cast %297 : vector<1x1x512xf32> to vector<1x512xf32>
    %299 = vector.broadcast %298 : vector<1x512xf32> to vector<8x512xf32>
    %300 = arith.addf %296, %299 : vector<8x512xf32>
    %cst_104 = arith.constant 0.000000e+00 : f32
    %301 = vector.broadcast %cst_104 : f32 to vector<8x512xf32>
    %302 = arith.maximumf %300, %301 : vector<8x512xf32>
    %303 = arith.truncf %302 : vector<8x512xf32> to vector<8x512xbf16>
    %c1_105 = arith.constant 1 : index
    %c0_106 = arith.constant 0 : index
    %c0_107 = arith.constant 0 : index
    %304 = vector.load %arg10[%c1_105, %c0_106, %c0_107] : memref<2x512x128xbf16, #tpu.memory_space<vmem>>, vector<1x512x128xbf16>
    %305 = vector.shape_cast %304 : vector<1x512x128xbf16> to vector<512x128xbf16>
    %cst_108 = arith.constant dense<0.000000e+00> : vector<8x128xf32>
    %306 = tpu.matmul %303, %305, %cst_108 {dimension_numbers = #tpu.dot_dimension_numbers<[1], [0], [0], [1], [0, 0, 1, 1], [], []>} : vector<8x512xbf16>, vector<512x128xbf16>, vector<8x128xf32> -> vector<8x128xf32>
    %307 = vector.broadcast %180 : vector<1x128xf32> to vector<8x128xf32>
    %308 = arith.addf %306, %307 : vector<8x128xf32>
    %309 = arith.addf %292, %308 : vector<8x128xf32>
    %cst_109 = arith.constant dense<0.000000e+00> : vector<8xf32>
    %310 = vector.multi_reduction <add>, %309, %cst_109 [1] : vector<8x128xf32> to vector<8xf32>
    %311 = vector.shape_cast %310 : vector<8xf32> to vector<8x1xf32>
    %cst_110 = arith.constant 1.280000e+02 : f32
    %312 = vector.broadcast %cst_110 : f32 to vector<8x1xf32>
    %313 = arith.divf %311, %312 : vector<8x1xf32>
    %314 = vector.broadcast %313 : vector<8x1xf32> to vector<8x128xf32>
    %315 = arith.subf %309, %314 : vector<8x128xf32>
    %316 = arith.mulf %315, %315 : vector<8x128xf32>
    %cst_111 = arith.constant dense<0.000000e+00> : vector<8xf32>
    %317 = vector.multi_reduction <add>, %316, %cst_111 [1] : vector<8x128xf32> to vector<8xf32>
    %318 = vector.shape_cast %317 : vector<8xf32> to vector<8x1xf32>
    %cst_112 = arith.constant 1.280000e+02 : f32
    %319 = vector.broadcast %cst_112 : f32 to vector<8x1xf32>
    %320 = arith.divf %318, %319 : vector<8x1xf32>
    %321 = vector.broadcast %313 : vector<8x1xf32> to vector<8x128xf32>
    %322 = arith.subf %309, %321 : vector<8x128xf32>
    %cst_113 = arith.constant 9.99999974E-6 : f32
    %323 = vector.broadcast %cst_113 : f32 to vector<8x1xf32>
    %324 = arith.addf %320, %323 : vector<8x1xf32>
    %325 = math.rsqrt %324 : vector<8x1xf32>
    %326 = vector.broadcast %325 : vector<8x1xf32> to vector<8x128xf32>
    %327 = arith.mulf %322, %326 : vector<8x128xf32>
    %328 = vector.broadcast %181 : vector<1x128xf32> to vector<8x128xf32>
    %329 = arith.mulf %327, %328 : vector<8x128xf32>
    %330 = vector.broadcast %182 : vector<1x128xf32> to vector<8x128xf32>
    %331 = arith.addf %329, %330 : vector<8x128xf32>
    %c0_114 = arith.constant 0 : index
    %c0_115 = arith.constant 0 : index
    %332 = vector.load %arg12[%c0_114, %c0_115] : memref<2x128xbf16, #tpu.memory_space<vmem>>, vector<2x128xbf16>
    %333 = arith.truncf %331 : vector<8x128xf32> to vector<8x128xbf16>
    %cst_116 = arith.constant dense<0.000000e+00> : vector<2x8xf32>
    %334 = tpu.matmul %332, %333, %cst_116 {dimension_numbers = #tpu.dot_dimension_numbers<[1], [1], [0], [0], [0, 0, 1, 0], [], []>} : vector<2x128xbf16>, vector<8x128xbf16>, vector<2x8xf32> -> vector<2x8xf32>
    %c0_117 = arith.constant 0 : index
    %c0_118 = arith.constant 0 : index
    %335 = vector.load %arg13[%c0_117, %c0_118] : memref<2x1xf32, #tpu.memory_space<vmem>>, vector<2x1xf32>
    %336 = vector.broadcast %335 : vector<2x1xf32> to vector<2x8xf32>
    %337 = arith.addf %334, %336 : vector<2x8xf32>
    %c0_119 = arith.constant 0 : index
    %c0_120 = arith.constant 0 : index
    %c0_121 = arith.constant 0 : index
    %338 = vector.load %arg14[%c0_119, %c0_120, %c0_121] : memref<1x2x8xf32, #tpu.memory_space<vmem>>, vector<1x2x8xf32>
    %339 = vector.shape_cast %338 : vector<1x2x8xf32> to vector<2x8xf32>
    %340 = vector.shape_cast %337 : vector<2x8xf32> to vector<1x2x8xf32>
    tpu.vector_store %arg14[%c0_119, %c0_120, %c0_121], %340 {strides = array<i32>} : memref<1x2x8xf32, #tpu.memory_space<vmem>>, vector<1x2x8xf32>,
    return
  }
  func.func @transform_0(%arg0: i32) -> (i32, i32, i32) {
    %c0_i32 = arith.constant 0 : i32
    %c0_i32_0 = arith.constant 0 : i32
    %c0_i32_1 = arith.constant 0 : i32
    return %arg0, %c0_i32, %c0_i32_0 : i32, i32, i32
  }
  func.func @transform_1(%arg0: i32) -> (i32, i32) {
    %c0_i32 = arith.constant 0 : i32
    %c0_i32_0 = arith.constant 0 : i32
    %c0_i32_1 = arith.constant 0 : i32
    return %c0_i32, %c0_i32_0 : i32, i32
  }
  func.func @transform_2(%arg0: i32) -> (i32, i32) {
    %c0_i32 = arith.constant 0 : i32
    %c0_i32_0 = arith.constant 0 : i32
    %c0_i32_1 = arith.constant 0 : i32
    return %c0_i32, %c0_i32_0 : i32, i32
  }
  func.func @transform_3(%arg0: i32) -> (i32, i32) {
    %c0_i32 = arith.constant 0 : i32
    %c0_i32_0 = arith.constant 0 : i32
    %c0_i32_1 = arith.constant 0 : i32
    return %c0_i32, %c0_i32_0 : i32, i32
  }
  func.func @transform_4(%arg0: i32) -> (i32, i32, i32) {
    %c0_i32 = arith.constant 0 : i32
    %c0_i32_0 = arith.constant 0 : i32
    %c0_i32_1 = arith.constant 0 : i32
    %c0_i32_2 = arith.constant 0 : i32
    return %c0_i32, %c0_i32_0, %c0_i32_1 : i32, i32, i32
  }
  func.func @transform_5(%arg0: i32) -> (i32, i32, i32) {
    %c0_i32 = arith.constant 0 : i32
    %c0_i32_0 = arith.constant 0 : i32
    %c0_i32_1 = arith.constant 0 : i32
    %c0_i32_2 = arith.constant 0 : i32
    return %c0_i32, %c0_i32_0, %c0_i32_1 : i32, i32, i32
  }
  func.func @transform_6(%arg0: i32) -> (i32, i32, i32) {
    %c0_i32 = arith.constant 0 : i32
    %c0_i32_0 = arith.constant 0 : i32
    %c0_i32_1 = arith.constant 0 : i32
    %c0_i32_2 = arith.constant 0 : i32
    return %c0_i32, %c0_i32_0, %c0_i32_1 : i32, i32, i32
  }
  func.func @transform_7(%arg0: i32) -> (i32, i32, i32) {
    %c0_i32 = arith.constant 0 : i32
    %c0_i32_0 = arith.constant 0 : i32
    %c0_i32_1 = arith.constant 0 : i32
    %c0_i32_2 = arith.constant 0 : i32
    return %c0_i32, %c0_i32_0, %c0_i32_1 : i32, i32, i32
  }
  func.func @transform_8(%arg0: i32) -> (i32, i32, i32) {
    %c0_i32 = arith.constant 0 : i32
    %c0_i32_0 = arith.constant 0 : i32
    %c0_i32_1 = arith.constant 0 : i32
    %c0_i32_2 = arith.constant 0 : i32
    return %c0_i32, %c0_i32_0, %c0_i32_1 : i32, i32, i32
  }
  func.func @transform_9(%arg0: i32) -> (i32, i32, i32) {
    %c0_i32 = arith.constant 0 : i32
    %c0_i32_0 = arith.constant 0 : i32
    %c0_i32_1 = arith.constant 0 : i32
    %c0_i32_2 = arith.constant 0 : i32
    return %c0_i32, %c0_i32_0, %c0_i32_1 : i32, i32, i32
  }
  func.func @transform_10(%arg0: i32) -> (i32, i32, i32) {
    %c0_i32 = arith.constant 0 : i32
    %c0_i32_0 = arith.constant 0 : i32
    %c0_i32_1 = arith.constant 0 : i32
    %c0_i32_2 = arith.constant 0 : i32
    return %c0_i32, %c0_i32_0, %c0_i32_1 : i32, i32, i32
  }
  func.func @transform_11(%arg0: i32) -> (i32, i32) {
    %c0_i32 = arith.constant 0 : i32
    %c0_i32_0 = arith.constant 0 : i32
    %c0_i32_1 = arith.constant 0 : i32
    return %c0_i32, %c0_i32_0 : i32, i32
  }
  func.func @transform_12(%arg0: i32) -> (i32, i32) {
    %c0_i32 = arith.constant 0 : i32
    %c0_i32_0 = arith.constant 0 : i32
    %c0_i32_1 = arith.constant 0 : i32
    return %c0_i32, %c0_i32_0 : i32, i32
  }
  func.func @transform_13(%arg0: i32) -> (i32, i32, i32) {
    %c0_i32 = arith.constant 0 : i32
    %c0_i32_0 = arith.constant 0 : i32
    %c0_i32_1 = arith.constant 0 : i32
    return %arg0, %c0_i32, %c0_i32_0 : i32, i32, i32
  }
}

</mosaic_0001>

<llo_original>
// kernel: tpu_custom_call.1
$region0: #{tpu_custom_call.1}
  #allocation0 [shape = 'u32[]', space=smem, size = 0x4, offset = 0x4, fixed_abs, tag = 'smem constant byte address 0x4 - core index']
  #allocation1 [shape = 'u32[144,128]{1,0:T(1,128)}', space=vmem, size = 0x12000, scoped, tag = 'internal scratch']
  %s0 = inlined_call_operand.vmem [shape: f32[2,8,2], index: 0, kind: input, shape index: {}]
  %s1 = inlined_call_operand.vmem [shape: f32[8,128], index: 1, kind: input, shape index: {}]
  %s2 = inlined_call_operand.vmem [shape: f32[2,128], index: 2, kind: input, shape index: {}]
  %s3 = inlined_call_operand.vmem [shape: f32[1,128], index: 3, kind: input, shape index: {}]
  %s4 = inlined_call_operand.hbm [shape: bf16[2,128,384], index: 4, kind: input, shape index: {}]
  %s5 = inlined_call_operand.vmem [shape: f32[2,1,384], index: 5, kind: input, shape index: {}]
  %s6 = inlined_call_operand.hbm [shape: bf16[2,128,128], index: 6, kind: input, shape index: {}]
  %s7 = inlined_call_operand.hbm [shape: bf16[2,128,512], index: 7, kind: input, shape index: {}]
  %s8 = inlined_call_operand.vmem [shape: f32[2,1,512], index: 8, kind: input, shape index: {}]
  %s9 = inlined_call_operand.hbm [shape: bf16[2,512,128], index: 9, kind: input, shape index: {}]
  %s10 = inlined_call_operand.vmem [shape: f32[2,6,128], index: 10, kind: input, shape index: {}]
  %s11 = inlined_call_operand.vmem [shape: bf16[2,128], index: 11, kind: input, shape index: {}]
  %s12 = inlined_call_operand.vmem [shape: f32[2,1], index: 12, kind: input, shape index: {}]
  %s13 = inlined_call_operand.hbm [shape: f32[2,2,8], index: 13, kind: output, shape index: {}]
  %s14 = sld [smem:[#allocation0]]
  $region101: #{tpu_custom_call.1} parent=0
    _
  %s16 = ssub.s32 1, %s14
  %s17 = scalar_select 0, %s16, %s14
  $region1: #{tpu_custom_call.1} parent=0
    #allocation2 [shape = 'u8[196608]{0}', space=vmem, size = 0x30000, scoped, tag = 'input window, operand 4, single buffered']
    #allocation3 [shape = 's32[2]{0}', space=sflag, size = 0x8, scoped, tag = 'scoped memory for tpu_custom_call.1']
    #allocation4 [shape = 's32[2]{0}', space=sflag, size = 0x8, scoped, tag = 'scoped memory for tpu_custom_call.1']
    #allocation5 [shape = 'u8[65536]{0}', space=vmem, size = 0x10000, scoped, tag = 'input window, operand 6, single buffered']
    #allocation6 [shape = 's32[1]{0}', space=sflag, size = 0x4, scoped, tag = 'scoped memory for tpu_custom_call.1']
    #allocation7 [shape = 'u8[262144]{0}', space=vmem, size = 0x40000, scoped, tag = 'input window, operand 7, single buffered']
    #allocation8 [shape = 'u8[262144]{0}', space=vmem, size = 0x40000, scoped, tag = 'input window, operand 9, single buffered']
    #allocation9 [shape = 's32[1]{0}', space=sflag, size = 0x4, scoped, tag = 'scoped memory for tpu_custom_call.1']
    #allocation10 [shape = 'u8[2048]{0}', space=vmem, size = 0x800, scoped, tag = 'output window, operand 0']
    %18 = vsyncpa [#allocation3], 0
    %19 = vsyncpa [#allocation6], 0
    %20 = vsyncpa [#allocation9], 0
    %21 = vsyncpa [#allocation4], 0
    %s22 = scalar_lea.sflag [#allocation4], 1
    %23 = vsyncpa %s22, 0
    loop: start=0, step=1, limit=4
    $region2: #{tpu_custom_call.1} parent=1 // loop_pre_header
      _
    $region3: #{tpu_custom_call.1} parent=1 // loop_header
      %s25 = sphi 0, %s29
      %p26 = scmp.ge.s32.totalorder %s25, 4
      %s35 = sphi 0, %s37
      %s38 = sphi 0, %s35
      %s39 = sphi 0, %s38
      %s55 = sphi 0, %s39
      %s59 = sphi 0, %s59
      %s61 = sphi 0, %s59
      %s62 = sphi 0, %s61
      %s76 = sphi 0, %s62
      %s80 = sphi 0, %s80
      %s82 = sphi 0, %s80
      %s83 = sphi 0, %s82
      %s97 = sphi 0, %s83
      %s101 = sphi 0, %s101
      %s103 = sphi 0, %s101
      %s104 = sphi 0, %s103
      %s118 = sphi 0, %s104
      %s122 = sphi 0, %s122
      %s124 = sphi 0, %s122
      %s125 = sphi 0, %s124
      %s139 = sphi 0, %s125
      %s143 = sphi 0, %s143
      %s145 = sphi 0, %s143
      %s146 = sphi 0, %s145
      %s160 = sphi 0, %s146
      %s164 = sphi 0, %s164
      %s166 = sphi 0, %s164
      %s167 = sphi 0, %s166
      %s181 = sphi 0, %s167
      %s185 = sphi 0, %s185
      %s187 = sphi 0, %s185
      %s188 = sphi 0, %s187
      %s202 = sphi 0, %s188
      %s206 = sphi 0, %s206
      %s208 = sphi 0, %s206
      %s209 = sphi 0, %s208
      %s223 = sphi 0, %s209
      %s227 = sphi 0, %s227
      %s229 = sphi 0, %s227
      %s230 = sphi 0, %s229
      %s244 = sphi 0, %s230
      %s248 = sphi 0, %s248
      %s250 = sphi 0, %s248
      %s251 = sphi 0, %s250
      %s265 = sphi 0, %s251
      %s269 = sphi 0, %s269
      %s271 = sphi 0, %s269
      %s272 = sphi 0, %s271
      %s286 = sphi 0, %s272
      %s290 = sphi 0, %s290
      %s292 = sphi 0, %s290
      %s293 = sphi 0, %s292
      %s307 = sphi 0, %s293
      %s313 = sphi 0, %s315
      %s316 = sphi 0, %s313
      %s317 = sphi 0, %s316
      %s333 = sphi 0, %s317
    $region4: #{tpu_custom_call.1} parent=1 // loop_header_branch
      %28 = sbr.rel (%p26) target = $region8
    $region5: #{tpu_custom_call.1} parent=1 // loop_body
      %s30 = ssub.s32 %s25, 1
      %s31 = ssub.s32 %s25, 2
      %s32 = sadd.s32 %s25, 1
      %s33 = ssub.s32 %s25, %s32
      %p34 = scmp.eq.s32.totalorder %s33, 0
      %s36 = sadd.s32 %s35, 1
      %s37 = scalar_select %p34, %s35, %s36
      %p40 = pneg %p34
      %p41 = scmp.eq.s32.totalorder %s25, 1
      %p42 = por %p40, %p41
      %p43 = scmp.ne.s32.totalorder %s35, %s38
      %p44 = scmp.eq.s32.totalorder %s25, 0
      %p45 = por %p43, %p44
      %p46 = scmp.ne.s32.totalorder %s35, %s38
      %p47 = scmp.eq.s32.totalorder %s30, 1
      %p48 = por %p46, %p47
      %p49 = scmp.ne.s32.totalorder %s38, %s39
      %p50 = scmp.eq.s32.totalorder %s30, 0
      %p51 = por %p49, %p50
      %p52 = scmp.ne.s32.totalorder %s38, %s39
      %p53 = scmp.eq.s32.totalorder %s31, 1
      %p54 = por %p52, %p53
      %p56 = scmp.ne.s32.totalorder %s39, %s55
      %p57 = scmp.eq.s32.totalorder %s31, 0
      %p58 = por %p56, %p57
      %s60 = sadd.s32 %s59, 1
      %p63 = scmp.eq.s32.totalorder %s25, 1
      %p64 = scmp.ne.s32.totalorder %s59, %s61
      %p65 = scmp.eq.s32.totalorder %s25, 0
      %p66 = por %p64, %p65
      %p67 = scmp.ne.s32.totalorder %s59, %s61
      %p68 = scmp.eq.s32.totalorder %s30, 1
      %p69 = por %p67, %p68
      %p70 = scmp.ne.s32.totalorder %s61, %s62
      %p71 = scmp.eq.s32.totalorder %s30, 0
      %p72 = por %p70, %p71
      %p73 = scmp.ne.s32.totalorder %s61, %s62
      %p74 = scmp.eq.s32.totalorder %s31, 1
      %p75 = por %p73, %p74
      %p77 = scmp.ne.s32.totalorder %s62, %s76
      %p78 = scmp.eq.s32.totalorder %s31, 0
      %p79 = por %p77, %p78
      %s81 = sadd.s32 %s80, 1
      %p84 = scmp.eq.s32.totalorder %s25, 1
      %p85 = scmp.ne.s32.totalorder %s80, %s82
      %p86 = scmp.eq.s32.totalorder %s25, 0
      %p87 = por %p85, %p86
      %p88 = scmp.ne.s32.totalorder %s80, %s82
      %p89 = scmp.eq.s32.totalorder %s30, 1
      %p90 = por %p88, %p89
      %p91 = scmp.ne.s32.totalorder %s82, %s83
      %p92 = scmp.eq.s32.totalorder %s30, 0
      %p93 = por %p91, %p92
      %p94 = scmp.ne.s32.totalorder %s82, %s83
      %p95 = scmp.eq.s32.totalorder %s31, 1
      %p96 = por %p94, %p95
      %p98 = scmp.ne.s32.totalorder %s83, %s97
      %p99 = scmp.eq.s32.totalorder %s31, 0
      %p100 = por %p98, %p99
      %s102 = sadd.s32 %s101, 1
      %p105 = scmp.eq.s32.totalorder %s25, 1
      %p106 = scmp.ne.s32.totalorder %s101, %s103
      %p107 = scmp.eq.s32.totalorder %s25, 0
      %p108 = por %p106, %p107
      %p109 = scmp.ne.s32.totalorder %s101, %s103
      %p110 = scmp.eq.s32.totalorder %s30, 1
      %p111 = por %p109, %p110
      %p112 = scmp.ne.s32.totalorder %s103, %s104
      %p113 = scmp.eq.s32.totalorder %s30, 0
      %p114 = por %p112, %p113
      %p115 = scmp.ne.s32.totalorder %s103, %s104
      %p116 = scmp.eq.s32.totalorder %s31, 1
      %p117 = por %p115, %p116
      %p119 = scmp.ne.s32.totalorder %s104, %s118
      %p120 = scmp.eq.s32.totalorder %s31, 0
      %p121 = por %p119, %p120
      %s123 = sadd.s32 %s122, 1
      %p126 = scmp.eq.s32.totalorder %s25, 1
      %p127 = scmp.ne.s32.totalorder %s122, %s124
      %p128 = scmp.eq.s32.totalorder %s25, 0
      %p129 = por %p127, %p128
      %p130 = scmp.ne.s32.totalorder %s122, %s124
      %p131 = scmp.eq.s32.totalorder %s30, 1
      %p132 = por %p130, %p131
      %p133 = scmp.ne.s32.totalorder %s124, %s125
      %p134 = scmp.eq.s32.totalorder %s30, 0
      %p135 = por %p133, %p134
      %p136 = scmp.ne.s32.totalorder %s124, %s125
      %p137 = scmp.eq.s32.totalorder %s31, 1
      %p138 = por %p136, %p137
      %p140 = scmp.ne.s32.totalorder %s125, %s139
      %p141 = scmp.eq.s32.totalorder %s31, 0
      %p142 = por %p140, %p141
      %s144 = sadd.s32 %s143, 1
      %p147 = scmp.eq.s32.totalorder %s25, 1
      %p148 = scmp.ne.s32.totalorder %s143, %s145
      %p149 = scmp.eq.s32.totalorder %s25, 0
      %p150 = por %p148, %p149
      %p151 = scmp.ne.s32.totalorder %s143, %s145
      %p152 = scmp.eq.s32.totalorder %s30, 1
      %p153 = por %p151, %p152
      %p154 = scmp.ne.s32.totalorder %s145, %s146
      %p155 = scmp.eq.s32.totalorder %s30, 0
      %p156 = por %p154, %p155
      %p157 = scmp.ne.s32.totalorder %s145, %s146
      %p158 = scmp.eq.s32.totalorder %s31, 1
      %p159 = por %p157, %p158
      %p161 = scmp.ne.s32.totalorder %s146, %s160
      %p162 = scmp.eq.s32.totalorder %s31, 0
      %p163 = por %p161, %p162
      %s165 = sadd.s32 %s164, 1
      %p168 = scmp.eq.s32.totalorder %s25, 1
      %p169 = scmp.ne.s32.totalorder %s164, %s166
      %p170 = scmp.eq.s32.totalorder %s25, 0
      %p171 = por %p169, %p170
      %p172 = scmp.ne.s32.totalorder %s164, %s166
      %p173 = scmp.eq.s32.totalorder %s30, 1
      %p174 = por %p172, %p173
      %p175 = scmp.ne.s32.totalorder %s166, %s167
      %p176 = scmp.eq.s32.totalorder %s30, 0
      %p177 = por %p175, %p176
      %p178 = scmp.ne.s32.totalorder %s166, %s167
      %p179 = scmp.eq.s32.totalorder %s31, 1
      %p180 = por %p178, %p179
      %p182 = scmp.ne.s32.totalorder %s167, %s181
      %p183 = scmp.eq.s32.totalorder %s31, 0
      %p184 = por %p182, %p183
      %s186 = sadd.s32 %s185, 1
      %p189 = scmp.eq.s32.totalorder %s25, 1
      %p190 = scmp.ne.s32.totalorder %s185, %s187
      %p191 = scmp.eq.s32.totalorder %s25, 0
      %p192 = por %p190, %p191
      %p193 = scmp.ne.s32.totalorder %s185, %s187
      %p194 = scmp.eq.s32.totalorder %s30, 1
      %p195 = por %p193, %p194
      %p196 = scmp.ne.s32.totalorder %s187, %s188
      %p197 = scmp.eq.s32.totalorder %s30, 0
      %p198 = por %p196, %p197
      %p199 = scmp.ne.s32.totalorder %s187, %s188
      %p200 = scmp.eq.s32.totalorder %s31, 1
      %p201 = por %p199, %p200
      %p203 = scmp.ne.s32.totalorder %s188, %s202
      %p204 = scmp.eq.s32.totalorder %s31, 0
      %p205 = por %p203, %p204
      %s207 = sadd.s32 %s206, 1
      %p210 = scmp.eq.s32.totalorder %s25, 1
      %p211 = scmp.ne.s32.totalorder %s206, %s208
      %p212 = scmp.eq.s32.totalorder %s25, 0
      %p213 = por %p211, %p212
      %p214 = scmp.ne.s32.totalorder %s206, %s208
      %p215 = scmp.eq.s32.totalorder %s30, 1
      %p216 = por %p214, %p215
      %p217 = scmp.ne.s32.totalorder %s208, %s209
      %p218 = scmp.eq.s32.totalorder %s30, 0
      %p219 = por %p217, %p218
      %p220 = scmp.ne.s32.totalorder %s208, %s209
      %p221 = scmp.eq.s32.totalorder %s31, 1
      %p222 = por %p220, %p221
      %p224 = scmp.ne.s32.totalorder %s209, %s223
      %p225 = scmp.eq.s32.totalorder %s31, 0
      %p226 = por %p224, %p225
      %s228 = sadd.s32 %s227, 1
      %p231 = scmp.eq.s32.totalorder %s25, 1
      %p232 = scmp.ne.s32.totalorder %s227, %s229
      %p233 = scmp.eq.s32.totalorder %s25, 0
      %p234 = por %p232, %p233
      %p235 = scmp.ne.s32.totalorder %s227, %s229
      %p236 = scmp.eq.s32.totalorder %s30, 1
      %p237 = por %p235, %p236
      %p238 = scmp.ne.s32.totalorder %s229, %s230
      %p239 = scmp.eq.s32.totalorder %s30, 0
      %p240 = por %p238, %p239
      %p241 = scmp.ne.s32.totalorder %s229, %s230
      %p242 = scmp.eq.s32.totalorder %s31, 1
      %p243 = por %p241, %p242
      %p245 = scmp.ne.s32.totalorder %s230, %s244
      %p246 = scmp.eq.s32.totalorder %s31, 0
      %p247 = por %p245, %p246
      %s249 = sadd.s32 %s248, 1
      %p252 = scmp.eq.s32.totalorder %s25, 1
      %p253 = scmp.ne.s32.totalorder %s248, %s250
      %p254 = scmp.eq.s32.totalorder %s25, 0
      %p255 = por %p253, %p254
      %p256 = scmp.ne.s32.totalorder %s248, %s250
      %p257 = scmp.eq.s32.totalorder %s30, 1
      %p258 = por %p256, %p257
      %p259 = scmp.ne.s32.totalorder %s250, %s251
      %p260 = scmp.eq.s32.totalorder %s30, 0
      %p261 = por %p259, %p260
      %p262 = scmp.ne.s32.totalorder %s250, %s251
      %p263 = scmp.eq.s32.totalorder %s31, 1
      %p264 = por %p262, %p263
      %p266 = scmp.ne.s32.totalorder %s251, %s265
      %p267 = scmp.eq.s32.totalorder %s31, 0
      %p268 = por %p266, %p267
      %s270 = sadd.s32 %s269, 1
      %p273 = scmp.eq.s32.totalorder %s25, 1
      %p274 = scmp.ne.s32.totalorder %s269, %s271
      %p275 = scmp.eq.s32.totalorder %s25, 0
      %p276 = por %p274, %p275
      %p277 = scmp.ne.s32.totalorder %s269, %s271
      %p278 = scmp.eq.s32.totalorder %s30, 1
      %p279 = por %p277, %p278
      %p280 = scmp.ne.s32.totalorder %s271, %s272
      %p281 = scmp.eq.s32.totalorder %s30, 0
      %p282 = por %p280, %p281
      %p283 = scmp.ne.s32.totalorder %s271, %s272
      %p284 = scmp.eq.s32.totalorder %s31, 1
      %p285 = por %p283, %p284
      %p287 = scmp.ne.s32.totalorder %s272, %s286
      %p288 = scmp.eq.s32.totalorder %s31, 0
      %p289 = por %p287, %p288
      %s291 = sadd.s32 %s290, 1
      %p294 = scmp.eq.s32.totalorder %s25, 1
      %p295 = scmp.ne.s32.totalorder %s290, %s292
      %p296 = scmp.eq.s32.totalorder %s25, 0
      %p297 = por %p295, %p296
      %p298 = scmp.ne.s32.totalorder %s290, %s292
      %p299 = scmp.eq.s32.totalorder %s30, 1
      %p300 = por %p298, %p299
      %p301 = scmp.ne.s32.totalorder %s292, %s293
      %p302 = scmp.eq.s32.totalorder %s30, 0
      %p303 = por %p301, %p302
      %p304 = scmp.ne.s32.totalorder %s292, %s293
      %p305 = scmp.eq.s32.totalorder %s31, 1
      %p306 = por %p304, %p305
      %p308 = scmp.ne.s32.totalorder %s293, %s307
      %p309 = scmp.eq.s32.totalorder %s31, 0
      %p310 = por %p308, %p309
      %s311 = ssub.s32 %s25, %s32
      %p312 = scmp.eq.s32.totalorder %s311, 0
      %s314 = sadd.s32 %s313, 1
      %s315 = scalar_select %p312, %s313, %s314
      %p318 = pneg %p312
      %p319 = scmp.eq.s32.totalorder %s25, 1
      %p320 = por %p318, %p319
      %p321 = scmp.ne.s32.totalorder %s313, %s316
      %p322 = scmp.eq.s32.totalorder %s25, 0
      %p323 = por %p321, %p322
      %p324 = scmp.ne.s32.totalorder %s313, %s316
      %p325 = scmp.eq.s32.totalorder %s30, 1
      %p326 = por %p324, %p325
      %p327 = scmp.ne.s32.totalorder %s316, %s317
      %p328 = scmp.eq.s32.totalorder %s30, 0
      %p329 = por %p327, %p328
      %p330 = scmp.ne.s32.totalorder %s316, %s317
      %p331 = scmp.eq.s32.totalorder %s31, 1
      %p332 = por %p330, %p331
      %p334 = scmp.ne.s32.totalorder %s317, %s333
      %p335 = scmp.eq.s32.totalorder %s31, 0
      %p336 = por %p334, %p335
      %p337 = scmp.le.s32.totalorder 1, %s25
      %p338 = scmp.lt.s32.totalorder %s25, 3
      %p339 = pnand %p337, %p338
      %p340 = pneg %p339
      // Predicated region
      $region9: #{tpu_custom_call.1} parent=5 // pred_check
        _
      $region10: #{tpu_custom_call.1} parent=5 // pred_check_branch
        %342 = sbr.rel (%p339) target = $region12
      $region11: #{tpu_custom_call.1} parent=5 // pred_region
        %s343 = ssub.s32 %s25, 1
        // Predicated region
        $region13: #{tpu_custom_call.1} parent=11 // pred_check
          %p344 = pneg %p72
        $region14: #{tpu_custom_call.1} parent=11 // pred_check_branch
          %346 = sbr.rel (%p344) target = $region16
        $region15: #{tpu_custom_call.1} parent=11 // pred_region
          _
        $region16: #{tpu_custom_call.1} parent=11 // pred_fallthru
          _
        // Predicated region
        $region17: #{tpu_custom_call.1} parent=11 // pred_check
          %p347 = pneg %p93
        $region18: #{tpu_custom_call.1} parent=11 // pred_check_branch
          %349 = sbr.rel (%p347) target = $region20
        $region19: #{tpu_custom_call.1} parent=11 // pred_region
          _
        $region20: #{tpu_custom_call.1} parent=11 // pred_fallthru
          _
        // Predicated region
        $region21: #{tpu_custom_call.1} parent=11 // pred_check
          %p350 = pneg %p114
        $region22: #{tpu_custom_call.1} parent=11 // pred_check_branch
          %352 = sbr.rel (%p350) target = $region24
        $region23: #{tpu_custom_call.1} parent=11 // pred_region
          _
        $region24: #{tpu_custom_call.1} parent=11 // pred_fallthru
          _
        // Predicated region
        $region25: #{tpu_custom_call.1} parent=11 // pred_check
          %p353 = pneg %p135
        $region26: #{tpu_custom_call.1} parent=11 // pred_check_branch
          %355 = sbr.rel (%p353) target = $region28
        $region27: #{tpu_custom_call.1} parent=11 // pred_region
          %s357 = ssub.s32 6144, 6144
          %358 = vsyncadd [#allocation3], %s357
          %s359 = sshll.u32 [#allocation2], 4
          %s360 = int_to_ptr.vmem [resolvable:$true] %s359
          %365 = dma.hbm_to_vmem [thread:$0]  %s4, 6144, %s360, [#allocation3], 192, 192, 12
        $region28: #{tpu_custom_call.1} parent=11 // pred_fallthru
          _
        // Predicated region
        $region29: #{tpu_custom_call.1} parent=11 // pred_check
          %p366 = pneg %p156
        $region30: #{tpu_custom_call.1} parent=11 // pred_check_branch
          %368 = sbr.rel (%p366) target = $region32
        $region31: #{tpu_custom_call.1} parent=11 // pred_region
          _
        $region32: #{tpu_custom_call.1} parent=11 // pred_fallthru
          _
        // Predicated region
        $region33: #{tpu_custom_call.1} parent=11 // pred_check
          %p369 = pneg %p177
        $region34: #{tpu_custom_call.1} parent=11 // pred_check_branch
          %371 = sbr.rel (%p369) target = $region36
        $region35: #{tpu_custom_call.1} parent=11 // pred_region
          %s373 = ssub.s32 2048, 2048
          %374 = vsyncadd [#allocation6], %s373
          %s375 = sshll.u32 [#allocation5], 4
          %s376 = int_to_ptr.vmem [resolvable:$true] %s375
          %381 = dma.hbm_to_vmem [thread:$0]  %s6, 2048, %s376, [#allocation6], 64, 64, 4
        $region36: #{tpu_custom_call.1} parent=11 // pred_fallthru
          _
        // Predicated region
        $region37: #{tpu_custom_call.1} parent=11 // pred_check
          %p382 = pneg %p198
        $region38: #{tpu_custom_call.1} parent=11 // pred_check_branch
          %384 = sbr.rel (%p382) target = $region40
        $region39: #{tpu_custom_call.1} parent=11 // pred_region
          %s386 = ssub.s32 8192, 8192
          %387 = vsyncadd [#allocation6], %s386
          %s388 = sshll.u32 [#allocation7], 4
          %s389 = int_to_ptr.vmem [resolvable:$true] %s388
          %394 = dma.hbm_to_vmem [thread:$0]  %s7, 8192, %s389, [#allocation6], 256, 256, 16
        $region40: #{tpu_custom_call.1} parent=11 // pred_fallthru
          _
        // Predicated region
        $region41: #{tpu_custom_call.1} parent=11 // pred_check
          %p395 = pneg %p219
        $region42: #{tpu_custom_call.1} parent=11 // pred_check_branch
          %397 = sbr.rel (%p395) target = $region44
        $region43: #{tpu_custom_call.1} parent=11 // pred_region
          _
        $region44: #{tpu_custom_call.1} parent=11 // pred_fallthru
          _
        // Predicated region
        $region45: #{tpu_custom_call.1} parent=11 // pred_check
          %p398 = pneg %p240
        $region46: #{tpu_custom_call.1} parent=11 // pred_check_branch
          %400 = sbr.rel (%p398) target = $region48
        $region47: #{tpu_custom_call.1} parent=11 // pred_region
          %s402 = ssub.s32 8192, 8192
          %403 = vsyncadd [#allocation9], %s402
          %s404 = sshll.u32 [#allocation8], 4
          %s405 = int_to_ptr.vmem [resolvable:$true] %s404
          %410 = dma.hbm_to_vmem [thread:$0]  %s9, 8192, %s405, [#allocation9], 64, 64, 4
        $region48: #{tpu_custom_call.1} parent=11 // pred_fallthru
          _
        // Predicated region
        $region49: #{tpu_custom_call.1} parent=11 // pred_check
          %p411 = pneg %p261
        $region50: #{tpu_custom_call.1} parent=11 // pred_check_branch
          %413 = sbr.rel (%p411) target = $region52
        $region51: #{tpu_custom_call.1} parent=11 // pred_region
          _
        $region52: #{tpu_custom_call.1} parent=11 // pred_fallthru
          _
        // Predicated region
        $region53: #{tpu_custom_call.1} parent=11 // pred_check
          %p414 = pneg %p282
        $region54: #{tpu_custom_call.1} parent=11 // pred_check_branch
          %416 = sbr.rel (%p414) target = $region56
        $region55: #{tpu_custom_call.1} parent=11 // pred_region
          _
        $region56: #{tpu_custom_call.1} parent=11 // pred_fallthru
          _
        // Predicated region
        $region57: #{tpu_custom_call.1} parent=11 // pred_check
          %p417 = pneg %p303
        $region58: #{tpu_custom_call.1} parent=11 // pred_check_branch
          %419 = sbr.rel (%p417) target = $region60
        $region59: #{tpu_custom_call.1} parent=11 // pred_region
          _
        $region60: #{tpu_custom_call.1} parent=11 // pred_fallthru
          _
      $region12: #{tpu_custom_call.1} parent=5 // pred_fallthru
        _
      %p420 = scmp.lt.s32.totalorder %s25, 2
      // Predicated region
      $region61: #{tpu_custom_call.1} parent=5 // pred_check
        %p421 = pneg %p420
      $region62: #{tpu_custom_call.1} parent=5 // pred_check_branch
        %423 = sbr.rel (%p421) target = $region64
      $region63: #{tpu_custom_call.1} parent=5 // pred_region
        // Predicated region
        $region65: #{tpu_custom_call.1} parent=63 // pred_check
          %p424 = pneg %p45
        $region66: #{tpu_custom_call.1} parent=63 // pred_check_branch
          %426 = sbr.rel (%p424) target = $region68
        $region67: #{tpu_custom_call.1} parent=63 // pred_region
          %p427 = scmp.lt.s32.totalorder %s25, 1
          %s428 = scalar_select %p427, %s25, 1
          %s429 = smul.addr %s428, 8
          %s430 = scalar_lea.vmem %s0, %s429
        $region68: #{tpu_custom_call.1} parent=63 // pred_fallthru
          _
      $region64: #{tpu_custom_call.1} parent=5 // pred_fallthru
        _
      %p431 = scmp.le.s32.totalorder 1, %s25
      %p432 = scmp.lt.s32.totalorder %s25, 3
      %p433 = pnand %p431, %p432
      %p434 = pneg %p433
      // Predicated region
      $region69: #{tpu_custom_call.1} parent=5 // pred_check
        _
      $region70: #{tpu_custom_call.1} parent=5 // pred_check_branch
        %436 = sbr.rel (%p433) target = $region72
      $region71: #{tpu_custom_call.1} parent=5 // pred_region
        %s437 = ssub.s32 %s25, 1
        // Predicated region
        $region73: #{tpu_custom_call.1} parent=71 // pred_check
          %p438 = pneg %p135
        $region74: #{tpu_custom_call.1} parent=71 // pred_check_branch
          %440 = sbr.rel (%p438) target = $region76
        $region75: #{tpu_custom_call.1} parent=71 // pred_region
          %441 = dma.done [#allocation3], 6144
        $region76: #{tpu_custom_call.1} parent=71 // pred_fallthru
          _
        // Predicated region
        $region77: #{tpu_custom_call.1} parent=71 // pred_check
          %p442 = pneg %p177
        $region78: #{tpu_custom_call.1} parent=71 // pred_check_branch
          %444 = sbr.rel (%p442) target = $region80
        $region79: #{tpu_custom_call.1} parent=71 // pred_region
          %445 = dma.done [#allocation6], 2048
        $region80: #{tpu_custom_call.1} parent=71 // pred_fallthru
          _
        // Predicated region
        $region81: #{tpu_custom_call.1} parent=71 // pred_check
          %p446 = pneg %p198
        $region82: #{tpu_custom_call.1} parent=71 // pred_check_branch
          %448 = sbr.rel (%p446) target = $region84
        $region83: #{tpu_custom_call.1} parent=71 // pred_region
          %449 = dma.done [#allocation6], 8192
        $region84: #{tpu_custom_call.1} parent=71 // pred_fallthru
          _
        // Predicated region
        $region85: #{tpu_custom_call.1} parent=71 // pred_check
          %p450 = pneg %p240
        $region86: #{tpu_custom_call.1} parent=71 // pred_check_branch
          %452 = sbr.rel (%p450) target = $region88
        $region87: #{tpu_custom_call.1} parent=71 // pred_region
          %453 = dma.done [#allocation9], 8192
        $region88: #{tpu_custom_call.1} parent=71 // pred_fallthru
          _
        %p454 = scmp.lt.s32.totalorder %s30, 1
        %s455 = scalar_select %p454, %s30, 1
        %s456 = smul.addr %s455, 8
        %s457 = scalar_lea.vmem %s0, %s456
        %p458 = pneg %p51
        %p459 = pneg %p48
        %p460 = pneg %p72
        %p461 = pneg %p69
        %p462 = pneg %p93
        %p463 = pneg %p90
        %p464 = pneg %p114
        %p465 = pneg %p111
        %p466 = pneg %p135
        %p467 = pneg %p132
        %p468 = pneg %p156
        %p469 = pneg %p153
        %p470 = pneg %p177
        %p471 = pneg %p174
        %p472 = pneg %p198
        %p473 = pneg %p195
        %p474 = pneg %p219
        %p475 = pneg %p216
        %p476 = pneg %p240
        %p477 = pneg %p237
        %p478 = pneg %p261
        %p479 = pneg %p258
        %p480 = pneg %p282
        %p481 = pneg %p279
        %p482 = pneg %p303
        %p483 = pneg %p300
        %p484 = pneg %p329
        %p485 = pneg %p326
        %s486 = sand.u32 %s316, 1
        %s487 = scalar_lea.sflag [#allocation4], %s486
        %s488 = sand.u32 %s316, 1
        %s489 = smul.addr %s488, 2
        %s490 = scalar_lea.vmem [#allocation10], %s489
        %p491 = scmp.lt.s32.totalorder %s30, 1
        %s492 = scalar_select %p491, %s30, 1
        %s493 = smul.addr %s492, 8
        %s494 = scalar_lea.vmem %s0, %s493
        %v496 = vld [vmem:[%s494] sm:$0xff]
        %v497 = vld [vmem:[%s2] sm:$0x1]
        %499 = vset.pattern.permute.xlu0 0
        %500 = vperm.xlu0 %499, %v496
        %v501 = vpop.permute.xlu0 %500
        %v503 = vlaneseq
        %v504 = vshrl.u32 %v503, 7
        %v505 = vsub.s32 0, %v504
        %v506 = vrot.slane %v497, %v505
        %v507 = vmul.f32 %v501, %v506
        %v508 = vld [vmem:[%s2 + $0x1] sm:$0x1]
        %509 = vset.pattern.permute.xlu0 1
        %510 = vperm.xlu0 %509, %v496
        %v511 = vpop.permute.xlu0 %510
        %v513 = vlaneseq
        %v514 = vshrl.u32 %v513, 7
        %v515 = vsub.s32 0, %v514
        %v516 = vrot.slane %v508, %v515
        %v517 = vmul.f32 %v511, %v516
        %v518 = vadd.f32 %v507, %v517
        %v519 = vld [vmem:[%s3] sm:$0x1]
        %v521 = vlaneseq
        %v522 = vshrl.u32 %v521, 7
        %v523 = vsub.s32 0, %v522
        %v524 = vrot.slane %v519, %v523
        %v526 = vadd.f32 %v518, %v524
        %v527 = vld [vmem:[%s1] sm:$0xff]
        %v528 = vadd.f32 %v526, %v527
        %v529 = vld [vmem:[%s10] sm:$0x3f]
        %v530 = vpack.c.bf16 %v528, %v528
        %v531 = vld [vmem:[#allocation2] sm:$0xff]
        %v532 = vld [vmem:[#allocation2 + $0x8] sm:$0xf]
        %v533 = vld [vmem:[#allocation2 + $0xc] sm:$0xff]
        %v534 = vld [vmem:[#allocation2 + $0x14] sm:$0xf]
        %v535 = vld [vmem:[#allocation2 + $0x18] sm:$0xff]
        %v536 = vld [vmem:[#allocation2 + $0x20] sm:$0xf]
        %v537 = vld [vmem:[#allocation2 + $0x24] sm:$0xff]
        %v538 = vld [vmem:[#allocation2 + $0x2c] sm:$0xf]
        %v539 = vld [vmem:[#allocation2 + $0x30] sm:$0xff]
        %v540 = vld [vmem:[#allocation2 + $0x38] sm:$0xf]
        %v541 = vld [vmem:[#allocation2 + $0x3c] sm:$0xff]
        %v542 = vld [vmem:[#allocation2 + $0x44] sm:$0xf]
        %v543 = vld [vmem:[#allocation2 + $0x48] sm:$0xff]
        %v544 = vld [vmem:[#allocation2 + $0x50] sm:$0xf]
        %v545 = vld [vmem:[#allocation2 + $0x54] sm:$0xff]
        %v546 = vld [vmem:[#allocation2 + $0x5c] sm:$0xf]
        %v547 = vld [vmem:[#allocation2 + $0x60] sm:$0xff]
        %v548 = vld [vmem:[#allocation2 + $0x68] sm:$0xf]
        %v549 = vld [vmem:[#allocation2 + $0x6c] sm:$0xff]
        %v550 = vld [vmem:[#allocation2 + $0x74] sm:$0xf]
        %v551 = vld [vmem:[#allocation2 + $0x78] sm:$0xff]
        %v552 = vld [vmem:[#allocation2 + $0x80] sm:$0xf]
        %v553 = vld [vmem:[#allocation2 + $0x84] sm:$0xff]
        %v554 = vld [vmem:[#allocation2 + $0x8c] sm:$0xf]
        %v555 = vld [vmem:[#allocation2 + $0x90] sm:$0xff]
        %v556 = vld [vmem:[#allocation2 + $0x98] sm:$0xf]
        %v557 = vld [vmem:[#allocation2 + $0x9c] sm:$0xff]
        %v558 = vld [vmem:[#allocation2 + $0xa4] sm:$0xf]
        %v559 = vld [vmem:[#allocation2 + $0xa8] sm:$0xff]
        %v560 = vld [vmem:[#allocation2 + $0xb0] sm:$0xf]
        %v561 = vld [vmem:[#allocation2 + $0xb4] sm:$0xff]
        %v562 = vld [vmem:[#allocation2 + $0xbc] sm:$0xf]
        %v563 = vld [vmem:[%s5] sm:$0x7]
        %v565 = vlaneseq
        %v566 = vshrl.u32 %v565, 7
        %v567 = vsub.s32 0, %v566
        %v568 = vrot.slane %v563, %v567
        %v569 = vlaneseq
        %v570 = vshrl.u32 %v569, 7
        %v571 = vsub.s32 1, %v570
        %v572 = vrot.slane %v563, %v571
        %v573 = vlaneseq
        %v574 = vshrl.u32 %v573, 7
        %v575 = vsub.s32 2, %v574
        %v576 = vrot.slane %v563, %v575
        %v612 = vunpack.c.l.b16 %v531
        %v613 = vunpack.c.h.b16 %v531
        %v614 = vunpack.c.l.b16 %v532
        %v615 = vunpack.c.l.b16 %v533
        %v616 = vunpack.c.h.b16 %v533
        %v617 = vunpack.c.l.b16 %v534
        %v618 = vunpack.c.l.b16 %v535
        %v619 = vunpack.c.h.b16 %v535
        %v620 = vunpack.c.l.b16 %v536
        %v621 = vunpack.c.l.b16 %v537
        %v622 = vunpack.c.h.b16 %v537
        %v623 = vunpack.c.l.b16 %v538
        %v624 = vunpack.c.l.b16 %v539
        %v625 = vunpack.c.h.b16 %v539
        %v626 = vunpack.c.l.b16 %v540
        %v627 = vunpack.c.l.b16 %v541
        %v628 = vunpack.c.h.b16 %v541
        %v629 = vunpack.c.l.b16 %v542
        %v630 = vunpack.c.l.b16 %v543
        %v631 = vunpack.c.h.b16 %v543
        %v632 = vunpack.c.l.b16 %v544
        %v633 = vunpack.c.l.b16 %v545
        %v634 = vunpack.c.h.b16 %v545
        %v635 = vunpack.c.l.b16 %v546
        %v636 = vunpack.c.l.b16 %v547
        %v637 = vunpack.c.h.b16 %v547
        %v638 = vunpack.c.l.b16 %v548
        %v639 = vunpack.c.l.b16 %v549
        %v640 = vunpack.c.h.b16 %v549
        %v641 = vunpack.c.l.b16 %v550
        %v642 = vunpack.c.l.b16 %v551
        %v643 = vunpack.c.h.b16 %v551
        %v644 = vunpack.c.l.b16 %v552
        %v645 = vunpack.c.l.b16 %v553
        %v646 = vunpack.c.h.b16 %v553
        %v647 = vunpack.c.l.b16 %v554
        %v648 = vunpack.c.l.b16 %v555
        %v649 = vunpack.c.h.b16 %v555
        %v650 = vunpack.c.l.b16 %v556
        %v651 = vunpack.c.l.b16 %v557
        %v652 = vunpack.c.h.b16 %v557
        %v653 = vunpack.c.l.b16 %v558
        %v654 = vunpack.c.l.b16 %v559
        %v655 = vunpack.c.h.b16 %v559
        %v656 = vunpack.c.l.b16 %v560
        %v657 = vunpack.c.l.b16 %v561
        %v658 = vunpack.c.h.b16 %v561
        %v659 = vunpack.c.l.b16 %v562
        %v660 = vpack.c.b16 %v615, %v612
        %v661 = vpack.c.b16 %v616, %v613
        %v662 = vpack.c.b16 %v617, %v614
        %v663 = vpack.c.b16 %v621, %v618
        %v664 = vpack.c.b16 %v622, %v619
        %v665 = vpack.c.b16 %v623, %v620
        %v666 = vpack.c.b16 %v627, %v624
        %v667 = vpack.c.b16 %v628, %v625
        %v668 = vpack.c.b16 %v629, %v626
        %v669 = vpack.c.b16 %v633, %v630
        %v670 = vpack.c.b16 %v634, %v631
        %v671 = vpack.c.b16 %v635, %v632
        %v672 = vpack.c.b16 %v639, %v636
        %v673 = vpack.c.b16 %v640, %v637
        %v674 = vpack.c.b16 %v641, %v638
        %v675 = vpack.c.b16 %v645, %v642
        %v676 = vpack.c.b16 %v646, %v643
        %v677 = vpack.c.b16 %v647, %v644
        %v678 = vpack.c.b16 %v651, %v648
        %v679 = vpack.c.b16 %v652, %v649
        %v680 = vpack.c.b16 %v653, %v650
        %v681 = vpack.c.b16 %v657, %v654
        %v682 = vpack.c.b16 %v658, %v655
        %v683 = vpack.c.b16 %v659, %v656
        %708 = vmatprep.subr.bf16.mxu0 %v661
        %709 = vmatpush1.bf16.msra.mxu0 %v660
        %710 = vmatprep.subr.bf16.mxu0 %v664
        %711 = vmatpush1.bf16.msra.mxu0 %v663
        %712 = vmatprep.subr.bf16.mxu0 %v667
        %713 = vmatpush1.bf16.msra.mxu0 %v666
        %714 = vmatprep.subr.bf16.mxu0 %v670
        %715 = vmatpush1.bf16.msra.mxu0 %v669
        %716 = vmatprep.subr.bf16.mxu0 %v673
        %717 = vmatpush1.bf16.msra.mxu0 %v672
        %718 = vmatprep.subr.bf16.mxu0 %v676
        %719 = vmatpush1.bf16.msra.mxu0 %v675
        %720 = vmatprep.subr.bf16.mxu0 %v679
        %721 = vmatpush1.bf16.msra.mxu0 %v678
        %722 = vmatprep.subr.bf16.mxu0 %v682
        %723 = vmatpush1.bf16.msra.mxu0 %v681
        %724 = vmatprep.subr.bf16.mxu0 0
        %725 = vmatpush1.bf16.msra.mxu0 0
        %726 = vmatprep.subr.bf16.mxu0 0
        %727 = vmatpush1.bf16.msra.mxu0 0
        %728 = vmatprep.subr.bf16.mxu0 0
        %729 = vmatpush1.bf16.msra.mxu0 0
        %730 = vmatprep.subr.bf16.mxu0 0
        %731 = vmatpush1.bf16.msra.mxu0 0
        %732 = vmatprep.subr.bf16.mxu0 0
        %733 = vmatpush1.bf16.msra.mxu0 0
        %734 = vmatprep.subr.bf16.mxu0 0
        %735 = vmatpush1.bf16.msra.mxu0 0
        %736 = vmatprep.subr.bf16.mxu0 0
        %737 = vmatpush1.bf16.msra.mxu0 0
        %738 = vmatprep.subr.bf16.mxu0 0
        %739 = vmatpush1.bf16.msra.mxu0 0
        %740 = vmatprep.mubr.bf16.mxu0 0
        %741 = vmatmul.mubr.bf16.gmra.mrb[0].mxu0 %v530
        %v742 = vpop.f32.mrb[0].mxu0
        %v743 = vadd.f32 %v568, %v742
        %v744 = vpop.f32.mrb[0].mxu0
        %v745 = vadd.f32 %v572, %v744
        %v746 = vpop.f32.mrb[0].mxu0
        %v747 = vpop.f32.mrb[0].mxu0
        %748 = vdwg.mxu0
        %749 = vmatprep.subr.bf16.mxu0 0
        %750 = vmatpush1.bf16.msra.mxu0 %v662
        %751 = vmatprep.subr.bf16.mxu0 0
        %752 = vmatpush1.bf16.msra.mxu0 %v665
        %753 = vmatprep.subr.bf16.mxu0 0
        %754 = vmatpush1.bf16.msra.mxu0 %v668
        %755 = vmatprep.subr.bf16.mxu0 0
        %756 = vmatpush1.bf16.msra.mxu0 %v671
        %757 = vmatprep.subr.bf16.mxu0 0
        %758 = vmatpush1.bf16.msra.mxu0 %v674
        %759 = vmatprep.subr.bf16.mxu0 0
        %760 = vmatpush1.bf16.msra.mxu0 %v677
        %761 = vmatprep.subr.bf16.mxu0 0
        %762 = vmatpush1.bf16.msra.mxu0 %v680
        %763 = vmatprep.subr.bf16.mxu0 0
        %764 = vmatpush1.bf16.msra.mxu0 %v683
        %765 = vmatprep.subr.bf16.mxu0 0
        %766 = vmatpush1.bf16.msra.mxu0 0
        %767 = vmatprep.subr.bf16.mxu0 0
        %768 = vmatpush1.bf16.msra.mxu0 0
        %769 = vmatprep.subr.bf16.mxu0 0
        %770 = vmatpush1.bf16.msra.mxu0 0
        %771 = vmatprep.subr.bf16.mxu0 0
        %772 = vmatpush1.bf16.msra.mxu0 0
        %773 = vmatprep.subr.bf16.mxu0 0
        %774 = vmatpush1.bf16.msra.mxu0 0
        %775 = vmatprep.subr.bf16.mxu0 0
        %776 = vmatpush1.bf16.msra.mxu0 0
        %777 = vmatprep.subr.bf16.mxu0 0
        %778 = vmatpush1.bf16.msra.mxu0 0
        %779 = vmatprep.subr.bf16.mxu0 0
        %780 = vmatpush1.bf16.msra.mxu0 0
        %781 = vmatprep.mubr.bf16.mxu0 0
        %782 = vmatmul.mubr.bf16.gmra.mrb[0].mxu0 %v530
        %v783 = vpop.f32.mrb[0].mxu0
        %v784 = vadd.f32 %v576, %v783
        %v785 = vpop.f32.mrb[0].mxu0
        %v786 = vpop.f32.mrb[0].mxu0
        %v787 = vpop.f32.mrb[0].mxu0
        %788 = vdwg.mxu0
        %v789 = vmul.f32 %v743, 0.17677669
        %v790 = vpack.c.bf16 %v789, %v789
        %v791 = vpack.c.bf16 %v745, %v745
        %v792 = vpack.c.bf16 %v784, %v784
        %vm793 = vcmask 261120
        %v795 = vsel %vm793, %v790, 0
        %v798 = vsel %vm793, %v791, 0
        %800 = vmatprep.subr.bf16.mxu0 0
        %801 = vmatpush1.bf16.xpose.msra.mxu0 %v798
        %802 = vmatprep.subr.bf16.mxu0 0
        %803 = vmatpush1.bf16.xpose.msra.mxu0 0
        %804 = vmatprep.subr.bf16.mxu0 0
        %805 = vmatpush1.bf16.xpose.msra.mxu0 0
        %806 = vmatprep.subr.bf16.mxu0 0
        %807 = vmatpush1.bf16.xpose.msra.mxu0 0
        %808 = vmatprep.subr.bf16.mxu0 0
        %809 = vmatpush1.bf16.xpose.msra.mxu0 0
        %810 = vmatprep.subr.bf16.mxu0 0
        %811 = vmatpush1.bf16.xpose.msra.mxu0 0
        %812 = vmatprep.subr.bf16.mxu0 0
        %813 = vmatpush1.bf16.xpose.msra.mxu0 0
        %814 = vmatprep.subr.bf16.mxu0 0
        %815 = vmatpush1.bf16.xpose.msra.mxu0 0
        %816 = vmatprep.subr.bf16.mxu0 0
        %817 = vmatpush1.bf16.xpose.msra.mxu0 0
        %818 = vmatprep.subr.bf16.mxu0 0
        %819 = vmatpush1.bf16.xpose.msra.mxu0 0
        %820 = vmatprep.subr.bf16.mxu0 0
        %821 = vmatpush1.bf16.xpose.msra.mxu0 0
        %822 = vmatprep.subr.bf16.mxu0 0
        %823 = vmatpush1.bf16.xpose.msra.mxu0 0
        %824 = vmatprep.subr.bf16.mxu0 0
        %825 = vmatpush1.bf16.xpose.msra.mxu0 0
        %826 = vmatprep.subr.bf16.mxu0 0
        %827 = vmatpush1.bf16.xpose.msra.mxu0 0
        %828 = vmatprep.subr.bf16.mxu0 0
        %829 = vmatpush1.bf16.xpose.msra.mxu0 0
        %830 = vmatprep.subr.bf16.mxu0 0
        %831 = vmatpush1.bf16.xpose.msra.mxu0 0
        %832 = vmatprep.mubr.bf16.mxu0 0
        %833 = vmatmul.mubr.bf16.gmra.mrb[0].mxu0 %v795
        %v834 = vpop.f32.mrb[0].mxu0
        %v835 = vadd.f32 0.0, %v834
        %v836 = vpop.f32.mrb[0].mxu0
        %v837 = vpop.f32.mrb[0].mxu0
        %v838 = vpop.f32.mrb[0].mxu0
        %839 = vdwg.mxu0
        %vm840 = vcmask 64512
        %v841 = vsel %vm840, %v835, -inf
        %842 = vmax.xlane.f32.xlu0 %v841
        %v843 = vpop.xlane.xlu0 %842
        %v844 = vsub.f32 %v835, %v843
        %v845 = vmul.f32 %v844, 1.442695
        %v846 = vpow.pop %v845
        %v847 = vsel %vm840, %v846, 0.0
        %848 = vadd.xlane.f32.xlu0 %v847
        %v849 = vpop.xlane.xlu0 %848
        %v850 = vpack.c.bf16 %v846, %v846
        %v852 = vsel %vm840, %v850, 0
        %vm854 = vcmask 1043456
        %v856 = vsel %vm854, %v792, 0
        %858 = vmatprep.subr.bf16.mxu0 0
        %859 = vmatpush1.bf16.msra.mxu0 %v856
        %860 = vmatprep.subr.bf16.mxu0 0
        %861 = vmatpush1.bf16.msra.mxu0 0
        %862 = vmatprep.subr.bf16.mxu0 0
        %863 = vmatpush1.bf16.msra.mxu0 0
        %864 = vmatprep.subr.bf16.mxu0 0
        %865 = vmatpush1.bf16.msra.mxu0 0
        %866 = vmatprep.subr.bf16.mxu0 0
        %867 = vmatpush1.bf16.msra.mxu0 0
        %868 = vmatprep.subr.bf16.mxu0 0
        %869 = vmatpush1.bf16.msra.mxu0 0
        %870 = vmatprep.subr.bf16.mxu0 0
        %871 = vmatpush1.bf16.msra.mxu0 0
        %872 = vmatprep.subr.bf16.mxu0 0
        %873 = vmatpush1.bf16.msra.mxu0 0
        %874 = vmatprep.subr.bf16.mxu0 0
        %875 = vmatpush1.bf16.msra.mxu0 0
        %876 = vmatprep.subr.bf16.mxu0 0
        %877 = vmatpush1.bf16.msra.mxu0 0
        %878 = vmatprep.subr.bf16.mxu0 0
        %879 = vmatpush1.bf16.msra.mxu0 0
        %880 = vmatprep.subr.bf16.mxu0 0
        %881 = vmatpush1.bf16.msra.mxu0 0
        %882 = vmatprep.subr.bf16.mxu0 0
        %883 = vmatpush1.bf16.msra.mxu0 0
        %884 = vmatprep.subr.bf16.mxu0 0
        %885 = vmatpush1.bf16.msra.mxu0 0
        %886 = vmatprep.subr.bf16.mxu0 0
        %887 = vmatpush1.bf16.msra.mxu0 0
        %888 = vmatprep.subr.bf16.mxu0 0
        %889 = vmatpush1.bf16.msra.mxu0 0
        %890 = vmatprep.mubr.bf16.mxu0 0
        %891 = vmatmul.mubr.bf16.gmra.mrb[0].mxu0 %v852
        %v892 = vpop.f32.mrb[0].mxu0
        %v893 = vadd.f32 0.0, %v892
        %v894 = vpop.f32.mrb[0].mxu0
        %v895 = vpop.f32.mrb[0].mxu0
        %v896 = vpop.f32.mrb[0].mxu0
        %897 = vdwg.mxu0
        %v898 = vrcp.pop %v849
        %v899 = vmul.f32 %v893, %v898
        %901 = vrot.lane.b32.xlu0 %v790, 96
        %v902 = vpop.permute.xlu0 %901
        %904 = vrot.lane.b32.xlu0 %v791, 96
        %v905 = vpop.permute.xlu0 %904
        %v907 = vsel %vm793, %v902, 0
        %v910 = vsel %vm793, %v905, 0
        %912 = vmatprep.subr.bf16.mxu0 0
        %913 = vmatpush1.bf16.xpose.msra.mxu0 %v910
        %914 = vmatprep.subr.bf16.mxu0 0
        %915 = vmatpush1.bf16.xpose.msra.mxu0 0
        %916 = vmatprep.subr.bf16.mxu0 0
        %917 = vmatpush1.bf16.xpose.msra.mxu0 0
        %918 = vmatprep.subr.bf16.mxu0 0
        %919 = vmatpush1.bf16.xpose.msra.mxu0 0
        %920 = vmatprep.subr.bf16.mxu0 0
        %921 = vmatpush1.bf16.xpose.msra.mxu0 0
        %922 = vmatprep.subr.bf16.mxu0 0
        %923 = vmatpush1.bf16.xpose.msra.mxu0 0
        %924 = vmatprep.subr.bf16.mxu0 0
        %925 = vmatpush1.bf16.xpose.msra.mxu0 0
        %926 = vmatprep.subr.bf16.mxu0 0
        %927 = vmatpush1.bf16.xpose.msra.mxu0 0
        %928 = vmatprep.subr.bf16.mxu0 0
        %929 = vmatpush1.bf16.xpose.msra.mxu0 0
        %930 = vmatprep.subr.bf16.mxu0 0
        %931 = vmatpush1.bf16.xpose.msra.mxu0 0
        %932 = vmatprep.subr.bf16.mxu0 0
        %933 = vmatpush1.bf16.xpose.msra.mxu0 0
        %934 = vmatprep.subr.bf16.mxu0 0
        %935 = vmatpush1.bf16.xpose.msra.mxu0 0
        %936 = vmatprep.subr.bf16.mxu0 0
        %937 = vmatpush1.bf16.xpose.msra.mxu0 0
        %938 = vmatprep.subr.bf16.mxu0 0
        %939 = vmatpush1.bf16.xpose.msra.mxu0 0
        %940 = vmatprep.subr.bf16.mxu0 0
        %941 = vmatpush1.bf16.xpose.msra.mxu0 0
        %942 = vmatprep.subr.bf16.mxu0 0
        %943 = vmatpush1.bf16.xpose.msra.mxu0 0
        %944 = vmatprep.mubr.bf16.mxu0 0
        %945 = vmatmul.mubr.bf16.gmra.mrb[0].mxu0 %v907
        %v946 = vpop.f32.mrb[0].mxu0
        %v947 = vadd.f32 0.0, %v946
        %v948 = vpop.f32.mrb[0].mxu0
        %v949 = vpop.f32.mrb[0].mxu0
        %v950 = vpop.f32.mrb[0].mxu0
        %951 = vdwg.mxu0
        %v952 = vsel %vm840, %v947, -inf
        %953 = vmax.xlane.f32.xlu0 %v952
        %v954 = vpop.xlane.xlu0 %953
        %v955 = vsub.f32 %v947, %v954
        %v956 = vmul.f32 %v955, 1.442695
        %v957 = vpow.pop %v956
        %v958 = vsel %vm840, %v957, 0.0
        %959 = vadd.xlane.f32.xlu0 %v958
        %v960 = vpop.xlane.xlu0 %959
        %v961 = vpack.c.bf16 %v957, %v957
        %963 = vrot.lane.b32.xlu0 %v792, 96
        %v964 = vpop.permute.xlu0 %963
        %v966 = vsel %vm840, %v961, 0
        %v969 = vsel %vm854, %v964, 0
        %971 = vmatprep.subr.bf16.mxu0 0
        %972 = vmatpush1.bf16.msra.mxu0 %v969
        %973 = vmatprep.subr.bf16.mxu0 0
        %974 = vmatpush1.bf16.msra.mxu0 0
        %975 = vmatprep.subr.bf16.mxu0 0
        %976 = vmatpush1.bf16.msra.mxu0 0
        %977 = vmatprep.subr.bf16.mxu0 0
        %978 = vmatpush1.bf16.msra.mxu0 0
        %979 = vmatprep.subr.bf16.mxu0 0
        %980 = vmatpush1.bf16.msra.mxu0 0
        %981 = vmatprep.subr.bf16.mxu0 0
        %982 = vmatpush1.bf16.msra.mxu0 0
        %983 = vmatprep.subr.bf16.mxu0 0
        %984 = vmatpush1.bf16.msra.mxu0 0
        %985 = vmatprep.subr.bf16.mxu0 0
        %986 = vmatpush1.bf16.msra.mxu0 0
        %987 = vmatprep.subr.bf16.mxu0 0
        %988 = vmatpush1.bf16.msra.mxu0 0
        %989 = vmatprep.subr.bf16.mxu0 0
        %990 = vmatpush1.bf16.msra.mxu0 0
        %991 = vmatprep.subr.bf16.mxu0 0
        %992 = vmatpush1.bf16.msra.mxu0 0
        %993 = vmatprep.subr.bf16.mxu0 0
        %994 = vmatpush1.bf16.msra.mxu0 0
        %995 = vmatprep.subr.bf16.mxu0 0
        %996 = vmatpush1.bf16.msra.mxu0 0
        %997 = vmatprep.subr.bf16.mxu0 0
        %998 = vmatpush1.bf16.msra.mxu0 0
        %999 = vmatprep.subr.bf16.mxu0 0
        %1000 = vmatpush1.bf16.msra.mxu0 0
        %1001 = vmatprep.subr.bf16.mxu0 0
        %1002 = vmatpush1.bf16.msra.mxu0 0
        %1003 = vmatprep.mubr.bf16.mxu0 0
        %1004 = vmatmul.mubr.bf16.gmra.mrb[0].mxu0 %v966
        %v1005 = vpop.f32.mrb[0].mxu0
        %v1006 = vadd.f32 0.0, %v1005
        %v1007 = vpop.f32.mrb[0].mxu0
        %v1008 = vpop.f32.mrb[0].mxu0
        %v1009 = vpop.f32.mrb[0].mxu0
        %1010 = vdwg.mxu0
        %v1011 = vrcp.pop %v960
        %v1012 = vmul.f32 %v1006, %v1011
        %1013 = vrot.lane.b32.xlu0 %v790, 64
        %v1014 = vpop.permute.xlu0 %1013
        %1015 = vrot.lane.b32.xlu0 %v791, 64
        %v1016 = vpop.permute.xlu0 %1015
        %v1018 = vsel %vm793, %v1014, 0
        %v1021 = vsel %vm793, %v1016, 0
        %1023 = vmatprep.subr.bf16.mxu0 0
        %1024 = vmatpush1.bf16.xpose.msra.mxu0 %v1021
        %1025 = vmatprep.subr.bf16.mxu0 0
        %1026 = vmatpush1.bf16.xpose.msra.mxu0 0
        %1027 = vmatprep.subr.bf16.mxu0 0
        %1028 = vmatpush1.bf16.xpose.msra.mxu0 0
        %1029 = vmatprep.subr.bf16.mxu0 0
        %1030 = vmatpush1.bf16.xpose.msra.mxu0 0
        %1031 = vmatprep.subr.bf16.mxu0 0
        %1032 = vmatpush1.bf16.xpose.msra.mxu0 0
        %1033 = vmatprep.subr.bf16.mxu0 0
        %1034 = vmatpush1.bf16.xpose.msra.mxu0 0
        %1035 = vmatprep.subr.bf16.mxu0 0
        %1036 = vmatpush1.bf16.xpose.msra.mxu0 0
        %1037 = vmatprep.subr.bf16.mxu0 0
        %1038 = vmatpush1.bf16.xpose.msra.mxu0 0
        %1039 = vmatprep.subr.bf16.mxu0 0
        %1040 = vmatpush1.bf16.xpose.msra.mxu0 0
        %1041 = vmatprep.subr.bf16.mxu0 0
        %1042 = vmatpush1.bf16.xpose.msra.mxu0 0
        %1043 = vmatprep.subr.bf16.mxu0 0
        %1044 = vmatpush1.bf16.xpose.msra.mxu0 0
        %1045 = vmatprep.subr.bf16.mxu0 0
        %1046 = vmatpush1.bf16.xpose.msra.mxu0 0
        %1047 = vmatprep.subr.bf16.mxu0 0
        %1048 = vmatpush1.bf16.xpose.msra.mxu0 0
        %1049 = vmatprep.subr.bf16.mxu0 0
        %1050 = vmatpush1.bf16.xpose.msra.mxu0 0
        %1051 = vmatprep.subr.bf16.mxu0 0
        %1052 = vmatpush1.bf16.xpose.msra.mxu0 0
        %1053 = vmatprep.subr.bf16.mxu0 0
        %1054 = vmatpush1.bf16.xpose.msra.mxu0 0
        %1055 = vmatprep.mubr.bf16.mxu0 0
        %1056 = vmatmul.mubr.bf16.gmra.mrb[0].mxu0 %v1018
        %v1057 = vpop.f32.mrb[0].mxu0
        %v1058 = vadd.f32 0.0, %v1057
        %v1059 = vpop.f32.mrb[0].mxu0
        %v1060 = vpop.f32.mrb[0].mxu0
        %v1061 = vpop.f32.mrb[0].mxu0
        %1062 = vdwg.mxu0
        %v1063 = vsel %vm840, %v1058, -inf
        %1064 = vmax.xlane.f32.xlu0 %v1063
        %v1065 = vpop.xlane.xlu0 %1064
        %v1066 = vsub.f32 %v1058, %v1065
        %v1067 = vmul.f32 %v1066, 1.442695
        %v1068 = vpow.pop %v1067
        %v1069 = vsel %vm840, %v1068, 0.0
        %1070 = vadd.xlane.f32.xlu0 %v1069
        %v1071 = vpop.xlane.xlu0 %1070
        %v1072 = vpack.c.bf16 %v1068, %v1068
        %1073 = vrot.lane.b32.xlu0 %v792, 64
        %v1074 = vpop.permute.xlu0 %1073
        %v1076 = vsel %vm840, %v1072, 0
        %v1079 = vsel %vm854, %v1074, 0
        %1081 = vmatprep.subr.bf16.mxu0 0
        %1082 = vmatpush1.bf16.msra.mxu0 %v1079
        %1083 = vmatprep.subr.bf16.mxu0 0
        %1084 = vmatpush1.bf16.msra.mxu0 0
        %1085 = vmatprep.subr.bf16.mxu0 0
        %1086 = vmatpush1.bf16.msra.mxu0 0
        %1087 = vmatprep.subr.bf16.mxu0 0
        %1088 = vmatpush1.bf16.msra.mxu0 0
        %1089 = vmatprep.subr.bf16.mxu0 0
        %1090 = vmatpush1.bf16.msra.mxu0 0
        %1091 = vmatprep.subr.bf16.mxu0 0
        %1092 = vmatpush1.bf16.msra.mxu0 0
        %1093 = vmatprep.subr.bf16.mxu0 0
        %1094 = vmatpush1.bf16.msra.mxu0 0
        %1095 = vmatprep.subr.bf16.mxu0 0
        %1096 = vmatpush1.bf16.msra.mxu0 0
        %1097 = vmatprep.subr.bf16.mxu0 0
        %1098 = vmatpush1.bf16.msra.mxu0 0
        %1099 = vmatprep.subr.bf16.mxu0 0
        %1100 = vmatpush1.bf16.msra.mxu0 0
        %1101 = vmatprep.subr.bf16.mxu0 0
        %1102 = vmatpush1.bf16.msra.mxu0 0
        %1103 = vmatprep.subr.bf16.mxu0 0
        %1104 = vmatpush1.bf16.msra.mxu0 0
        %1105 = vmatprep.subr.bf16.mxu0 0
        %1106 = vmatpush1.bf16.msra.mxu0 0
        %1107 = vmatprep.subr.bf16.mxu0 0
        %1108 = vmatpush1.bf16.msra.mxu0 0
        %1109 = vmatprep.subr.bf16.mxu0 0
        %1110 = vmatpush1.bf16.msra.mxu0 0
        %1111 = vmatprep.subr.bf16.mxu0 0
        %1112 = vmatpush1.bf16.msra.mxu0 0
        %1113 = vmatprep.mubr.bf16.mxu0 0
        %1114 = vmatmul.mubr.bf16.gmra.mrb[0].mxu0 %v1076
        %v1115 = vpop.f32.mrb[0].mxu0
        %v1116 = vadd.f32 0.0, %v1115
        %v1117 = vpop.f32.mrb[0].mxu0
        %v1118 = vpop.f32.mrb[0].mxu0
        %v1119 = vpop.f32.mrb[0].mxu0
        %1120 = vdwg.mxu0
        %v1121 = vrcp.pop %v1071
        %v1122 = vmul.f32 %v1116, %v1121
        %1123 = vrot.lane.b32.xlu0 %v790, 32
        %v1124 = vpop.permute.xlu0 %1123
        %1125 = vrot.lane.b32.xlu0 %v791, 32
        %v1126 = vpop.permute.xlu0 %1125
        %v1128 = vsel %vm793, %v1124, 0
        %v1131 = vsel %vm793, %v1126, 0
        %1133 = vmatprep.subr.bf16.mxu0 0
        %1134 = vmatpush1.bf16.xpose.msra.mxu0 %v1131
        %1135 = vmatprep.subr.bf16.mxu0 0
        %1136 = vmatpush1.bf16.xpose.msra.mxu0 0
        %1137 = vmatprep.subr.bf16.mxu0 0
        %1138 = vmatpush1.bf16.xpose.msra.mxu0 0
        %1139 = vmatprep.subr.bf16.mxu0 0
        %1140 = vmatpush1.bf16.xpose.msra.mxu0 0
        %1141 = vmatprep.subr.bf16.mxu0 0
        %1142 = vmatpush1.bf16.xpose.msra.mxu0 0
        %1143 = vmatprep.subr.bf16.mxu0 0
        %1144 = vmatpush1.bf16.xpose.msra.mxu0 0
        %1145 = vmatprep.subr.bf16.mxu0 0
        %1146 = vmatpush1.bf16.xpose.msra.mxu0 0
        %1147 = vmatprep.subr.bf16.mxu0 0
        %1148 = vmatpush1.bf16.xpose.msra.mxu0 0
        %1149 = vmatprep.subr.bf16.mxu0 0
        %1150 = vmatpush1.bf16.xpose.msra.mxu0 0
        %1151 = vmatprep.subr.bf16.mxu0 0
        %1152 = vmatpush1.bf16.xpose.msra.mxu0 0
        %1153 = vmatprep.subr.bf16.mxu0 0
        %1154 = vmatpush1.bf16.xpose.msra.mxu0 0
        %1155 = vmatprep.subr.bf16.mxu0 0
        %1156 = vmatpush1.bf16.xpose.msra.mxu0 0
        %1157 = vmatprep.subr.bf16.mxu0 0
        %1158 = vmatpush1.bf16.xpose.msra.mxu0 0
        %1159 = vmatprep.subr.bf16.mxu0 0
        %1160 = vmatpush1.bf16.xpose.msra.mxu0 0
        %1161 = vmatprep.subr.bf16.mxu0 0
        %1162 = vmatpush1.bf16.xpose.msra.mxu0 0
        %1163 = vmatprep.subr.bf16.mxu0 0
        %1164 = vmatpush1.bf16.xpose.msra.mxu0 0
        %1165 = vmatprep.mubr.bf16.mxu0 0
        %1166 = vmatmul.mubr.bf16.gmra.mrb[0].mxu0 %v1128
        %v1167 = vpop.f32.mrb[0].mxu0
        %v1168 = vadd.f32 0.0, %v1167
        %v1169 = vpop.f32.mrb[0].mxu0
        %v1170 = vpop.f32.mrb[0].mxu0
        %v1171 = vpop.f32.mrb[0].mxu0
        %1172 = vdwg.mxu0
        %v1173 = vsel %vm840, %v1168, -inf
        %1174 = vmax.xlane.f32.xlu0 %v1173
        %v1175 = vpop.xlane.xlu0 %1174
        %v1176 = vsub.f32 %v1168, %v1175
        %v1177 = vmul.f32 %v1176, 1.442695
        %v1178 = vpow.pop %v1177
        %v1179 = vsel %vm840, %v1178, 0.0
        %1180 = vadd.xlane.f32.xlu0 %v1179
        %v1181 = vpop.xlane.xlu0 %1180
        %v1182 = vpack.c.bf16 %v1178, %v1178
        %1183 = vrot.lane.b32.xlu0 %v792, 32
        %v1184 = vpop.permute.xlu0 %1183
        %v1186 = vsel %vm840, %v1182, 0
        %v1189 = vsel %vm854, %v1184, 0
        %1191 = vmatprep.subr.bf16.mxu0 0
        %1192 = vmatpush1.bf16.msra.mxu0 %v1189
        %1193 = vmatprep.subr.bf16.mxu0 0
        %1194 = vmatpush1.bf16.msra.mxu0 0
        %1195 = vmatprep.subr.bf16.mxu0 0
        %1196 = vmatpush1.bf16.msra.mxu0 0
        %1197 = vmatprep.subr.bf16.mxu0 0
        %1198 = vmatpush1.bf16.msra.mxu0 0
        %1199 = vmatprep.subr.bf16.mxu0 0
        %1200 = vmatpush1.bf16.msra.mxu0 0
        %1201 = vmatprep.subr.bf16.mxu0 0
        %1202 = vmatpush1.bf16.msra.mxu0 0
        %1203 = vmatprep.subr.bf16.mxu0 0
        %1204 = vmatpush1.bf16.msra.mxu0 0
        %1205 = vmatprep.subr.bf16.mxu0 0
        %1206 = vmatpush1.bf16.msra.mxu0 0
        %1207 = vmatprep.subr.bf16.mxu0 0
        %1208 = vmatpush1.bf16.msra.mxu0 0
        %1209 = vmatprep.subr.bf16.mxu0 0
        %1210 = vmatpush1.bf16.msra.mxu0 0
        %1211 = vmatprep.subr.bf16.mxu0 0
        %1212 = vmatpush1.bf16.msra.mxu0 0
        %1213 = vmatprep.subr.bf16.mxu0 0
        %1214 = vmatpush1.bf16.msra.mxu0 0
        %1215 = vmatprep.subr.bf16.mxu0 0
        %1216 = vmatpush1.bf16.msra.mxu0 0
        %1217 = vmatprep.subr.bf16.mxu0 0
        %1218 = vmatpush1.bf16.msra.mxu0 0
        %1219 = vmatprep.subr.bf16.mxu0 0
        %1220 = vmatpush1.bf16.msra.mxu0 0
        %1221 = vmatprep.subr.bf16.mxu0 0
        %1222 = vmatpush1.bf16.msra.mxu0 0
        %1223 = vmatprep.mubr.bf16.mxu0 0
        %1224 = vmatmul.mubr.bf16.gmra.mrb[0].mxu0 %v1186
        %v1225 = vpop.f32.mrb[0].mxu0
        %v1226 = vadd.f32 0.0, %v1225
        %v1227 = vpop.f32.mrb[0].mxu0
        %v1228 = vpop.f32.mrb[0].mxu0
        %v1229 = vpop.f32.mrb[0].mxu0
        %1230 = vdwg.mxu0
        %v1231 = vrcp.pop %v1181
        %v1232 = vmul.f32 %v1226, %v1231
        %1234 = vrot.lane.b32.xlu0 %v1012, 32
        %v1235 = vpop.permute.xlu0 %1234
        %1238 = vrot.lane.b32.xlu0 %v1122, 64
        %v1239 = vpop.permute.xlu0 %1238
        %1242 = vrot.lane.b32.xlu0 %v1232, 96
        %v1243 = vpop.permute.xlu0 %1242
        %v1245 = vsel %vm793, %v899, %v1235
        %vm1246 = vcmask 523264
        %v1247 = vsel %vm1246, %v1245, %v1239
        %vm1248 = vcmask 785408
        %v1249 = vsel %vm1248, %v1247, %v1243
        %v1250 = vpack.c.bf16 %v1249, %v1249
        %v1251 = vld [vmem:[#allocation5] sm:$0xf]
        %v1252 = vld [vmem:[#allocation5 + $0x4] sm:$0xf]
        %v1253 = vld [vmem:[#allocation5 + $0x8] sm:$0xf]
        %v1254 = vld [vmem:[#allocation5 + $0xc] sm:$0xf]
        %v1255 = vld [vmem:[#allocation5 + $0x10] sm:$0xf]
        %v1256 = vld [vmem:[#allocation5 + $0x14] sm:$0xf]
        %v1257 = vld [vmem:[#allocation5 + $0x18] sm:$0xf]
        %v1258 = vld [vmem:[#allocation5 + $0x1c] sm:$0xf]
        %v1259 = vld [vmem:[#allocation5 + $0x20] sm:$0xf]
        %v1260 = vld [vmem:[#allocation5 + $0x24] sm:$0xf]
        %v1261 = vld [vmem:[#allocation5 + $0x28] sm:$0xf]
        %v1262 = vld [vmem:[#allocation5 + $0x2c] sm:$0xf]
        %v1263 = vld [vmem:[#allocation5 + $0x30] sm:$0xf]
        %v1264 = vld [vmem:[#allocation5 + $0x34] sm:$0xf]
        %v1265 = vld [vmem:[#allocation5 + $0x38] sm:$0xf]
        %v1266 = vld [vmem:[#allocation5 + $0x3c] sm:$0xf]
        %v1267 = vlaneseq
        %v1268 = vshrl.u32 %v1267, 7
        %v1269 = vsub.s32 0, %v1268
        %v1270 = vrot.slane %v529, %v1269
        %v1287 = vunpack.c.l.b16 %v1251
        %v1288 = vunpack.c.l.b16 %v1252
        %v1289 = vunpack.c.l.b16 %v1253
        %v1290 = vunpack.c.l.b16 %v1254
        %v1291 = vunpack.c.l.b16 %v1255
        %v1292 = vunpack.c.l.b16 %v1256
        %v1293 = vunpack.c.l.b16 %v1257
        %v1294 = vunpack.c.l.b16 %v1258
        %v1295 = vunpack.c.l.b16 %v1259
        %v1296 = vunpack.c.l.b16 %v1260
        %v1297 = vunpack.c.l.b16 %v1261
        %v1298 = vunpack.c.l.b16 %v1262
        %v1299 = vunpack.c.l.b16 %v1263
        %v1300 = vunpack.c.l.b16 %v1264
        %v1301 = vunpack.c.l.b16 %v1265
        %v1302 = vunpack.c.l.b16 %v1266
        %v1303 = vpack.c.b16 %v1288, %v1287
        %v1304 = vpack.c.b16 %v1290, %v1289
        %v1305 = vpack.c.b16 %v1292, %v1291
        %v1306 = vpack.c.b16 %v1294, %v1293
        %v1307 = vpack.c.b16 %v1296, %v1295
        %v1308 = vpack.c.b16 %v1298, %v1297
        %v1309 = vpack.c.b16 %v1300, %v1299
        %v1310 = vpack.c.b16 %v1302, %v1301
        %1319 = vmatprep.subr.bf16.mxu0 0
        %1320 = vmatpush1.bf16.msra.mxu0 %v1303
        %1321 = vmatprep.subr.bf16.mxu0 0
        %1322 = vmatpush1.bf16.msra.mxu0 %v1304
        %1323 = vmatprep.subr.bf16.mxu0 0
        %1324 = vmatpush1.bf16.msra.mxu0 %v1305
        %1325 = vmatprep.subr.bf16.mxu0 0
        %1326 = vmatpush1.bf16.msra.mxu0 %v1306
        %1327 = vmatprep.subr.bf16.mxu0 0
        %1328 = vmatpush1.bf16.msra.mxu0 %v1307
        %1329 = vmatprep.subr.bf16.mxu0 0
        %1330 = vmatpush1.bf16.msra.mxu0 %v1308
        %1331 = vmatprep.subr.bf16.mxu0 0
        %1332 = vmatpush1.bf16.msra.mxu0 %v1309
        %1333 = vmatprep.subr.bf16.mxu0 0
        %1334 = vmatpush1.bf16.msra.mxu0 %v1310
        %1335 = vmatprep.subr.bf16.mxu0 0
        %1336 = vmatpush1.bf16.msra.mxu0 0
        %1337 = vmatprep.subr.bf16.mxu0 0
        %1338 = vmatpush1.bf16.msra.mxu0 0
        %1339 = vmatprep.subr.bf16.mxu0 0
        %1340 = vmatpush1.bf16.msra.mxu0 0
        %1341 = vmatprep.subr.bf16.mxu0 0
        %1342 = vmatpush1.bf16.msra.mxu0 0
        %1343 = vmatprep.subr.bf16.mxu0 0
        %1344 = vmatpush1.bf16.msra.mxu0 0
        %1345 = vmatprep.subr.bf16.mxu0 0
        %1346 = vmatpush1.bf16.msra.mxu0 0
        %1347 = vmatprep.subr.bf16.mxu0 0
        %1348 = vmatpush1.bf16.msra.mxu0 0
        %1349 = vmatprep.subr.bf16.mxu0 0
        %1350 = vmatpush1.bf16.msra.mxu0 0
        %1351 = vmatprep.mubr.bf16.mxu0 0
        %1352 = vmatmul.mubr.bf16.gmra.mrb[0].mxu0 %v1250
        %v1353 = vpop.f32.mrb[0].mxu0
        %v1354 = vadd.f32 %v1270, %v1353
        %v1355 = vpop.f32.mrb[0].mxu0
        %v1356 = vpop.f32.mrb[0].mxu0
        %v1357 = vpop.f32.mrb[0].mxu0
        %1358 = vdwg.mxu0
        %v1359 = vadd.f32 %v528, %v1354
        %1360 = vadd.xlane.f32.xlu0 %v1359
        %v1361 = vpop.xlane.xlu0 %1360
        %v1362 = vrcp.pop 128.0
        %v1363 = vmul.f32 %v1361, %v1362
        %v1364 = vsub.f32 %v1359, %v1363
        %v1365 = vmul.f32 %v1364, %v1364
        %1366 = vadd.xlane.f32.xlu0 %v1365
        %v1367 = vpop.xlane.xlu0 %1366
        %v1368 = vmul.f32 %v1367, %v1362
        %v1369 = vadd.f32 %v1368, 1e-05
        %v1370 = vrsqrt.pop %v1369
        %v1371 = vmul.f32 %v1364, %v1370
        %v1372 = vlaneseq
        %v1373 = vshrl.u32 %v1372, 7
        %v1374 = vsub.s32 1, %v1373
        %v1375 = vrot.slane %v529, %v1374
        %v1376 = vmul.f32 %v1371, %v1375
        %v1377 = vlaneseq
        %v1378 = vshrl.u32 %v1377, 7
        %v1379 = vsub.s32 2, %v1378
        %v1380 = vrot.slane %v529, %v1379
        %v1381 = vadd.f32 %v1376, %v1380
        %v1382 = vpack.c.bf16 %v1381, %v1381
        %v1383 = vld [vmem:[#allocation7] sm:$0xff]
        %v1384 = vld [vmem:[#allocation7 + $0x8] sm:$0xff]
        %v1385 = vld [vmem:[#allocation7 + $0x10] sm:$0xff]
        %v1386 = vld [vmem:[#allocation7 + $0x18] sm:$0xff]
        %v1387 = vld [vmem:[#allocation7 + $0x20] sm:$0xff]
        %v1388 = vld [vmem:[#allocation7 + $0x28] sm:$0xff]
        %v1389 = vld [vmem:[#allocation7 + $0x30] sm:$0xff]
        %v1390 = vld [vmem:[#allocation7 + $0x38] sm:$0xff]
        %v1391 = vld [vmem:[#allocation7 + $0x40] sm:$0xff]
        %v1392 = vld [vmem:[#allocation7 + $0x48] sm:$0xff]
        %v1393 = vld [vmem:[#allocation7 + $0x50] sm:$0xff]
        %v1394 = vld [vmem:[#allocation7 + $0x58] sm:$0xff]
        %v1395 = vld [vmem:[#allocation7 + $0x60] sm:$0xff]
        %v1396 = vld [vmem:[#allocation7 + $0x68] sm:$0xff]
        %v1397 = vld [vmem:[#allocation7 + $0x70] sm:$0xff]
        %v1398 = vld [vmem:[#allocation7 + $0x78] sm:$0xff]
        %v1399 = vld [vmem:[#allocation7 + $0x80] sm:$0xff]
        %v1400 = vld [vmem:[#allocation7 + $0x88] sm:$0xff]
        %v1401 = vld [vmem:[#allocation7 + $0x90] sm:$0xff]
        %v1402 = vld [vmem:[#allocation7 + $0x98] sm:$0xff]
        %v1403 = vld [vmem:[#allocation7 + $0xa0] sm:$0xff]
        %v1404 = vld [vmem:[#allocation7 + $0xa8] sm:$0xff]
        %v1405 = vld [vmem:[#allocation7 + $0xb0] sm:$0xff]
        %v1406 = vld [vmem:[#allocation7 + $0xb8] sm:$0xff]
        %v1407 = vld [vmem:[#allocation7 + $0xc0] sm:$0xff]
        %v1408 = vld [vmem:[#allocation7 + $0xc8] sm:$0xff]
        %v1409 = vld [vmem:[#allocation7 + $0xd0] sm:$0xff]
        %v1410 = vld [vmem:[#allocation7 + $0xd8] sm:$0xff]
        %v1411 = vld [vmem:[#allocation7 + $0xe0] sm:$0xff]
        %v1412 = vld [vmem:[#allocation7 + $0xe8] sm:$0xff]
        %v1413 = vld [vmem:[#allocation7 + $0xf0] sm:$0xff]
        %v1414 = vld [vmem:[#allocation7 + $0xf8] sm:$0xff]
        %v1415 = vld [vmem:[%s8] sm:$0xf]
        %v1417 = vlaneseq
        %v1418 = vshrl.u32 %v1417, 7
        %v1419 = vsub.s32 0, %v1418
        %v1420 = vrot.slane %v1415, %v1419
        %v1421 = vlaneseq
        %v1422 = vshrl.u32 %v1421, 7
        %v1423 = vsub.s32 1, %v1422
        %v1424 = vrot.slane %v1415, %v1423
        %v1425 = vlaneseq
        %v1426 = vshrl.u32 %v1425, 7
        %v1427 = vsub.s32 2, %v1426
        %v1428 = vrot.slane %v1415, %v1427
        %v1429 = vlaneseq
        %v1430 = vshrl.u32 %v1429, 7
        %v1431 = vsub.s32 3, %v1430
        %v1432 = vrot.slane %v1415, %v1431
        %v1469 = vunpack.c.l.b16 %v1383
        %v1470 = vunpack.c.h.b16 %v1383
        %v1471 = vunpack.c.l.b16 %v1384
        %v1472 = vunpack.c.h.b16 %v1384
        %v1473 = vunpack.c.l.b16 %v1385
        %v1474 = vunpack.c.h.b16 %v1385
        %v1475 = vunpack.c.l.b16 %v1386
        %v1476 = vunpack.c.h.b16 %v1386
        %v1477 = vunpack.c.l.b16 %v1387
        %v1478 = vunpack.c.h.b16 %v1387
        %v1479 = vunpack.c.l.b16 %v1388
        %v1480 = vunpack.c.h.b16 %v1388
        %v1481 = vunpack.c.l.b16 %v1389
        %v1482 = vunpack.c.h.b16 %v1389
        %v1483 = vunpack.c.l.b16 %v1390
        %v1484 = vunpack.c.h.b16 %v1390
        %v1485 = vunpack.c.l.b16 %v1391
        %v1486 = vunpack.c.h.b16 %v1391
        %v1487 = vunpack.c.l.b16 %v1392
        %v1488 = vunpack.c.h.b16 %v1392
        %v1489 = vunpack.c.l.b16 %v1393
        %v1490 = vunpack.c.h.b16 %v1393
        %v1491 = vunpack.c.l.b16 %v1394
        %v1492 = vunpack.c.h.b16 %v1394
        %v1493 = vunpack.c.l.b16 %v1395
        %v1494 = vunpack.c.h.b16 %v1395
        %v1495 = vunpack.c.l.b16 %v1396
        %v1496 = vunpack.c.h.b16 %v1396
        %v1497 = vunpack.c.l.b16 %v1397
        %v1498 = vunpack.c.h.b16 %v1397
        %v1499 = vunpack.c.l.b16 %v1398
        %v1500 = vunpack.c.h.b16 %v1398
        %v1501 = vunpack.c.l.b16 %v1399
        %v1502 = vunpack.c.h.b16 %v1399
        %v1503 = vunpack.c.l.b16 %v1400
        %v1504 = vunpack.c.h.b16 %v1400
        %v1505 = vunpack.c.l.b16 %v1401
        %v1506 = vunpack.c.h.b16 %v1401
        %v1507 = vunpack.c.l.b16 %v1402
        %v1508 = vunpack.c.h.b16 %v1402
        %v1509 = vunpack.c.l.b16 %v1403
        %v1510 = vunpack.c.h.b16 %v1403
        %v1511 = vunpack.c.l.b16 %v1404
        %v1512 = vunpack.c.h.b16 %v1404
        %v1513 = vunpack.c.l.b16 %v1405
        %v1514 = vunpack.c.h.b16 %v1405
        %v1515 = vunpack.c.l.b16 %v1406
        %v1516 = vunpack.c.h.b16 %v1406
        %v1517 = vunpack.c.l.b16 %v1407
        %v1518 = vunpack.c.h.b16 %v1407
        %v1519 = vunpack.c.l.b16 %v1408
        %v1520 = vunpack.c.h.b16 %v1408
        %v1521 = vunpack.c.l.b16 %v1409
        %v1522 = vunpack.c.h.b16 %v1409
        %v1523 = vunpack.c.l.b16 %v1410
        %v1524 = vunpack.c.h.b16 %v1410
        %v1525 = vunpack.c.l.b16 %v1411
        %v1526 = vunpack.c.h.b16 %v1411
        %v1527 = vunpack.c.l.b16 %v1412
        %v1528 = vunpack.c.h.b16 %v1412
        %v1529 = vunpack.c.l.b16 %v1413
        %v1530 = vunpack.c.h.b16 %v1413
        %v1531 = vunpack.c.l.b16 %v1414
        %v1532 = vunpack.c.h.b16 %v1414
        %v1533 = vpack.c.b16 %v1473, %v1469
        %v1534 = vpack.c.b16 %v1474, %v1470
        %v1535 = vpack.c.b16 %v1475, %v1471
        %v1536 = vpack.c.b16 %v1476, %v1472
        %v1537 = vpack.c.b16 %v1481, %v1477
        %v1538 = vpack.c.b16 %v1482, %v1478
        %v1539 = vpack.c.b16 %v1483, %v1479
        %v1540 = vpack.c.b16 %v1484, %v1480
        %v1541 = vpack.c.b16 %v1489, %v1485
        %v1542 = vpack.c.b16 %v1490, %v1486
        %v1543 = vpack.c.b16 %v1491, %v1487
        %v1544 = vpack.c.b16 %v1492, %v1488
        %v1545 = vpack.c.b16 %v1497, %v1493
        %v1546 = vpack.c.b16 %v1498, %v1494
        %v1547 = vpack.c.b16 %v1499, %v1495
        %v1548 = vpack.c.b16 %v1500, %v1496
        %v1549 = vpack.c.b16 %v1505, %v1501
        %v1550 = vpack.c.b16 %v1506, %v1502
        %v1551 = vpack.c.b16 %v1507, %v1503
        %v1552 = vpack.c.b16 %v1508, %v1504
        %v1553 = vpack.c.b16 %v1513, %v1509
        %v1554 = vpack.c.b16 %v1514, %v1510
        %v1555 = vpack.c.b16 %v1515, %v1511
        %v1556 = vpack.c.b16 %v1516, %v1512
        %v1557 = vpack.c.b16 %v1521, %v1517
        %v1558 = vpack.c.b16 %v1522, %v1518
        %v1559 = vpack.c.b16 %v1523, %v1519
        %v1560 = vpack.c.b16 %v1524, %v1520
        %v1561 = vpack.c.b16 %v1529, %v1525
        %v1562 = vpack.c.b16 %v1530, %v1526
        %v1563 = vpack.c.b16 %v1531, %v1527
        %v1564 = vpack.c.b16 %v1532, %v1528
        %1597 = vmatprep.subr.bf16.mxu0 %v1534
        %1598 = vmatpush1.bf16.msra.mxu0 %v1533
        %1599 = vmatprep.subr.bf16.mxu0 %v1538
        %1600 = vmatpush1.bf16.msra.mxu0 %v1537
        %1601 = vmatprep.subr.bf16.mxu0 %v1542
        %1602 = vmatpush1.bf16.msra.mxu0 %v1541
        %1603 = vmatprep.subr.bf16.mxu0 %v1546
        %1604 = vmatpush1.bf16.msra.mxu0 %v1545
        %1605 = vmatprep.subr.bf16.mxu0 %v1550
        %1606 = vmatpush1.bf16.msra.mxu0 %v1549
        %1607 = vmatprep.subr.bf16.mxu0 %v1554
        %1608 = vmatpush1.bf16.msra.mxu0 %v1553
        %1609 = vmatprep.subr.bf16.mxu0 %v1558
        %1610 = vmatpush1.bf16.msra.mxu0 %v1557
        %1611 = vmatprep.subr.bf16.mxu0 %v1562
        %1612 = vmatpush1.bf16.msra.mxu0 %v1561
        %1613 = vmatprep.subr.bf16.mxu0 0
        %1614 = vmatpush1.bf16.msra.mxu0 0
        %1615 = vmatprep.subr.bf16.mxu0 0
        %1616 = vmatpush1.bf16.msra.mxu0 0
        %1617 = vmatprep.subr.bf16.mxu0 0
        %1618 = vmatpush1.bf16.msra.mxu0 0
        %1619 = vmatprep.subr.bf16.mxu0 0
        %1620 = vmatpush1.bf16.msra.mxu0 0
        %1621 = vmatprep.subr.bf16.mxu0 0
        %1622 = vmatpush1.bf16.msra.mxu0 0
        %1623 = vmatprep.subr.bf16.mxu0 0
        %1624 = vmatpush1.bf16.msra.mxu0 0
        %1625 = vmatprep.subr.bf16.mxu0 0
        %1626 = vmatpush1.bf16.msra.mxu0 0
        %1627 = vmatprep.subr.bf16.mxu0 0
        %1628 = vmatpush1.bf16.msra.mxu0 0
        %1629 = vmatprep.mubr.bf16.mxu0 0
        %1630 = vmatmul.mubr.bf16.gmra.mrb[0].mxu0 %v1382
        %v1631 = vpop.f32.mrb[0].mxu0
        %v1632 = vadd.f32 %v1420, %v1631
        %v1633 = vpop.f32.mrb[0].mxu0
        %v1634 = vadd.f32 %v1424, %v1633
        %v1635 = vpop.f32.mrb[0].mxu0
        %v1636 = vpop.f32.mrb[0].mxu0
        %1637 = vdwg.mxu0
        %1638 = vmatprep.subr.bf16.mxu0 %v1536
        %1639 = vmatpush1.bf16.msra.mxu0 %v1535
        %1640 = vmatprep.subr.bf16.mxu0 %v1540
        %1641 = vmatpush1.bf16.msra.mxu0 %v1539
        %1642 = vmatprep.subr.bf16.mxu0 %v1544
        %1643 = vmatpush1.bf16.msra.mxu0 %v1543
        %1644 = vmatprep.subr.bf16.mxu0 %v1548
        %1645 = vmatpush1.bf16.msra.mxu0 %v1547
        %1646 = vmatprep.subr.bf16.mxu0 %v1552
        %1647 = vmatpush1.bf16.msra.mxu0 %v1551
        %1648 = vmatprep.subr.bf16.mxu0 %v1556
        %1649 = vmatpush1.bf16.msra.mxu0 %v1555
        %1650 = vmatprep.subr.bf16.mxu0 %v1560
        %1651 = vmatpush1.bf16.msra.mxu0 %v1559
        %1652 = vmatprep.subr.bf16.mxu0 %v1564
        %1653 = vmatpush1.bf16.msra.mxu0 %v1563
        %1654 = vmatprep.subr.bf16.mxu0 0
        %1655 = vmatpush1.bf16.msra.mxu0 0
        %1656 = vmatprep.subr.bf16.mxu0 0
        %1657 = vmatpush1.bf16.msra.mxu0 0
        %1658 = vmatprep.subr.bf16.mxu0 0
        %1659 = vmatpush1.bf16.msra.mxu0 0
        %1660 = vmatprep.subr.bf16.mxu0 0
        %1661 = vmatpush1.bf16.msra.mxu0 0
        %1662 = vmatprep.subr.bf16.mxu0 0
        %1663 = vmatpush1.bf16.msra.mxu0 0
        %1664 = vmatprep.subr.bf16.mxu0 0
        %1665 = vmatpush1.bf16.msra.mxu0 0
        %1666 = vmatprep.subr.bf16.mxu0 0
        %1667 = vmatpush1.bf16.msra.mxu0 0
        %1668 = vmatprep.subr.bf16.mxu0 0
        %1669 = vmatpush1.bf16.msra.mxu0 0
        %1670 = vmatprep.mubr.bf16.mxu0 0
        %1671 = vmatmul.mubr.bf16.gmra.mrb[0].mxu0 %v1382
        %v1672 = vpop.f32.mrb[0].mxu0
        %v1673 = vadd.f32 %v1428, %v1672
        %v1674 = vpop.f32.mrb[0].mxu0
        %v1675 = vadd.f32 %v1432, %v1674
        %v1676 = vpop.f32.mrb[0].mxu0
        %v1677 = vpop.f32.mrb[0].mxu0
        %1678 = vdwg.mxu0
        %v1679 = vmax.f32 %v1632, 0.0
        %v1680 = vmax.f32 %v1634, 0.0
        %v1681 = vmax.f32 %v1673, 0.0
        %v1682 = vmax.f32 %v1675, 0.0
        %v1683 = vpack.c.bf16 %v1679, %v1679
        %v1684 = vpack.c.bf16 %v1680, %v1680
        %v1685 = vpack.c.bf16 %v1681, %v1681
        %v1686 = vpack.c.bf16 %v1682, %v1682
        %v1687 = vld [vmem:[#allocation8] sm:$0xf]
        %v1688 = vld [vmem:[#allocation8 + $0x4] sm:$0xf]
        %v1689 = vld [vmem:[#allocation8 + $0x8] sm:$0xf]
        %v1690 = vld [vmem:[#allocation8 + $0xc] sm:$0xf]
        %v1691 = vld [vmem:[#allocation8 + $0x10] sm:$0xf]
        %v1692 = vld [vmem:[#allocation8 + $0x14] sm:$0xf]
        %v1693 = vld [vmem:[#allocation8 + $0x18] sm:$0xf]
        %v1694 = vld [vmem:[#allocation8 + $0x1c] sm:$0xf]
        %v1695 = vld [vmem:[#allocation8 + $0x20] sm:$0xf]
        %v1696 = vld [vmem:[#allocation8 + $0x24] sm:$0xf]
        %v1697 = vld [vmem:[#allocation8 + $0x28] sm:$0xf]
        %v1698 = vld [vmem:[#allocation8 + $0x2c] sm:$0xf]
        %v1699 = vld [vmem:[#allocation8 + $0x30] sm:$0xf]
        %v1700 = vld [vmem:[#allocation8 + $0x34] sm:$0xf]
        %v1701 = vld [vmem:[#allocation8 + $0x38] sm:$0xf]
        %v1702 = vld [vmem:[#allocation8 + $0x3c] sm:$0xf]
        %v1703 = vld [vmem:[#allocation8 + $0x40] sm:$0xf]
        %v1704 = vld [vmem:[#allocation8 + $0x44] sm:$0xf]
        %v1705 = vld [vmem:[#allocation8 + $0x48] sm:$0xf]
        %v1706 = vld [vmem:[#allocation8 + $0x4c] sm:$0xf]
        %v1707 = vld [vmem:[#allocation8 + $0x50] sm:$0xf]
        %v1708 = vld [vmem:[#allocation8 + $0x54] sm:$0xf]
        %v1709 = vld [vmem:[#allocation8 + $0x58] sm:$0xf]
        %v1710 = vld [vmem:[#allocation8 + $0x5c] sm:$0xf]
        %v1711 = vld [vmem:[#allocation8 + $0x60] sm:$0xf]
        %v1712 = vld [vmem:[#allocation8 + $0x64] sm:$0xf]
        %v1713 = vld [vmem:[#allocation8 + $0x68] sm:$0xf]
        %v1714 = vld [vmem:[#allocation8 + $0x6c] sm:$0xf]
        %v1715 = vld [vmem:[#allocation8 + $0x70] sm:$0xf]
        %v1716 = vld [vmem:[#allocation8 + $0x74] sm:$0xf]
        %v1717 = vld [vmem:[#allocation8 + $0x78] sm:$0xf]
        %v1718 = vld [vmem:[#allocation8 + $0x7c] sm:$0xf]
        %v1719 = vld [vmem:[#allocation8 + $0x80] sm:$0xf]
        %v1720 = vld [vmem:[#allocation8 + $0x84] sm:$0xf]
        %v1721 = vld [vmem:[#allocation8 + $0x88] sm:$0xf]
        %v1722 = vld [vmem:[#allocation8 + $0x8c] sm:$0xf]
        %v1723 = vld [vmem:[#allocation8 + $0x90] sm:$0xf]
        %v1724 = vld [vmem:[#allocation8 + $0x94] sm:$0xf]
        %v1725 = vld [vmem:[#allocation8 + $0x98] sm:$0xf]
        %v1726 = vld [vmem:[#allocation8 + $0x9c] sm:$0xf]
        %v1727 = vld [vmem:[#allocation8 + $0xa0] sm:$0xf]
        %v1728 = vld [vmem:[#allocation8 + $0xa4] sm:$0xf]
        %v1729 = vld [vmem:[#allocation8 + $0xa8] sm:$0xf]
        %v1730 = vld [vmem:[#allocation8 + $0xac] sm:$0xf]
        %v1731 = vld [vmem:[#allocation8 + $0xb0] sm:$0xf]
        %v1732 = vld [vmem:[#allocation8 + $0xb4] sm:$0xf]
        %v1733 = vld [vmem:[#allocation8 + $0xb8] sm:$0xf]
        %v1734 = vld [vmem:[#allocation8 + $0xbc] sm:$0xf]
        %v1735 = vld [vmem:[#allocation8 + $0xc0] sm:$0xf]
        %v1736 = vld [vmem:[#allocation8 + $0xc4] sm:$0xf]
        %v1737 = vld [vmem:[#allocation8 + $0xc8] sm:$0xf]
        %v1738 = vld [vmem:[#allocation8 + $0xcc] sm:$0xf]
        %v1739 = vld [vmem:[#allocation8 + $0xd0] sm:$0xf]
        %v1740 = vld [vmem:[#allocation8 + $0xd4] sm:$0xf]
        %v1741 = vld [vmem:[#allocation8 + $0xd8] sm:$0xf]
        %v1742 = vld [vmem:[#allocation8 + $0xdc] sm:$0xf]
        %v1743 = vld [vmem:[#allocation8 + $0xe0] sm:$0xf]
        %v1744 = vld [vmem:[#allocation8 + $0xe4] sm:$0xf]
        %v1745 = vld [vmem:[#allocation8 + $0xe8] sm:$0xf]
        %v1746 = vld [vmem:[#allocation8 + $0xec] sm:$0xf]
        %v1747 = vld [vmem:[#allocation8 + $0xf0] sm:$0xf]
        %v1748 = vld [vmem:[#allocation8 + $0xf4] sm:$0xf]
        %v1749 = vld [vmem:[#allocation8 + $0xf8] sm:$0xf]
        %v1750 = vld [vmem:[#allocation8 + $0xfc] sm:$0xf]
        %v1751 = vlaneseq
        %v1752 = vshrl.u32 %v1751, 7
        %v1753 = vsub.s32 3, %v1752
        %v1754 = vrot.slane %v529, %v1753
        %v1819 = vunpack.c.l.b16 %v1687
        %v1820 = vunpack.c.l.b16 %v1688
        %v1821 = vunpack.c.l.b16 %v1689
        %v1822 = vunpack.c.l.b16 %v1690
        %v1823 = vunpack.c.l.b16 %v1691
        %v1824 = vunpack.c.l.b16 %v1692
        %v1825 = vunpack.c.l.b16 %v1693
        %v1826 = vunpack.c.l.b16 %v1694
        %v1827 = vunpack.c.l.b16 %v1695
        %v1828 = vunpack.c.l.b16 %v1696
        %v1829 = vunpack.c.l.b16 %v1697
        %v1830 = vunpack.c.l.b16 %v1698
        %v1831 = vunpack.c.l.b16 %v1699
        %v1832 = vunpack.c.l.b16 %v1700
        %v1833 = vunpack.c.l.b16 %v1701
        %v1834 = vunpack.c.l.b16 %v1702
        %v1835 = vunpack.c.l.b16 %v1703
        %v1836 = vunpack.c.l.b16 %v1704
        %v1837 = vunpack.c.l.b16 %v1705
        %v1838 = vunpack.c.l.b16 %v1706
        %v1839 = vunpack.c.l.b16 %v1707
        %v1840 = vunpack.c.l.b16 %v1708
        %v1841 = vunpack.c.l.b16 %v1709
        %v1842 = vunpack.c.l.b16 %v1710
        %v1843 = vunpack.c.l.b16 %v1711
        %v1844 = vunpack.c.l.b16 %v1712
        %v1845 = vunpack.c.l.b16 %v1713
        %v1846 = vunpack.c.l.b16 %v1714
        %v1847 = vunpack.c.l.b16 %v1715
        %v1848 = vunpack.c.l.b16 %v1716
        %v1849 = vunpack.c.l.b16 %v1717
        %v1850 = vunpack.c.l.b16 %v1718
        %v1851 = vunpack.c.l.b16 %v1719
        %v1852 = vunpack.c.l.b16 %v1720
        %v1853 = vunpack.c.l.b16 %v1721
        %v1854 = vunpack.c.l.b16 %v1722
        %v1855 = vunpack.c.l.b16 %v1723
        %v1856 = vunpack.c.l.b16 %v1724
        %v1857 = vunpack.c.l.b16 %v1725
        %v1858 = vunpack.c.l.b16 %v1726
        %v1859 = vunpack.c.l.b16 %v1727
        %v1860 = vunpack.c.l.b16 %v1728
        %v1861 = vunpack.c.l.b16 %v1729
        %v1862 = vunpack.c.l.b16 %v1730
        %v1863 = vunpack.c.l.b16 %v1731
        %v1864 = vunpack.c.l.b16 %v1732
        %v1865 = vunpack.c.l.b16 %v1733
        %v1866 = vunpack.c.l.b16 %v1734
        %v1867 = vunpack.c.l.b16 %v1735
        %v1868 = vunpack.c.l.b16 %v1736
        %v1869 = vunpack.c.l.b16 %v1737
        %v1870 = vunpack.c.l.b16 %v1738
        %v1871 = vunpack.c.l.b16 %v1739
        %v1872 = vunpack.c.l.b16 %v1740
        %v1873 = vunpack.c.l.b16 %v1741
        %v1874 = vunpack.c.l.b16 %v1742
        %v1875 = vunpack.c.l.b16 %v1743
        %v1876 = vunpack.c.l.b16 %v1744
        %v1877 = vunpack.c.l.b16 %v1745
        %v1878 = vunpack.c.l.b16 %v1746
        %v1879 = vunpack.c.l.b16 %v1747
        %v1880 = vunpack.c.l.b16 %v1748
        %v1881 = vunpack.c.l.b16 %v1749
        %v1882 = vunpack.c.l.b16 %v1750
        %v1883 = vpack.c.b16 %v1820, %v1819
        %v1884 = vpack.c.b16 %v1822, %v1821
        %v1885 = vpack.c.b16 %v1824, %v1823
        %v1886 = vpack.c.b16 %v1826, %v1825
        %v1887 = vpack.c.b16 %v1828, %v1827
        %v1888 = vpack.c.b16 %v1830, %v1829
        %v1889 = vpack.c.b16 %v1832, %v1831
        %v1890 = vpack.c.b16 %v1834, %v1833
        %v1891 = vpack.c.b16 %v1836, %v1835
        %v1892 = vpack.c.b16 %v1838, %v1837
        %v1893 = vpack.c.b16 %v1840, %v1839
        %v1894 = vpack.c.b16 %v1842, %v1841
        %v1895 = vpack.c.b16 %v1844, %v1843
        %v1896 = vpack.c.b16 %v1846, %v1845
        %v1897 = vpack.c.b16 %v1848, %v1847
        %v1898 = vpack.c.b16 %v1850, %v1849
        %v1899 = vpack.c.b16 %v1852, %v1851
        %v1900 = vpack.c.b16 %v1854, %v1853
        %v1901 = vpack.c.b16 %v1856, %v1855
        %v1902 = vpack.c.b16 %v1858, %v1857
        %v1903 = vpack.c.b16 %v1860, %v1859
        %v1904 = vpack.c.b16 %v1862, %v1861
        %v1905 = vpack.c.b16 %v1864, %v1863
        %v1906 = vpack.c.b16 %v1866, %v1865
        %v1907 = vpack.c.b16 %v1868, %v1867
        %v1908 = vpack.c.b16 %v1870, %v1869
        %v1909 = vpack.c.b16 %v1872, %v1871
        %v1910 = vpack.c.b16 %v1874, %v1873
        %v1911 = vpack.c.b16 %v1876, %v1875
        %v1912 = vpack.c.b16 %v1878, %v1877
        %v1913 = vpack.c.b16 %v1880, %v1879
        %v1914 = vpack.c.b16 %v1882, %v1881
        %1947 = vmatprep.subr.bf16.mxu0 0
        %1948 = vmatpush1.bf16.msra.mxu0 %v1883
        %1949 = vmatprep.subr.bf16.mxu0 0
        %1950 = vmatpush1.bf16.msra.mxu0 %v1884
        %1951 = vmatprep.subr.bf16.mxu0 0
        %1952 = vmatpush1.bf16.msra.mxu0 %v1885
        %1953 = vmatprep.subr.bf16.mxu0 0
        %1954 = vmatpush1.bf16.msra.mxu0 %v1886
        %1955 = vmatprep.subr.bf16.mxu0 0
        %1956 = vmatpush1.bf16.msra.mxu0 %v1887
        %1957 = vmatprep.subr.bf16.mxu0 0
        %1958 = vmatpush1.bf16.msra.mxu0 %v1888
        %1959 = vmatprep.subr.bf16.mxu0 0
        %1960 = vmatpush1.bf16.msra.mxu0 %v1889
        %1961 = vmatprep.subr.bf16.mxu0 0
        %1962 = vmatpush1.bf16.msra.mxu0 %v1890
        %1963 = vmatprep.subr.bf16.mxu0 0
        %1964 = vmatpush1.bf16.msra.mxu0 %v1891
        %1965 = vmatprep.subr.bf16.mxu0 0
        %1966 = vmatpush1.bf16.msra.mxu0 %v1892
        %1967 = vmatprep.subr.bf16.mxu0 0
        %1968 = vmatpush1.bf16.msra.mxu0 %v1893
        %1969 = vmatprep.subr.bf16.mxu0 0
        %1970 = vmatpush1.bf16.msra.mxu0 %v1894
        %1971 = vmatprep.subr.bf16.mxu0 0
        %1972 = vmatpush1.bf16.msra.mxu0 %v1895
        %1973 = vmatprep.subr.bf16.mxu0 0
        %1974 = vmatpush1.bf16.msra.mxu0 %v1896
        %1975 = vmatprep.subr.bf16.mxu0 0
        %1976 = vmatpush1.bf16.msra.mxu0 %v1897
        %1977 = vmatprep.subr.bf16.mxu0 0
        %1978 = vmatpush1.bf16.msra.mxu0 %v1898
        %1979 = vmatprep.mubr.bf16.mxu0 %v1684
        %1980 = vmatmul.mubr.bf16.gmra.mrb[0].mxu0 %v1683
        %v1981 = vpop.f32.mrb[0].mxu0
        %v1982 = vadd.f32 %v1754, %v1981
        %v1983 = vpop.f32.mrb[0].mxu0
        %v1984 = vpop.f32.mrb[0].mxu0
        %v1985 = vpop.f32.mrb[0].mxu0
        %1986 = vdwg.mxu0
        %1987 = vmatprep.subr.bf16.mxu0 0
        %1988 = vmatpush1.bf16.msra.mxu0 %v1899
        %1989 = vmatprep.subr.bf16.mxu0 0
        %1990 = vmatpush1.bf16.msra.mxu0 %v1900
        %1991 = vmatprep.subr.bf16.mxu0 0
        %1992 = vmatpush1.bf16.msra.mxu0 %v1901
        %1993 = vmatprep.subr.bf16.mxu0 0
        %1994 = vmatpush1.bf16.msra.mxu0 %v1902
        %1995 = vmatprep.subr.bf16.mxu0 0
        %1996 = vmatpush1.bf16.msra.mxu0 %v1903
        %1997 = vmatprep.subr.bf16.mxu0 0
        %1998 = vmatpush1.bf16.msra.mxu0 %v1904
        %1999 = vmatprep.subr.bf16.mxu0 0
        %2000 = vmatpush1.bf16.msra.mxu0 %v1905
        %2001 = vmatprep.subr.bf16.mxu0 0
        %2002 = vmatpush1.bf16.msra.mxu0 %v1906
        %2003 = vmatprep.subr.bf16.mxu0 0
        %2004 = vmatpush1.bf16.msra.mxu0 %v1907
        %2005 = vmatprep.subr.bf16.mxu0 0
        %2006 = vmatpush1.bf16.msra.mxu0 %v1908
        %2007 = vmatprep.subr.bf16.mxu0 0
        %2008 = vmatpush1.bf16.msra.mxu0 %v1909
        %2009 = vmatprep.subr.bf16.mxu0 0
        %2010 = vmatpush1.bf16.msra.mxu0 %v1910
        %2011 = vmatprep.subr.bf16.mxu0 0
        %2012 = vmatpush1.bf16.msra.mxu0 %v1911
        %2013 = vmatprep.subr.bf16.mxu0 0
        %2014 = vmatpush1.bf16.msra.mxu0 %v1912
        %2015 = vmatprep.subr.bf16.mxu0 0
        %2016 = vmatpush1.bf16.msra.mxu0 %v1913
        %2017 = vmatprep.subr.bf16.mxu0 0
        %2018 = vmatpush1.bf16.msra.mxu0 %v1914
        %2019 = vmatprep.mubr.bf16.mxu0 %v1686
        %2020 = vmatmul.mubr.bf16.gmra.mrb[0].mxu0 %v1685
        %v2021 = vpop.f32.mrb[0].mxu0
        %v2022 = vadd.f32 %v1982, %v2021
        %v2023 = vpop.f32.mrb[0].mxu0
        %v2024 = vpop.f32.mrb[0].mxu0
        %v2025 = vpop.f32.mrb[0].mxu0
        %2026 = vdwg.mxu0
        %v2027 = vadd.f32 %v1381, %v2022
        %2028 = vadd.xlane.f32.xlu0 %v2027
        %v2029 = vpop.xlane.xlu0 %2028
        %v2030 = vmul.f32 %v2029, %v1362
        %v2031 = vsub.f32 %v2027, %v2030
        %v2032 = vmul.f32 %v2031, %v2031
        %2033 = vadd.xlane.f32.xlu0 %v2032
        %v2034 = vpop.xlane.xlu0 %2033
        %v2035 = vmul.f32 %v2034, %v1362
        %v2036 = vadd.f32 %v2035, 1e-05
        %v2037 = vrsqrt.pop %v2036
        %v2038 = vmul.f32 %v2031, %v2037
        %v2039 = vlaneseq
        %v2040 = vshrl.u32 %v2039, 7
        %v2041 = vsub.s32 4, %v2040
        %v2042 = vrot.slane %v529, %v2041
        %v2043 = vmul.f32 %v2038, %v2042
        %v2044 = vlaneseq
        %v2045 = vshrl.u32 %v2044, 7
        %v2046 = vsub.s32 5, %v2045
        %v2047 = vrot.slane %v529, %v2046
        %v2048 = vadd.f32 %v2043, %v2047
        %s2049 = scalar_lea.vmem %s10, 8
        %v2050 = vld [vmem:[%s2049] sm:$0x3f]
        %v2051 = vpack.c.bf16 %v2048, %v2048
        %s2052 = scalar_lea.vmem [#allocation2], 192
        %v2053 = vld [vmem:[%s2052] sm:$0xff]
        %v2054 = vld [vmem:[%s2052 + $0x8] sm:$0xf]
        %v2055 = vld [vmem:[%s2052 + $0xc] sm:$0xff]
        %v2056 = vld [vmem:[%s2052 + $0x14] sm:$0xf]
        %v2057 = vld [vmem:[%s2052 + $0x18] sm:$0xff]
        %v2058 = vld [vmem:[%s2052 + $0x20] sm:$0xf]
        %v2059 = vld [vmem:[%s2052 + $0x24] sm:$0xff]
        %v2060 = vld [vmem:[%s2052 + $0x2c] sm:$0xf]
        %v2061 = vld [vmem:[%s2052 + $0x30] sm:$0xff]
        %v2062 = vld [vmem:[%s2052 + $0x38] sm:$0xf]
        %v2063 = vld [vmem:[%s2052 + $0x3c] sm:$0xff]
        %v2064 = vld [vmem:[%s2052 + $0x44] sm:$0xf]
        %v2065 = vld [vmem:[%s2052 + $0x48] sm:$0xff]
        %v2066 = vld [vmem:[%s2052 + $0x50] sm:$0xf]
        %v2067 = vld [vmem:[%s2052 + $0x54] sm:$0xff]
        %v2068 = vld [vmem:[%s2052 + $0x5c] sm:$0xf]
        %v2069 = vld [vmem:[%s2052 + $0x60] sm:$0xff]
        %v2070 = vld [vmem:[%s2052 + $0x68] sm:$0xf]
        %v2071 = vld [vmem:[%s2052 + $0x6c] sm:$0xff]
        %v2072 = vld [vmem:[%s2052 + $0x74] sm:$0xf]
        %v2073 = vld [vmem:[%s2052 + $0x78] sm:$0xff]
        %v2074 = vld [vmem:[%s2052 + $0x80] sm:$0xf]
        %v2075 = vld [vmem:[%s2052 + $0x84] sm:$0xff]
        %v2076 = vld [vmem:[%s2052 + $0x8c] sm:$0xf]
        %v2077 = vld [vmem:[%s2052 + $0x90] sm:$0xff]
        %v2078 = vld [vmem:[%s2052 + $0x98] sm:$0xf]
        %v2079 = vld [vmem:[%s2052 + $0x9c] sm:$0xff]
        %v2080 = vld [vmem:[%s2052 + $0xa4] sm:$0xf]
        %v2081 = vld [vmem:[%s2052 + $0xa8] sm:$0xff]
        %v2082 = vld [vmem:[%s2052 + $0xb0] sm:$0xf]
        %v2083 = vld [vmem:[%s2052 + $0xb4] sm:$0xff]
        %v2084 = vld [vmem:[%s2052 + $0xbc] sm:$0xf]
        %s2085 = scalar_lea.vmem %s5, 3
        %v2086 = vld [vmem:[%s2085] sm:$0x7]
        %v2088 = vlaneseq
        %v2089 = vshrl.u32 %v2088, 7
        %v2090 = vsub.s32 0, %v2089
        %v2091 = vrot.slane %v2086, %v2090
        %v2092 = vlaneseq
        %v2093 = vshrl.u32 %v2092, 7
        %v2094 = vsub.s32 1, %v2093
        %v2095 = vrot.slane %v2086, %v2094
        %v2096 = vlaneseq
        %v2097 = vshrl.u32 %v2096, 7
        %v2098 = vsub.s32 2, %v2097
        %v2099 = vrot.slane %v2086, %v2098
        %v2135 = vunpack.c.l.b16 %v2053
        %v2136 = vunpack.c.h.b16 %v2053
        %v2137 = vunpack.c.l.b16 %v2054
        %v2138 = vunpack.c.l.b16 %v2055
        %v2139 = vunpack.c.h.b16 %v2055
        %v2140 = vunpack.c.l.b16 %v2056
        %v2141 = vunpack.c.l.b16 %v2057
        %v2142 = vunpack.c.h.b16 %v2057
        %v2143 = vunpack.c.l.b16 %v2058
        %v2144 = vunpack.c.l.b16 %v2059
        %v2145 = vunpack.c.h.b16 %v2059
        %v2146 = vunpack.c.l.b16 %v2060
        %v2147 = vunpack.c.l.b16 %v2061
        %v2148 = vunpack.c.h.b16 %v2061
        %v2149 = vunpack.c.l.b16 %v2062
        %v2150 = vunpack.c.l.b16 %v2063
        %v2151 = vunpack.c.h.b16 %v2063
        %v2152 = vunpack.c.l.b16 %v2064
        %v2153 = vunpack.c.l.b16 %v2065
        %v2154 = vunpack.c.h.b16 %v2065
        %v2155 = vunpack.c.l.b16 %v2066
        %v2156 = vunpack.c.l.b16 %v2067
        %v2157 = vunpack.c.h.b16 %v2067
        %v2158 = vunpack.c.l.b16 %v2068
        %v2159 = vunpack.c.l.b16 %v2069
        %v2160 = vunpack.c.h.b16 %v2069
        %v2161 = vunpack.c.l.b16 %v2070
        %v2162 = vunpack.c.l.b16 %v2071
        %v2163 = vunpack.c.h.b16 %v2071
        %v2164 = vunpack.c.l.b16 %v2072
        %v2165 = vunpack.c.l.b16 %v2073
        %v2166 = vunpack.c.h.b16 %v2073
        %v2167 = vunpack.c.l.b16 %v2074
        %v2168 = vunpack.c.l.b16 %v2075
        %v2169 = vunpack.c.h.b16 %v2075
        %v2170 = vunpack.c.l.b16 %v2076
        %v2171 = vunpack.c.l.b16 %v2077
        %v2172 = vunpack.c.h.b16 %v2077
        %v2173 = vunpack.c.l.b16 %v2078
        %v2174 = vunpack.c.l.b16 %v2079
        %v2175 = vunpack.c.h.b16 %v2079
        %v2176 = vunpack.c.l.b16 %v2080
        %v2177 = vunpack.c.l.b16 %v2081
        %v2178 = vunpack.c.h.b16 %v2081
        %v2179 = vunpack.c.l.b16 %v2082
        %v2180 = vunpack.c.l.b16 %v2083
        %v2181 = vunpack.c.h.b16 %v2083
        %v2182 = vunpack.c.l.b16 %v2084
        %v2183 = vpack.c.b16 %v2138, %v2135
        %v2184 = vpack.c.b16 %v2139, %v2136
        %v2185 = vpack.c.b16 %v2140, %v2137
        %v2186 = vpack.c.b16 %v2144, %v2141
        %v2187 = vpack.c.b16 %v2145, %v2142
        %v2188 = vpack.c.b16 %v2146, %v2143
        %v2189 = vpack.c.b16 %v2150, %v2147
        %v2190 = vpack.c.b16 %v2151, %v2148
        %v2191 = vpack.c.b16 %v2152, %v2149
        %v2192 = vpack.c.b16 %v2156, %v2153
        %v2193 = vpack.c.b16 %v2157, %v2154
        %v2194 = vpack.c.b16 %v2158, %v2155
        %v2195 = vpack.c.b16 %v2162, %v2159
        %v2196 = vpack.c.b16 %v2163, %v2160
        %v2197 = vpack.c.b16 %v2164, %v2161
        %v2198 = vpack.c.b16 %v2168, %v2165
        %v2199 = vpack.c.b16 %v2169, %v2166
        %v2200 = vpack.c.b16 %v2170, %v2167
        %v2201 = vpack.c.b16 %v2174, %v2171
        %v2202 = vpack.c.b16 %v2175, %v2172
        %v2203 = vpack.c.b16 %v2176, %v2173
        %v2204 = vpack.c.b16 %v2180, %v2177
        %v2205 = vpack.c.b16 %v2181, %v2178
        %v2206 = vpack.c.b16 %v2182, %v2179
        %2231 = vmatprep.subr.bf16.mxu0 %v2184
        %2232 = vmatpush1.bf16.msra.mxu0 %v2183
        %2233 = vmatprep.subr.bf16.mxu0 %v2187
        %2234 = vmatpush1.bf16.msra.mxu0 %v2186
        %2235 = vmatprep.subr.bf16.mxu0 %v2190
        %2236 = vmatpush1.bf16.msra.mxu0 %v2189
        %2237 = vmatprep.subr.bf16.mxu0 %v2193
        %2238 = vmatpush1.bf16.msra.mxu0 %v2192
        %2239 = vmatprep.subr.bf16.mxu0 %v2196
        %2240 = vmatpush1.bf16.msra.mxu0 %v2195
        %2241 = vmatprep.subr.bf16.mxu0 %v2199
        %2242 = vmatpush1.bf16.msra.mxu0 %v2198
        %2243 = vmatprep.subr.bf16.mxu0 %v2202
        %2244 = vmatpush1.bf16.msra.mxu0 %v2201
        %2245 = vmatprep.subr.bf16.mxu0 %v2205
        %2246 = vmatpush1.bf16.msra.mxu0 %v2204
        %2247 = vmatprep.subr.bf16.mxu0 0
        %2248 = vmatpush1.bf16.msra.mxu0 0
        %2249 = vmatprep.subr.bf16.mxu0 0
        %2250 = vmatpush1.bf16.msra.mxu0 0
        %2251 = vmatprep.subr.bf16.mxu0 0
        %2252 = vmatpush1.bf16.msra.mxu0 0
        %2253 = vmatprep.subr.bf16.mxu0 0
        %2254 = vmatpush1.bf16.msra.mxu0 0
        %2255 = vmatprep.subr.bf16.mxu0 0
        %2256 = vmatpush1.bf16.msra.mxu0 0
        %2257 = vmatprep.subr.bf16.mxu0 0
        %2258 = vmatpush1.bf16.msra.mxu0 0
        %2259 = vmatprep.subr.bf16.mxu0 0
        %2260 = vmatpush1.bf16.msra.mxu0 0
        %2261 = vmatprep.subr.bf16.mxu0 0
        %2262 = vmatpush1.bf16.msra.mxu0 0
        %2263 = vmatprep.mubr.bf16.mxu0 0
        %2264 = vmatmul.mubr.bf16.gmra.mrb[0].mxu0 %v2051
        %v2265 = vpop.f32.mrb[0].mxu0
        %v2266 = vadd.f32 %v2091, %v2265
        %v2267 = vpop.f32.mrb[0].mxu0
        %v2268 = vadd.f32 %v2095, %v2267
        %v2269 = vpop.f32.mrb[0].mxu0
        %v2270 = vpop.f32.mrb[0].mxu0
        %2271 = vdwg.mxu0
        %2272 = vmatprep.subr.bf16.mxu0 0
        %2273 = vmatpush1.bf16.msra.mxu0 %v2185
        %2274 = vmatprep.subr.bf16.mxu0 0
        %2275 = vmatpush1.bf16.msra.mxu0 %v2188
        %2276 = vmatprep.subr.bf16.mxu0 0
        %2277 = vmatpush1.bf16.msra.mxu0 %v2191
        %2278 = vmatprep.subr.bf16.mxu0 0
        %2279 = vmatpush1.bf16.msra.mxu0 %v2194
        %2280 = vmatprep.subr.bf16.mxu0 0
        %2281 = vmatpush1.bf16.msra.mxu0 %v2197
        %2282 = vmatprep.subr.bf16.mxu0 0
        %2283 = vmatpush1.bf16.msra.mxu0 %v2200
        %2284 = vmatprep.subr.bf16.mxu0 0
        %2285 = vmatpush1.bf16.msra.mxu0 %v2203
        %2286 = vmatprep.subr.bf16.mxu0 0
        %2287 = vmatpush1.bf16.msra.mxu0 %v2206
        %2288 = vmatprep.subr.bf16.mxu0 0
        %2289 = vmatpush1.bf16.msra.mxu0 0
        %2290 = vmatprep.subr.bf16.mxu0 0
        %2291 = vmatpush1.bf16.msra.mxu0 0
        %2292 = vmatprep.subr.bf16.mxu0 0
        %2293 = vmatpush1.bf16.msra.mxu0 0
        %2294 = vmatprep.subr.bf16.mxu0 0
        %2295 = vmatpush1.bf16.msra.mxu0 0
        %2296 = vmatprep.subr.bf16.mxu0 0
        %2297 = vmatpush1.bf16.msra.mxu0 0
        %2298 = vmatprep.subr.bf16.mxu0 0
        %2299 = vmatpush1.bf16.msra.mxu0 0
        %2300 = vmatprep.subr.bf16.mxu0 0
        %2301 = vmatpush1.bf16.msra.mxu0 0
        %2302 = vmatprep.subr.bf16.mxu0 0
        %2303 = vmatpush1.bf16.msra.mxu0 0
        %2304 = vmatprep.mubr.bf16.mxu0 0
        %2305 = vmatmul.mubr.bf16.gmra.mrb[0].mxu0 %v2051
        %v2306 = vpop.f32.mrb[0].mxu0
        %v2307 = vadd.f32 %v2099, %v2306
        %v2308 = vpop.f32.mrb[0].mxu0
        %v2309 = vpop.f32.mrb[0].mxu0
        %v2310 = vpop.f32.mrb[0].mxu0
        %2311 = vdwg.mxu0
        %v2312 = vmul.f32 %v2266, 0.17677669
        %v2313 = vpack.c.bf16 %v2312, %v2312
        %v2314 = vpack.c.bf16 %v2268, %v2268
        %v2315 = vpack.c.bf16 %v2307, %v2307
        %v2317 = vsel %vm793, %v2313, 0
        %v2320 = vsel %vm793, %v2314, 0
        %2322 = vmatprep.subr.bf16.mxu0 0
        %2323 = vmatpush1.bf16.xpose.msra.mxu0 %v2320
        %2324 = vmatprep.subr.bf16.mxu0 0
        %2325 = vmatpush1.bf16.xpose.msra.mxu0 0
        %2326 = vmatprep.subr.bf16.mxu0 0
        %2327 = vmatpush1.bf16.xpose.msra.mxu0 0
        %2328 = vmatprep.subr.bf16.mxu0 0
        %2329 = vmatpush1.bf16.xpose.msra.mxu0 0
        %2330 = vmatprep.subr.bf16.mxu0 0
        %2331 = vmatpush1.bf16.xpose.msra.mxu0 0
        %2332 = vmatprep.subr.bf16.mxu0 0
        %2333 = vmatpush1.bf16.xpose.msra.mxu0 0
        %2334 = vmatprep.subr.bf16.mxu0 0
        %2335 = vmatpush1.bf16.xpose.msra.mxu0 0
        %2336 = vmatprep.subr.bf16.mxu0 0
        %2337 = vmatpush1.bf16.xpose.msra.mxu0 0
        %2338 = vmatprep.subr.bf16.mxu0 0
        %2339 = vmatpush1.bf16.xpose.msra.mxu0 0
        %2340 = vmatprep.subr.bf16.mxu0 0
        %2341 = vmatpush1.bf16.xpose.msra.mxu0 0
        %2342 = vmatprep.subr.bf16.mxu0 0
        %2343 = vmatpush1.bf16.xpose.msra.mxu0 0
        %2344 = vmatprep.subr.bf16.mxu0 0
        %2345 = vmatpush1.bf16.xpose.msra.mxu0 0
        %2346 = vmatprep.subr.bf16.mxu0 0
        %2347 = vmatpush1.bf16.xpose.msra.mxu0 0
        %2348 = vmatprep.subr.bf16.mxu0 0
        %2349 = vmatpush1.bf16.xpose.msra.mxu0 0
        %2350 = vmatprep.subr.bf16.mxu0 0
        %2351 = vmatpush1.bf16.xpose.msra.mxu0 0
        %2352 = vmatprep.subr.bf16.mxu0 0
        %2353 = vmatpush1.bf16.xpose.msra.mxu0 0
        %2354 = vmatprep.mubr.bf16.mxu0 0
        %2355 = vmatmul.mubr.bf16.gmra.mrb[0].mxu0 %v2317
        %v2356 = vpop.f32.mrb[0].mxu0
        %v2357 = vadd.f32 0.0, %v2356
        %v2358 = vpop.f32.mrb[0].mxu0
        %v2359 = vpop.f32.mrb[0].mxu0
        %v2360 = vpop.f32.mrb[0].mxu0
        %2361 = vdwg.mxu0
        %v2362 = vsel %vm840, %v2357, -inf
        %2363 = vmax.xlane.f32.xlu0 %v2362
        %v2364 = vpop.xlane.xlu0 %2363
        %v2365 = vsub.f32 %v2357, %v2364
        %v2366 = vmul.f32 %v2365, 1.442695
        %v2367 = vpow.pop %v2366
        %v2368 = vsel %vm840, %v2367, 0.0
        %2369 = vadd.xlane.f32.xlu0 %v2368
        %v2370 = vpop.xlane.xlu0 %2369
        %v2371 = vpack.c.bf16 %v2367, %v2367
        %v2373 = vsel %vm840, %v2371, 0
        %v2376 = vsel %vm854, %v2315, 0
        %2378 = vmatprep.subr.bf16.mxu0 0
        %2379 = vmatpush1.bf16.msra.mxu0 %v2376
        %2380 = vmatprep.subr.bf16.mxu0 0
        %2381 = vmatpush1.bf16.msra.mxu0 0
        %2382 = vmatprep.subr.bf16.mxu0 0
        %2383 = vmatpush1.bf16.msra.mxu0 0
        %2384 = vmatprep.subr.bf16.mxu0 0
        %2385 = vmatpush1.bf16.msra.mxu0 0
        %2386 = vmatprep.subr.bf16.mxu0 0
        %2387 = vmatpush1.bf16.msra.mxu0 0
        %2388 = vmatprep.subr.bf16.mxu0 0
        %2389 = vmatpush1.bf16.msra.mxu0 0
        %2390 = vmatprep.subr.bf16.mxu0 0
        %2391 = vmatpush1.bf16.msra.mxu0 0
        %2392 = vmatprep.subr.bf16.mxu0 0
        %2393 = vmatpush1.bf16.msra.mxu0 0
        %2394 = vmatprep.subr.bf16.mxu0 0
        %2395 = vmatpush1.bf16.msra.mxu0 0
        %2396 = vmatprep.subr.bf16.mxu0 0
        %2397 = vmatpush1.bf16.msra.mxu0 0
        %2398 = vmatprep.subr.bf16.mxu0 0
        %2399 = vmatpush1.bf16.msra.mxu0 0
        %2400 = vmatprep.subr.bf16.mxu0 0
        %2401 = vmatpush1.bf16.msra.mxu0 0
        %2402 = vmatprep.subr.bf16.mxu0 0
        %2403 = vmatpush1.bf16.msra.mxu0 0
        %2404 = vmatprep.subr.bf16.mxu0 0
        %2405 = vmatpush1.bf16.msra.mxu0 0
        %2406 = vmatprep.subr.bf16.mxu0 0
        %2407 = vmatpush1.bf16.msra.mxu0 0
        %2408 = vmatprep.subr.bf16.mxu0 0
        %2409 = vmatpush1.bf16.msra.mxu0 0
        %2410 = vmatprep.mubr.bf16.mxu0 0
        %2411 = vmatmul.mubr.bf16.gmra.mrb[0].mxu0 %v2373
        %v2412 = vpop.f32.mrb[0].mxu0
        %v2413 = vadd.f32 0.0, %v2412
        %v2414 = vpop.f32.mrb[0].mxu0
        %v2415 = vpop.f32.mrb[0].mxu0
        %v2416 = vpop.f32.mrb[0].mxu0
        %2417 = vdwg.mxu0
        %v2418 = vrcp.pop %v2370
        %v2419 = vmul.f32 %v2413, %v2418
        %2421 = vrot.lane.b32.xlu0 %v2313, 96
        %v2422 = vpop.permute.xlu0 %2421
        %2424 = vrot.lane.b32.xlu0 %v2314, 96
        %v2425 = vpop.permute.xlu0 %2424
        %v2427 = vsel %vm793, %v2422, 0
        %v2430 = vsel %vm793, %v2425, 0
        %2432 = vmatprep.subr.bf16.mxu0 0
        %2433 = vmatpush1.bf16.xpose.msra.mxu0 %v2430
        %2434 = vmatprep.subr.bf16.mxu0 0
        %2435 = vmatpush1.bf16.xpose.msra.mxu0 0
        %2436 = vmatprep.subr.bf16.mxu0 0
        %2437 = vmatpush1.bf16.xpose.msra.mxu0 0
        %2438 = vmatprep.subr.bf16.mxu0 0
        %2439 = vmatpush1.bf16.xpose.msra.mxu0 0
        %2440 = vmatprep.subr.bf16.mxu0 0
        %2441 = vmatpush1.bf16.xpose.msra.mxu0 0
        %2442 = vmatprep.subr.bf16.mxu0 0
        %2443 = vmatpush1.bf16.xpose.msra.mxu0 0
        %2444 = vmatprep.subr.bf16.mxu0 0
        %2445 = vmatpush1.bf16.xpose.msra.mxu0 0
        %2446 = vmatprep.subr.bf16.mxu0 0
        %2447 = vmatpush1.bf16.xpose.msra.mxu0 0
        %2448 = vmatprep.subr.bf16.mxu0 0
        %2449 = vmatpush1.bf16.xpose.msra.mxu0 0
        %2450 = vmatprep.subr.bf16.mxu0 0
        %2451 = vmatpush1.bf16.xpose.msra.mxu0 0
        %2452 = vmatprep.subr.bf16.mxu0 0
        %2453 = vmatpush1.bf16.xpose.msra.mxu0 0
        %2454 = vmatprep.subr.bf16.mxu0 0
        %2455 = vmatpush1.bf16.xpose.msra.mxu0 0
        %2456 = vmatprep.subr.bf16.mxu0 0
        %2457 = vmatpush1.bf16.xpose.msra.mxu0 0
        %2458 = vmatprep.subr.bf16.mxu0 0
        %2459 = vmatpush1.bf16.xpose.msra.mxu0 0
        %2460 = vmatprep.subr.bf16.mxu0 0
        %2461 = vmatpush1.bf16.xpose.msra.mxu0 0
        %2462 = vmatprep.subr.bf16.mxu0 0
        %2463 = vmatpush1.bf16.xpose.msra.mxu0 0
        %2464 = vmatprep.mubr.bf16.mxu0 0
        %2465 = vmatmul.mubr.bf16.gmra.mrb[0].mxu0 %v2427
        %v2466 = vpop.f32.mrb[0].mxu0
        %v2467 = vadd.f32 0.0, %v2466
        %v2468 = vpop.f32.mrb[0].mxu0
        %v2469 = vpop.f32.mrb[0].mxu0
        %v2470 = vpop.f32.mrb[0].mxu0
        %2471 = vdwg.mxu0
        %v2472 = vsel %vm840, %v2467, -inf
        %2473 = vmax.xlane.f32.xlu0 %v2472
        %v2474 = vpop.xlane.xlu0 %2473
        %v2475 = vsub.f32 %v2467, %v2474
        %v2476 = vmul.f32 %v2475, 1.442695
        %v2477 = vpow.pop %v2476
        %v2478 = vsel %vm840, %v2477, 0.0
        %2479 = vadd.xlane.f32.xlu0 %v2478
        %v2480 = vpop.xlane.xlu0 %2479
        %v2481 = vpack.c.bf16 %v2477, %v2477
        %2483 = vrot.lane.b32.xlu0 %v2315, 96
        %v2484 = vpop.permute.xlu0 %2483
        %v2486 = vsel %vm840, %v2481, 0
        %v2489 = vsel %vm854, %v2484, 0
        %2491 = vmatprep.subr.bf16.mxu0 0
        %2492 = vmatpush1.bf16.msra.mxu0 %v2489
        %2493 = vmatprep.subr.bf16.mxu0 0
        %2494 = vmatpush1.bf16.msra.mxu0 0
        %2495 = vmatprep.subr.bf16.mxu0 0
        %2496 = vmatpush1.bf16.msra.mxu0 0
        %2497 = vmatprep.subr.bf16.mxu0 0
        %2498 = vmatpush1.bf16.msra.mxu0 0
        %2499 = vmatprep.subr.bf16.mxu0 0
        %2500 = vmatpush1.bf16.msra.mxu0 0
        %2501 = vmatprep.subr.bf16.mxu0 0
        %2502 = vmatpush1.bf16.msra.mxu0 0
        %2503 = vmatprep.subr.bf16.mxu0 0
        %2504 = vmatpush1.bf16.msra.mxu0 0
        %2505 = vmatprep.subr.bf16.mxu0 0
        %2506 = vmatpush1.bf16.msra.mxu0 0
        %2507 = vmatprep.subr.bf16.mxu0 0
        %2508 = vmatpush1.bf16.msra.mxu0 0
        %2509 = vmatprep.subr.bf16.mxu0 0
        %2510 = vmatpush1.bf16.msra.mxu0 0
        %2511 = vmatprep.subr.bf16.mxu0 0
        %2512 = vmatpush1.bf16.msra.mxu0 0
        %2513 = vmatprep.subr.bf16.mxu0 0
        %2514 = vmatpush1.bf16.msra.mxu0 0
        %2515 = vmatprep.subr.bf16.mxu0 0
        %2516 = vmatpush1.bf16.msra.mxu0 0
        %2517 = vmatprep.subr.bf16.mxu0 0
        %2518 = vmatpush1.bf16.msra.mxu0 0
        %2519 = vmatprep.subr.bf16.mxu0 0
        %2520 = vmatpush1.bf16.msra.mxu0 0
        %2521 = vmatprep.subr.bf16.mxu0 0
        %2522 = vmatpush1.bf16.msra.mxu0 0
        %2523 = vmatprep.mubr.bf16.mxu0 0
        %2524 = vmatmul.mubr.bf16.gmra.mrb[0].mxu0 %v2486
        %v2525 = vpop.f32.mrb[0].mxu0
        %v2526 = vadd.f32 0.0, %v2525
        %v2527 = vpop.f32.mrb[0].mxu0
        %v2528 = vpop.f32.mrb[0].mxu0
        %v2529 = vpop.f32.mrb[0].mxu0
        %2530 = vdwg.mxu0
        %v2531 = vrcp.pop %v2480
        %v2532 = vmul.f32 %v2526, %v2531
        %2533 = vrot.lane.b32.xlu0 %v2313, 64
        %v2534 = vpop.permute.xlu0 %2533
        %2535 = vrot.lane.b32.xlu0 %v2314, 64
        %v2536 = vpop.permute.xlu0 %2535
        %v2538 = vsel %vm793, %v2534, 0
        %v2541 = vsel %vm793, %v2536, 0
        %2543 = vmatprep.subr.bf16.mxu0 0
        %2544 = vmatpush1.bf16.xpose.msra.mxu0 %v2541
        %2545 = vmatprep.subr.bf16.mxu0 0
        %2546 = vmatpush1.bf16.xpose.msra.mxu0 0
        %2547 = vmatprep.subr.bf16.mxu0 0
        %2548 = vmatpush1.bf16.xpose.msra.mxu0 0
        %2549 = vmatprep.subr.bf16.mxu0 0
        %2550 = vmatpush1.bf16.xpose.msra.mxu0 0
        %2551 = vmatprep.subr.bf16.mxu0 0
        %2552 = vmatpush1.bf16.xpose.msra.mxu0 0
        %2553 = vmatprep.subr.bf16.mxu0 0
        %2554 = vmatpush1.bf16.xpose.msra.mxu0 0
        %2555 = vmatprep.subr.bf16.mxu0 0
        %2556 = vmatpush1.bf16.xpose.msra.mxu0 0
        %2557 = vmatprep.subr.bf16.mxu0 0
        %2558 = vmatpush1.bf16.xpose.msra.mxu0 0
        %2559 = vmatprep.subr.bf16.mxu0 0
        %2560 = vmatpush1.bf16.xpose.msra.mxu0 0
        %2561 = vmatprep.subr.bf16.mxu0 0
        %2562 = vmatpush1.bf16.xpose.msra.mxu0 0
        %2563 = vmatprep.subr.bf16.mxu0 0
        %2564 = vmatpush1.bf16.xpose.msra.mxu0 0
        %2565 = vmatprep.subr.bf16.mxu0 0
        %2566 = vmatpush1.bf16.xpose.msra.mxu0 0
        %2567 = vmatprep.subr.bf16.mxu0 0
        %2568 = vmatpush1.bf16.xpose.msra.mxu0 0
        %2569 = vmatprep.subr.bf16.mxu0 0
        %2570 = vmatpush1.bf16.xpose.msra.mxu0 0
        %2571 = vmatprep.subr.bf16.mxu0 0
        %2572 = vmatpush1.bf16.xpose.msra.mxu0 0
        %2573 = vmatprep.subr.bf16.mxu0 0
        %2574 = vmatpush1.bf16.xpose.msra.mxu0 0
        %2575 = vmatprep.mubr.bf16.mxu0 0
        %2576 = vmatmul.mubr.bf16.gmra.mrb[0].mxu0 %v2538
        %v2577 = vpop.f32.mrb[0].mxu0
        %v2578 = vadd.f32 0.0, %v2577
        %v2579 = vpop.f32.mrb[0].mxu0
        %v2580 = vpop.f32.mrb[0].mxu0
        %v2581 = vpop.f32.mrb[0].mxu0
        %2582 = vdwg.mxu0
        %v2583 = vsel %vm840, %v2578, -inf
        %2584 = vmax.xlane.f32.xlu0 %v2583
        %v2585 = vpop.xlane.xlu0 %2584
        %v2586 = vsub.f32 %v2578, %v2585
        %v2587 = vmul.f32 %v2586, 1.442695
        %v2588 = vpow.pop %v2587
        %v2589 = vsel %vm840, %v2588, 0.0
        %2590 = vadd.xlane.f32.xlu0 %v2589
        %v2591 = vpop.xlane.xlu0 %2590
        %v2592 = vpack.c.bf16 %v2588, %v2588
        %2593 = vrot.lane.b32.xlu0 %v2315, 64
        %v2594 = vpop.permute.xlu0 %2593
        %v2596 = vsel %vm840, %v2592, 0
        %v2599 = vsel %vm854, %v2594, 0
        %2601 = vmatprep.subr.bf16.mxu0 0
        %2602 = vmatpush1.bf16.msra.mxu0 %v2599
        %2603 = vmatprep.subr.bf16.mxu0 0
        %2604 = vmatpush1.bf16.msra.mxu0 0
        %2605 = vmatprep.subr.bf16.mxu0 0
        %2606 = vmatpush1.bf16.msra.mxu0 0
        %2607 = vmatprep.subr.bf16.mxu0 0
        %2608 = vmatpush1.bf16.msra.mxu0 0
        %2609 = vmatprep.subr.bf16.mxu0 0
        %2610 = vmatpush1.bf16.msra.mxu0 0
        %2611 = vmatprep.subr.bf16.mxu0 0
        %2612 = vmatpush1.bf16.msra.mxu0 0
        %2613 = vmatprep.subr.bf16.mxu0 0
        %2614 = vmatpush1.bf16.msra.mxu0 0
        %2615 = vmatprep.subr.bf16.mxu0 0
        %2616 = vmatpush1.bf16.msra.mxu0 0
        %2617 = vmatprep.subr.bf16.mxu0 0
        %2618 = vmatpush1.bf16.msra.mxu0 0
        %2619 = vmatprep.subr.bf16.mxu0 0
        %2620 = vmatpush1.bf16.msra.mxu0 0
        %2621 = vmatprep.subr.bf16.mxu0 0
        %2622 = vmatpush1.bf16.msra.mxu0 0
        %2623 = vmatprep.subr.bf16.mxu0 0
        %2624 = vmatpush1.bf16.msra.mxu0 0
        %2625 = vmatprep.subr.bf16.mxu0 0
        %2626 = vmatpush1.bf16.msra.mxu0 0
        %2627 = vmatprep.subr.bf16.mxu0 0
        %2628 = vmatpush1.bf16.msra.mxu0 0
        %2629 = vmatprep.subr.bf16.mxu0 0
        %2630 = vmatpush1.bf16.msra.mxu0 0
        %2631 = vmatprep.subr.bf16.mxu0 0
        %2632 = vmatpush1.bf16.msra.mxu0 0
        %2633 = vmatprep.mubr.bf16.mxu0 0
        %2634 = vmatmul.mubr.bf16.gmra.mrb[0].mxu0 %v2596
        %v2635 = vpop.f32.mrb[0].mxu0
        %v2636 = vadd.f32 0.0, %v2635
        %v2637 = vpop.f32.mrb[0].mxu0
        %v2638 = vpop.f32.mrb[0].mxu0
        %v2639 = vpop.f32.mrb[0].mxu0
        %2640 = vdwg.mxu0
        %v2641 = vrcp.pop %v2591
        %v2642 = vmul.f32 %v2636, %v2641
        %2643 = vrot.lane.b32.xlu0 %v2313, 32
        %v2644 = vpop.permute.xlu0 %2643
        %2645 = vrot.lane.b32.xlu0 %v2314, 32
        %v2646 = vpop.permute.xlu0 %2645
        %v2648 = vsel %vm793, %v2644, 0
        %v2651 = vsel %vm793, %v2646, 0
        %2653 = vmatprep.subr.bf16.mxu0 0
        %2654 = vmatpush1.bf16.xpose.msra.mxu0 %v2651
        %2655 = vmatprep.subr.bf16.mxu0 0
        %2656 = vmatpush1.bf16.xpose.msra.mxu0 0
        %2657 = vmatprep.subr.bf16.mxu0 0
        %2658 = vmatpush1.bf16.xpose.msra.mxu0 0
        %2659 = vmatprep.subr.bf16.mxu0 0
        %2660 = vmatpush1.bf16.xpose.msra.mxu0 0
        %2661 = vmatprep.subr.bf16.mxu0 0
        %2662 = vmatpush1.bf16.xpose.msra.mxu0 0
        %2663 = vmatprep.subr.bf16.mxu0 0
        %2664 = vmatpush1.bf16.xpose.msra.mxu0 0
        %2665 = vmatprep.subr.bf16.mxu0 0
        %2666 = vmatpush1.bf16.xpose.msra.mxu0 0
        %2667 = vmatprep.subr.bf16.mxu0 0
        %2668 = vmatpush1.bf16.xpose.msra.mxu0 0
        %2669 = vmatprep.subr.bf16.mxu0 0
        %2670 = vmatpush1.bf16.xpose.msra.mxu0 0
        %2671 = vmatprep.subr.bf16.mxu0 0
        %2672 = vmatpush1.bf16.xpose.msra.mxu0 0
        %2673 = vmatprep.subr.bf16.mxu0 0
        %2674 = vmatpush1.bf16.xpose.msra.mxu0 0
        %2675 = vmatprep.subr.bf16.mxu0 0
        %2676 = vmatpush1.bf16.xpose.msra.mxu0 0
        %2677 = vmatprep.subr.bf16.mxu0 0
        %2678 = vmatpush1.bf16.xpose.msra.mxu0 0
        %2679 = vmatprep.subr.bf16.mxu0 0
        %2680 = vmatpush1.bf16.xpose.msra.mxu0 0
        %2681 = vmatprep.subr.bf16.mxu0 0
        %2682 = vmatpush1.bf16.xpose.msra.mxu0 0
        %2683 = vmatprep.subr.bf16.mxu0 0
        %2684 = vmatpush1.bf16.xpose.msra.mxu0 0
        %2685 = vmatprep.mubr.bf16.mxu0 0
        %2686 = vmatmul.mubr.bf16.gmra.mrb[0].mxu0 %v2648
        %v2687 = vpop.f32.mrb[0].mxu0
        %v2688 = vadd.f32 0.0, %v2687
        %v2689 = vpop.f32.mrb[0].mxu0
        %v2690 = vpop.f32.mrb[0].mxu0
        %v2691 = vpop.f32.mrb[0].mxu0
        %2692 = vdwg.mxu0
        %v2693 = vsel %vm840, %v2688, -inf
        %2694 = vmax.xlane.f32.xlu0 %v2693
        %v2695 = vpop.xlane.xlu0 %2694
        %v2696 = vsub.f32 %v2688, %v2695
        %v2697 = vmul.f32 %v2696, 1.442695
        %v2698 = vpow.pop %v2697
        %v2699 = vsel %vm840, %v2698, 0.0
        %2700 = vadd.xlane.f32.xlu0 %v2699
        %v2701 = vpop.xlane.xlu0 %2700
        %v2702 = vpack.c.bf16 %v2698, %v2698
        %2703 = vrot.lane.b32.xlu0 %v2315, 32
        %v2704 = vpop.permute.xlu0 %2703
        %v2706 = vsel %vm840, %v2702, 0
        %v2709 = vsel %vm854, %v2704, 0
        %2711 = vmatprep.subr.bf16.mxu0 0
        %2712 = vmatpush1.bf16.msra.mxu0 %v2709
        %2713 = vmatprep.subr.bf16.mxu0 0
        %2714 = vmatpush1.bf16.msra.mxu0 0
        %2715 = vmatprep.subr.bf16.mxu0 0
        %2716 = vmatpush1.bf16.msra.mxu0 0
        %2717 = vmatprep.subr.bf16.mxu0 0
        %2718 = vmatpush1.bf16.msra.mxu0 0
        %2719 = vmatprep.subr.bf16.mxu0 0
        %2720 = vmatpush1.bf16.msra.mxu0 0
        %2721 = vmatprep.subr.bf16.mxu0 0
        %2722 = vmatpush1.bf16.msra.mxu0 0
        %2723 = vmatprep.subr.bf16.mxu0 0
        %2724 = vmatpush1.bf16.msra.mxu0 0
        %2725 = vmatprep.subr.bf16.mxu0 0
        %2726 = vmatpush1.bf16.msra.mxu0 0
        %2727 = vmatprep.subr.bf16.mxu0 0
        %2728 = vmatpush1.bf16.msra.mxu0 0
        %2729 = vmatprep.subr.bf16.mxu0 0
        %2730 = vmatpush1.bf16.msra.mxu0 0
        %2731 = vmatprep.subr.bf16.mxu0 0
        %2732 = vmatpush1.bf16.msra.mxu0 0
        %2733 = vmatprep.subr.bf16.mxu0 0
        %2734 = vmatpush1.bf16.msra.mxu0 0
        %2735 = vmatprep.subr.bf16.mxu0 0
        %2736 = vmatpush1.bf16.msra.mxu0 0
        %2737 = vmatprep.subr.bf16.mxu0 0
        %2738 = vmatpush1.bf16.msra.mxu0 0
        %2739 = vmatprep.subr.bf16.mxu0 0
        %2740 = vmatpush1.bf16.msra.mxu0 0
        %2741 = vmatprep.subr.bf16.mxu0 0
        %2742 = vmatpush1.bf16.msra.mxu0 0
        %2743 = vmatprep.mubr.bf16.mxu0 0
        %2744 = vmatmul.mubr.bf16.gmra.mrb[0].mxu0 %v2706
        %v2745 = vpop.f32.mrb[0].mxu0
        %v2746 = vadd.f32 0.0, %v2745
        %v2747 = vpop.f32.mrb[0].mxu0
        %v2748 = vpop.f32.mrb[0].mxu0
        %v2749 = vpop.f32.mrb[0].mxu0
        %2750 = vdwg.mxu0
        %v2751 = vrcp.pop %v2701
        %v2752 = vmul.f32 %v2746, %v2751
        %2754 = vrot.lane.b32.xlu0 %v2532, 32
        %v2755 = vpop.permute.xlu0 %2754
        %2758 = vrot.lane.b32.xlu0 %v2642, 64
        %v2759 = vpop.permute.xlu0 %2758
        %2762 = vrot.lane.b32.xlu0 %v2752, 96
        %v2763 = vpop.permute.xlu0 %2762
        %v2765 = vsel %vm793, %v2419, %v2755
        %v2766 = vsel %vm1246, %v2765, %v2759
        %v2767 = vsel %vm1248, %v2766, %v2763
        %v2768 = vpack.c.bf16 %v2767, %v2767
        %s2769 = scalar_lea.vmem [#allocation5], 64
        %v2770 = vld [vmem:[%s2769] sm:$0xf]
        %v2771 = vld [vmem:[%s2769 + $0x4] sm:$0xf]
        %v2772 = vld [vmem:[%s2769 + $0x8] sm:$0xf]
        %v2773 = vld [vmem:[%s2769 + $0xc] sm:$0xf]
        %v2774 = vld [vmem:[%s2769 + $0x10] sm:$0xf]
        %v2775 = vld [vmem:[%s2769 + $0x14] sm:$0xf]
        %v2776 = vld [vmem:[%s2769 + $0x18] sm:$0xf]
        %v2777 = vld [vmem:[%s2769 + $0x1c] sm:$0xf]
        %v2778 = vld [vmem:[%s2769 + $0x20] sm:$0xf]
        %v2779 = vld [vmem:[%s2769 + $0x24] sm:$0xf]
        %v2780 = vld [vmem:[%s2769 + $0x28] sm:$0xf]
        %v2781 = vld [vmem:[%s2769 + $0x2c] sm:$0xf]
        %v2782 = vld [vmem:[%s2769 + $0x30] sm:$0xf]
        %v2783 = vld [vmem:[%s2769 + $0x34] sm:$0xf]
        %v2784 = vld [vmem:[%s2769 + $0x38] sm:$0xf]
        %v2785 = vld [vmem:[%s2769 + $0x3c] sm:$0xf]
        %v2786 = vlaneseq
        %v2787 = vshrl.u32 %v2786, 7
        %v2788 = vsub.s32 0, %v2787
        %v2789 = vrot.slane %v2050, %v2788
        %v2806 = vunpack.c.l.b16 %v2770
        %v2807 = vunpack.c.l.b16 %v2771
        %v2808 = vunpack.c.l.b16 %v2772
        %v2809 = vunpack.c.l.b16 %v2773
        %v2810 = vunpack.c.l.b16 %v2774
        %v2811 = vunpack.c.l.b16 %v2775
        %v2812 = vunpack.c.l.b16 %v2776
        %v2813 = vunpack.c.l.b16 %v2777
        %v2814 = vunpack.c.l.b16 %v2778
        %v2815 = vunpack.c.l.b16 %v2779
        %v2816 = vunpack.c.l.b16 %v2780
        %v2817 = vunpack.c.l.b16 %v2781
        %v2818 = vunpack.c.l.b16 %v2782
        %v2819 = vunpack.c.l.b16 %v2783
        %v2820 = vunpack.c.l.b16 %v2784
        %v2821 = vunpack.c.l.b16 %v2785
        %v2822 = vpack.c.b16 %v2807, %v2806
        %v2823 = vpack.c.b16 %v2809, %v2808
        %v2824 = vpack.c.b16 %v2811, %v2810
        %v2825 = vpack.c.b16 %v2813, %v2812
        %v2826 = vpack.c.b16 %v2815, %v2814
        %v2827 = vpack.c.b16 %v2817, %v2816
        %v2828 = vpack.c.b16 %v2819, %v2818
        %v2829 = vpack.c.b16 %v2821, %v2820
        %2838 = vmatprep.subr.bf16.mxu0 0
        %2839 = vmatpush1.bf16.msra.mxu0 %v2822
        %2840 = vmatprep.subr.bf16.mxu0 0
        %2841 = vmatpush1.bf16.msra.mxu0 %v2823
        %2842 = vmatprep.subr.bf16.mxu0 0
        %2843 = vmatpush1.bf16.msra.mxu0 %v2824
        %2844 = vmatprep.subr.bf16.mxu0 0
        %2845 = vmatpush1.bf16.msra.mxu0 %v2825
        %2846 = vmatprep.subr.bf16.mxu0 0
        %2847 = vmatpush1.bf16.msra.mxu0 %v2826
        %2848 = vmatprep.subr.bf16.mxu0 0
        %2849 = vmatpush1.bf16.msra.mxu0 %v2827
        %2850 = vmatprep.subr.bf16.mxu0 0
        %2851 = vmatpush1.bf16.msra.mxu0 %v2828
        %2852 = vmatprep.subr.bf16.mxu0 0
        %2853 = vmatpush1.bf16.msra.mxu0 %v2829
        %2854 = vmatprep.subr.bf16.mxu0 0
        %2855 = vmatpush1.bf16.msra.mxu0 0
        %2856 = vmatprep.subr.bf16.mxu0 0
        %2857 = vmatpush1.bf16.msra.mxu0 0
        %2858 = vmatprep.subr.bf16.mxu0 0
        %2859 = vmatpush1.bf16.msra.mxu0 0
        %2860 = vmatprep.subr.bf16.mxu0 0
        %2861 = vmatpush1.bf16.msra.mxu0 0
        %2862 = vmatprep.subr.bf16.mxu0 0
        %2863 = vmatpush1.bf16.msra.mxu0 0
        %2864 = vmatprep.subr.bf16.mxu0 0
        %2865 = vmatpush1.bf16.msra.mxu0 0
        %2866 = vmatprep.subr.bf16.mxu0 0
        %2867 = vmatpush1.bf16.msra.mxu0 0
        %2868 = vmatprep.subr.bf16.mxu0 0
        %2869 = vmatpush1.bf16.msra.mxu0 0
        %2870 = vmatprep.mubr.bf16.mxu0 0
        %2871 = vmatmul.mubr.bf16.gmra.mrb[0].mxu0 %v2768
        %v2872 = vpop.f32.mrb[0].mxu0
        %v2873 = vadd.f32 %v2789, %v2872
        %v2874 = vpop.f32.mrb[0].mxu0
        %v2875 = vpop.f32.mrb[0].mxu0
        %v2876 = vpop.f32.mrb[0].mxu0
        %2877 = vdwg.mxu0
        %v2878 = vadd.f32 %v2048, %v2873
        %2879 = vadd.xlane.f32.xlu0 %v2878
        %v2880 = vpop.xlane.xlu0 %2879
        %v2881 = vmul.f32 %v2880, %v1362
        %v2882 = vsub.f32 %v2878, %v2881
        %v2883 = vmul.f32 %v2882, %v2882
        %2884 = vadd.xlane.f32.xlu0 %v2883
        %v2885 = vpop.xlane.xlu0 %2884
        %v2886 = vmul.f32 %v2885, %v1362
        %v2887 = vadd.f32 %v2886, 1e-05
        %v2888 = vrsqrt.pop %v2887
        %v2889 = vmul.f32 %v2882, %v2888
        %v2890 = vlaneseq
        %v2891 = vshrl.u32 %v2890, 7
        %v2892 = vsub.s32 1, %v2891
        %v2893 = vrot.slane %v2050, %v2892
        %v2894 = vmul.f32 %v2889, %v2893
        %v2895 = vlaneseq
        %v2896 = vshrl.u32 %v2895, 7
        %v2897 = vsub.s32 2, %v2896
        %v2898 = vrot.slane %v2050, %v2897
        %v2899 = vadd.f32 %v2894, %v2898
        %v2900 = vpack.c.bf16 %v2899, %v2899
        %s2901 = scalar_lea.vmem [#allocation7], 256
        %v2902 = vld [vmem:[%s2901] sm:$0xff]
        %v2903 = vld [vmem:[%s2901 + $0x8] sm:$0xff]
        %v2904 = vld [vmem:[%s2901 + $0x10] sm:$0xff]
        %v2905 = vld [vmem:[%s2901 + $0x18] sm:$0xff]
        %v2906 = vld [vmem:[%s2901 + $0x20] sm:$0xff]
        %v2907 = vld [vmem:[%s2901 + $0x28] sm:$0xff]
        %v2908 = vld [vmem:[%s2901 + $0x30] sm:$0xff]
        %v2909 = vld [vmem:[%s2901 + $0x38] sm:$0xff]
        %v2910 = vld [vmem:[%s2901 + $0x40] sm:$0xff]
        %v2911 = vld [vmem:[%s2901 + $0x48] sm:$0xff]
        %v2912 = vld [vmem:[%s2901 + $0x50] sm:$0xff]
        %v2913 = vld [vmem:[%s2901 + $0x58] sm:$0xff]
        %v2914 = vld [vmem:[%s2901 + $0x60] sm:$0xff]
        %v2915 = vld [vmem:[%s2901 + $0x68] sm:$0xff]
        %v2916 = vld [vmem:[%s2901 + $0x70] sm:$0xff]
        %v2917 = vld [vmem:[%s2901 + $0x78] sm:$0xff]
        %v2918 = vld [vmem:[%s2901 + $0x80] sm:$0xff]
        %v2919 = vld [vmem:[%s2901 + $0x88] sm:$0xff]
        %v2920 = vld [vmem:[%s2901 + $0x90] sm:$0xff]
        %v2921 = vld [vmem:[%s2901 + $0x98] sm:$0xff]
        %v2922 = vld [vmem:[%s2901 + $0xa0] sm:$0xff]
        %v2923 = vld [vmem:[%s2901 + $0xa8] sm:$0xff]
        %v2924 = vld [vmem:[%s2901 + $0xb0] sm:$0xff]
        %v2925 = vld [vmem:[%s2901 + $0xb8] sm:$0xff]
        %v2926 = vld [vmem:[%s2901 + $0xc0] sm:$0xff]
        %v2927 = vld [vmem:[%s2901 + $0xc8] sm:$0xff]
        %v2928 = vld [vmem:[%s2901 + $0xd0] sm:$0xff]
        %v2929 = vld [vmem:[%s2901 + $0xd8] sm:$0xff]
        %v2930 = vld [vmem:[%s2901 + $0xe0] sm:$0xff]
        %v2931 = vld [vmem:[%s2901 + $0xe8] sm:$0xff]
        %v2932 = vld [vmem:[%s2901 + $0xf0] sm:$0xff]
        %v2933 = vld [vmem:[%s2901 + $0xf8] sm:$0xff]
        %s2934 = scalar_lea.vmem %s8, 4
        %v2935 = vld [vmem:[%s2934] sm:$0xf]
        %v2937 = vlaneseq
        %v2938 = vshrl.u32 %v2937, 7
        %v2939 = vsub.s32 0, %v2938
        %v2940 = vrot.slane %v2935, %v2939
        %v2941 = vlaneseq
        %v2942 = vshrl.u32 %v2941, 7
        %v2943 = vsub.s32 1, %v2942
        %v2944 = vrot.slane %v2935, %v2943
        %v2945 = vlaneseq
        %v2946 = vshrl.u32 %v2945, 7
        %v2947 = vsub.s32 2, %v2946
        %v2948 = vrot.slane %v2935, %v2947
        %v2949 = vlaneseq
        %v2950 = vshrl.u32 %v2949, 7
        %v2951 = vsub.s32 3, %v2950
        %v2952 = vrot.slane %v2935, %v2951
        %v2989 = vunpack.c.l.b16 %v2902
        %v2990 = vunpack.c.h.b16 %v2902
        %v2991 = vunpack.c.l.b16 %v2903
        %v2992 = vunpack.c.h.b16 %v2903
        %v2993 = vunpack.c.l.b16 %v2904
        %v2994 = vunpack.c.h.b16 %v2904
        %v2995 = vunpack.c.l.b16 %v2905
        %v2996 = vunpack.c.h.b16 %v2905
        %v2997 = vunpack.c.l.b16 %v2906
        %v2998 = vunpack.c.h.b16 %v2906
        %v2999 = vunpack.c.l.b16 %v2907
        %v3000 = vunpack.c.h.b16 %v2907
        %v3001 = vunpack.c.l.b16 %v2908
        %v3002 = vunpack.c.h.b16 %v2908
        %v3003 = vunpack.c.l.b16 %v2909
        %v3004 = vunpack.c.h.b16 %v2909
        %v3005 = vunpack.c.l.b16 %v2910
        %v3006 = vunpack.c.h.b16 %v2910
        %v3007 = vunpack.c.l.b16 %v2911
        %v3008 = vunpack.c.h.b16 %v2911
        %v3009 = vunpack.c.l.b16 %v2912
        %v3010 = vunpack.c.h.b16 %v2912
        %v3011 = vunpack.c.l.b16 %v2913
        %v3012 = vunpack.c.h.b16 %v2913
        %v3013 = vunpack.c.l.b16 %v2914
        %v3014 = vunpack.c.h.b16 %v2914
        %v3015 = vunpack.c.l.b16 %v2915
        %v3016 = vunpack.c.h.b16 %v2915
        %v3017 = vunpack.c.l.b16 %v2916
        %v3018 = vunpack.c.h.b16 %v2916
        %v3019 = vunpack.c.l.b16 %v2917
        %v3020 = vunpack.c.h.b16 %v2917
        %v3021 = vunpack.c.l.b16 %v2918
        %v3022 = vunpack.c.h.b16 %v2918
        %v3023 = vunpack.c.l.b16 %v2919
        %v3024 = vunpack.c.h.b16 %v2919
        %v3025 = vunpack.c.l.b16 %v2920
        %v3026 = vunpack.c.h.b16 %v2920
        %v3027 = vunpack.c.l.b16 %v2921
        %v3028 = vunpack.c.h.b16 %v2921
        %v3029 = vunpack.c.l.b16 %v2922
        %v3030 = vunpack.c.h.b16 %v2922
        %v3031 = vunpack.c.l.b16 %v2923
        %v3032 = vunpack.c.h.b16 %v2923
        %v3033 = vunpack.c.l.b16 %v2924
        %v3034 = vunpack.c.h.b16 %v2924
        %v3035 = vunpack.c.l.b16 %v2925
        %v3036 = vunpack.c.h.b16 %v2925
        %v3037 = vunpack.c.l.b16 %v2926
        %v3038 = vunpack.c.h.b16 %v2926
        %v3039 = vunpack.c.l.b16 %v2927
        %v3040 = vunpack.c.h.b16 %v2927
        %v3041 = vunpack.c.l.b16 %v2928
        %v3042 = vunpack.c.h.b16 %v2928
        %v3043 = vunpack.c.l.b16 %v2929
        %v3044 = vunpack.c.h.b16 %v2929
        %v3045 = vunpack.c.l.b16 %v2930
        %v3046 = vunpack.c.h.b16 %v2930
        %v3047 = vunpack.c.l.b16 %v2931
        %v3048 = vunpack.c.h.b16 %v2931
        %v3049 = vunpack.c.l.b16 %v2932
        %v3050 = vunpack.c.h.b16 %v2932
        %v3051 = vunpack.c.l.b16 %v2933
        %v3052 = vunpack.c.h.b16 %v2933
        %v3053 = vpack.c.b16 %v2993, %v2989
        %v3054 = vpack.c.b16 %v2994, %v2990
        %v3055 = vpack.c.b16 %v2995, %v2991
        %v3056 = vpack.c.b16 %v2996, %v2992
        %v3057 = vpack.c.b16 %v3001, %v2997
        %v3058 = vpack.c.b16 %v3002, %v2998
        %v3059 = vpack.c.b16 %v3003, %v2999
        %v3060 = vpack.c.b16 %v3004, %v3000
        %v3061 = vpack.c.b16 %v3009, %v3005
        %v3062 = vpack.c.b16 %v3010, %v3006
        %v3063 = vpack.c.b16 %v3011, %v3007
        %v3064 = vpack.c.b16 %v3012, %v3008
        %v3065 = vpack.c.b16 %v3017, %v3013
        %v3066 = vpack.c.b16 %v3018, %v3014
        %v3067 = vpack.c.b16 %v3019, %v3015
        %v3068 = vpack.c.b16 %v3020, %v3016
        %v3069 = vpack.c.b16 %v3025, %v3021
        %v3070 = vpack.c.b16 %v3026, %v3022
        %v3071 = vpack.c.b16 %v3027, %v3023
        %v3072 = vpack.c.b16 %v3028, %v3024
        %v3073 = vpack.c.b16 %v3033, %v3029
        %v3074 = vpack.c.b16 %v3034, %v3030
        %v3075 = vpack.c.b16 %v3035, %v3031
        %v3076 = vpack.c.b16 %v3036, %v3032
        %v3077 = vpack.c.b16 %v3041, %v3037
        %v3078 = vpack.c.b16 %v3042, %v3038
        %v3079 = vpack.c.b16 %v3043, %v3039
        %v3080 = vpack.c.b16 %v3044, %v3040
        %v3081 = vpack.c.b16 %v3049, %v3045
        %v3082 = vpack.c.b16 %v3050, %v3046
        %v3083 = vpack.c.b16 %v3051, %v3047
        %v3084 = vpack.c.b16 %v3052, %v3048
        %3117 = vmatprep.subr.bf16.mxu0 %v3054
        %3118 = vmatpush1.bf16.msra.mxu0 %v3053
        %3119 = vmatprep.subr.bf16.mxu0 %v3058
        %3120 = vmatpush1.bf16.msra.mxu0 %v3057
        %3121 = vmatprep.subr.bf16.mxu0 %v3062
        %3122 = vmatpush1.bf16.msra.mxu0 %v3061
        %3123 = vmatprep.subr.bf16.mxu0 %v3066
        %3124 = vmatpush1.bf16.msra.mxu0 %v3065
        %3125 = vmatprep.subr.bf16.mxu0 %v3070
        %3126 = vmatpush1.bf16.msra.mxu0 %v3069
        %3127 = vmatprep.subr.bf16.mxu0 %v3074
        %3128 = vmatpush1.bf16.msra.mxu0 %v3073
        %3129 = vmatprep.subr.bf16.mxu0 %v3078
        %3130 = vmatpush1.bf16.msra.mxu0 %v3077
        %3131 = vmatprep.subr.bf16.mxu0 %v3082
        %3132 = vmatpush1.bf16.msra.mxu0 %v3081
        %3133 = vmatprep.subr.bf16.mxu0 0
        %3134 = vmatpush1.bf16.msra.mxu0 0
        %3135 = vmatprep.subr.bf16.mxu0 0
        %3136 = vmatpush1.bf16.msra.mxu0 0
        %3137 = vmatprep.subr.bf16.mxu0 0
        %3138 = vmatpush1.bf16.msra.mxu0 0
        %3139 = vmatprep.subr.bf16.mxu0 0
        %3140 = vmatpush1.bf16.msra.mxu0 0
        %3141 = vmatprep.subr.bf16.mxu0 0
        %3142 = vmatpush1.bf16.msra.mxu0 0
        %3143 = vmatprep.subr.bf16.mxu0 0
        %3144 = vmatpush1.bf16.msra.mxu0 0
        %3145 = vmatprep.subr.bf16.mxu0 0
        %3146 = vmatpush1.bf16.msra.mxu0 0
        %3147 = vmatprep.subr.bf16.mxu0 0
        %3148 = vmatpush1.bf16.msra.mxu0 0
        %3149 = vmatprep.mubr.bf16.mxu0 0
        %3150 = vmatmul.mubr.bf16.gmra.mrb[0].mxu0 %v2900
        %v3151 = vpop.f32.mrb[0].mxu0
        %v3152 = vadd.f32 %v2940, %v3151
        %v3153 = vpop.f32.mrb[0].mxu0
        %v3154 = vadd.f32 %v2944, %v3153
        %v3155 = vpop.f32.mrb[0].mxu0
        %v3156 = vpop.f32.mrb[0].mxu0
        %3157 = vdwg.mxu0
        %3158 = vmatprep.subr.bf16.mxu0 %v3056
        %3159 = vmatpush1.bf16.msra.mxu0 %v3055
        %3160 = vmatprep.subr.bf16.mxu0 %v3060
        %3161 = vmatpush1.bf16.msra.mxu0 %v3059
        %3162 = vmatprep.subr.bf16.mxu0 %v3064
        %3163 = vmatpush1.bf16.msra.mxu0 %v3063
        %3164 = vmatprep.subr.bf16.mxu0 %v3068
        %3165 = vmatpush1.bf16.msra.mxu0 %v3067
        %3166 = vmatprep.subr.bf16.mxu0 %v3072
        %3167 = vmatpush1.bf16.msra.mxu0 %v3071
        %3168 = vmatprep.subr.bf16.mxu0 %v3076
        %3169 = vmatpush1.bf16.msra.mxu0 %v3075
        %3170 = vmatprep.subr.bf16.mxu0 %v3080
        %3171 = vmatpush1.bf16.msra.mxu0 %v3079
        %3172 = vmatprep.subr.bf16.mxu0 %v3084
        %3173 = vmatpush1.bf16.msra.mxu0 %v3083
        %3174 = vmatprep.subr.bf16.mxu0 0
        %3175 = vmatpush1.bf16.msra.mxu0 0
        %3176 = vmatprep.subr.bf16.mxu0 0
        %3177 = vmatpush1.bf16.msra.mxu0 0
        %3178 = vmatprep.subr.bf16.mxu0 0
        %3179 = vmatpush1.bf16.msra.mxu0 0
        %3180 = vmatprep.subr.bf16.mxu0 0
        %3181 = vmatpush1.bf16.msra.mxu0 0
        %3182 = vmatprep.subr.bf16.mxu0 0
        %3183 = vmatpush1.bf16.msra.mxu0 0
        %3184 = vmatprep.subr.bf16.mxu0 0
        %3185 = vmatpush1.bf16.msra.mxu0 0
        %3186 = vmatprep.subr.bf16.mxu0 0
        %3187 = vmatpush1.bf16.msra.mxu0 0
        %3188 = vmatprep.subr.bf16.mxu0 0
        %3189 = vmatpush1.bf16.msra.mxu0 0
        %3190 = vmatprep.mubr.bf16.mxu0 0
        %3191 = vmatmul.mubr.bf16.gmra.mrb[0].mxu0 %v2900
        %v3192 = vpop.f32.mrb[0].mxu0
        %v3193 = vadd.f32 %v2948, %v3192
        %v3194 = vpop.f32.mrb[0].mxu0
        %v3195 = vadd.f32 %v2952, %v3194
        %v3196 = vpop.f32.mrb[0].mxu0
        %v3197 = vpop.f32.mrb[0].mxu0
        %3198 = vdwg.mxu0
        %v3199 = vmax.f32 %v3152, 0.0
        %v3200 = vmax.f32 %v3154, 0.0
        %v3201 = vmax.f32 %v3193, 0.0
        %v3202 = vmax.f32 %v3195, 0.0
        %v3203 = vpack.c.bf16 %v3199, %v3199
        %v3204 = vpack.c.bf16 %v3200, %v3200
        %v3205 = vpack.c.bf16 %v3201, %v3201
        %v3206 = vpack.c.bf16 %v3202, %v3202
        %s3207 = scalar_lea.vmem [#allocation8], 256
        %v3208 = vld [vmem:[%s3207] sm:$0xf]
        %v3209 = vld [vmem:[%s3207 + $0x4] sm:$0xf]
        %v3210 = vld [vmem:[%s3207 + $0x8] sm:$0xf]
        %v3211 = vld [vmem:[%s3207 + $0xc] sm:$0xf]
        %v3212 = vld [vmem:[%s3207 + $0x10] sm:$0xf]
        %v3213 = vld [vmem:[%s3207 + $0x14] sm:$0xf]
        %v3214 = vld [vmem:[%s3207 + $0x18] sm:$0xf]
        %v3215 = vld [vmem:[%s3207 + $0x1c] sm:$0xf]
        %v3216 = vld [vmem:[%s3207 + $0x20] sm:$0xf]
        %v3217 = vld [vmem:[%s3207 + $0x24] sm:$0xf]
        %v3218 = vld [vmem:[%s3207 + $0x28] sm:$0xf]
        %v3219 = vld [vmem:[%s3207 + $0x2c] sm:$0xf]
        %v3220 = vld [vmem:[%s3207 + $0x30] sm:$0xf]
        %v3221 = vld [vmem:[%s3207 + $0x34] sm:$0xf]
        %v3222 = vld [vmem:[%s3207 + $0x38] sm:$0xf]
        %v3223 = vld [vmem:[%s3207 + $0x3c] sm:$0xf]
        %v3224 = vld [vmem:[%s3207 + $0x40] sm:$0xf]
        %v3225 = vld [vmem:[%s3207 + $0x44] sm:$0xf]
        %v3226 = vld [vmem:[%s3207 + $0x48] sm:$0xf]
        %v3227 = vld [vmem:[%s3207 + $0x4c] sm:$0xf]
        %v3228 = vld [vmem:[%s3207 + $0x50] sm:$0xf]
        %v3229 = vld [vmem:[%s3207 + $0x54] sm:$0xf]
        %v3230 = vld [vmem:[%s3207 + $0x58] sm:$0xf]
        %v3231 = vld [vmem:[%s3207 + $0x5c] sm:$0xf]
        %v3232 = vld [vmem:[%s3207 + $0x60] sm:$0xf]
        %v3233 = vld [vmem:[%s3207 + $0x64] sm:$0xf]
        %v3234 = vld [vmem:[%s3207 + $0x68] sm:$0xf]
        %v3235 = vld [vmem:[%s3207 + $0x6c] sm:$0xf]
        %v3236 = vld [vmem:[%s3207 + $0x70] sm:$0xf]
        %v3237 = vld [vmem:[%s3207 + $0x74] sm:$0xf]
        %v3238 = vld [vmem:[%s3207 + $0x78] sm:$0xf]
        %v3239 = vld [vmem:[%s3207 + $0x7c] sm:$0xf]
        %v3240 = vld [vmem:[%s3207 + $0x80] sm:$0xf]
        %v3241 = vld [vmem:[%s3207 + $0x84] sm:$0xf]
        %v3242 = vld [vmem:[%s3207 + $0x88] sm:$0xf]
        %v3243 = vld [vmem:[%s3207 + $0x8c] sm:$0xf]
        %v3244 = vld [vmem:[%s3207 + $0x90] sm:$0xf]
        %v3245 = vld [vmem:[%s3207 + $0x94] sm:$0xf]
        %v3246 = vld [vmem:[%s3207 + $0x98] sm:$0xf]
        %v3247 = vld [vmem:[%s3207 + $0x9c] sm:$0xf]
        %v3248 = vld [vmem:[%s3207 + $0xa0] sm:$0xf]
        %v3249 = vld [vmem:[%s3207 + $0xa4] sm:$0xf]
        %v3250 = vld [vmem:[%s3207 + $0xa8] sm:$0xf]
        %v3251 = vld [vmem:[%s3207 + $0xac] sm:$0xf]
        %v3252 = vld [vmem:[%s3207 + $0xb0] sm:$0xf]
        %v3253 = vld [vmem:[%s3207 + $0xb4] sm:$0xf]
        %v3254 = vld [vmem:[%s3207 + $0xb8] sm:$0xf]
        %v3255 = vld [vmem:[%s3207 + $0xbc] sm:$0xf]
        %v3256 = vld [vmem:[%s3207 + $0xc0] sm:$0xf]
        %v3257 = vld [vmem:[%s3207 + $0xc4] sm:$0xf]
        %v3258 = vld [vmem:[%s3207 + $0xc8] sm:$0xf]
        %v3259 = vld [vmem:[%s3207 + $0xcc] sm:$0xf]
        %v3260 = vld [vmem:[%s3207 + $0xd0] sm:$0xf]
        %v3261 = vld [vmem:[%s3207 + $0xd4] sm:$0xf]
        %v3262 = vld [vmem:[%s3207 + $0xd8] sm:$0xf]
        %v3263 = vld [vmem:[%s3207 + $0xdc] sm:$0xf]
        %v3264 = vld [vmem:[%s3207 + $0xe0] sm:$0xf]
        %v3265 = vld [vmem:[%s3207 + $0xe4] sm:$0xf]
        %v3266 = vld [vmem:[%s3207 + $0xe8] sm:$0xf]
        %v3267 = vld [vmem:[%s3207 + $0xec] sm:$0xf]
        %v3268 = vld [vmem:[%s3207 + $0xf0] sm:$0xf]
        %v3269 = vld [vmem:[%s3207 + $0xf4] sm:$0xf]
        %v3270 = vld [vmem:[%s3207 + $0xf8] sm:$0xf]
        %v3271 = vld [vmem:[%s3207 + $0xfc] sm:$0xf]
        %v3272 = vlaneseq
        %v3273 = vshrl.u32 %v3272, 7
        %v3274 = vsub.s32 3, %v3273
        %v3275 = vrot.slane %v2050, %v3274
        %v3340 = vunpack.c.l.b16 %v3208
        %v3341 = vunpack.c.l.b16 %v3209
        %v3342 = vunpack.c.l.b16 %v3210
        %v3343 = vunpack.c.l.b16 %v3211
        %v3344 = vunpack.c.l.b16 %v3212
        %v3345 = vunpack.c.l.b16 %v3213
        %v3346 = vunpack.c.l.b16 %v3214
        %v3347 = vunpack.c.l.b16 %v3215
        %v3348 = vunpack.c.l.b16 %v3216
        %v3349 = vunpack.c.l.b16 %v3217
        %v3350 = vunpack.c.l.b16 %v3218
        %v3351 = vunpack.c.l.b16 %v3219
        %v3352 = vunpack.c.l.b16 %v3220
        %v3353 = vunpack.c.l.b16 %v3221
        %v3354 = vunpack.c.l.b16 %v3222
        %v3355 = vunpack.c.l.b16 %v3223
        %v3356 = vunpack.c.l.b16 %v3224
        %v3357 = vunpack.c.l.b16 %v3225
        %v3358 = vunpack.c.l.b16 %v3226
        %v3359 = vunpack.c.l.b16 %v3227
        %v3360 = vunpack.c.l.b16 %v3228
        %v3361 = vunpack.c.l.b16 %v3229
        %v3362 = vunpack.c.l.b16 %v3230
        %v3363 = vunpack.c.l.b16 %v3231
        %v3364 = vunpack.c.l.b16 %v3232
        %v3365 = vunpack.c.l.b16 %v3233
        %v3366 = vunpack.c.l.b16 %v3234
        %v3367 = vunpack.c.l.b16 %v3235
        %v3368 = vunpack.c.l.b16 %v3236
        %v3369 = vunpack.c.l.b16 %v3237
        %v3370 = vunpack.c.l.b16 %v3238
        %v3371 = vunpack.c.l.b16 %v3239
        %v3372 = vunpack.c.l.b16 %v3240
        %v3373 = vunpack.c.l.b16 %v3241
        %v3374 = vunpack.c.l.b16 %v3242
        %v3375 = vunpack.c.l.b16 %v3243
        %v3376 = vunpack.c.l.b16 %v3244
        %v3377 = vunpack.c.l.b16 %v3245
        %v3378 = vunpack.c.l.b16 %v3246
        %v3379 = vunpack.c.l.b16 %v3247
        %v3380 = vunpack.c.l.b16 %v3248
        %v3381 = vunpack.c.l.b16 %v3249
        %v3382 = vunpack.c.l.b16 %v3250
        %v3383 = vunpack.c.l.b16 %v3251
        %v3384 = vunpack.c.l.b16 %v3252
        %v3385 = vunpack.c.l.b16 %v3253
        %v3386 = vunpack.c.l.b16 %v3254
        %v3387 = vunpack.c.l.b16 %v3255
        %v3388 = vunpack.c.l.b16 %v3256
        %v3389 = vunpack.c.l.b16 %v3257
        %v3390 = vunpack.c.l.b16 %v3258
        %v3391 = vunpack.c.l.b16 %v3259
        %v3392 = vunpack.c.l.b16 %v3260
        %v3393 = vunpack.c.l.b16 %v3261
        %v3394 = vunpack.c.l.b16 %v3262
        %v3395 = vunpack.c.l.b16 %v3263
        %v3396 = vunpack.c.l.b16 %v3264
        %v3397 = vunpack.c.l.b16 %v3265
        %v3398 = vunpack.c.l.b16 %v3266
        %v3399 = vunpack.c.l.b16 %v3267
        %v3400 = vunpack.c.l.b16 %v3268
        %v3401 = vunpack.c.l.b16 %v3269
        %v3402 = vunpack.c.l.b16 %v3270
        %v3403 = vunpack.c.l.b16 %v3271
        %v3404 = vpack.c.b16 %v3341, %v3340
        %v3405 = vpack.c.b16 %v3343, %v3342
        %v3406 = vpack.c.b16 %v3345, %v3344
        %v3407 = vpack.c.b16 %v3347, %v3346
        %v3408 = vpack.c.b16 %v3349, %v3348
        %v3409 = vpack.c.b16 %v3351, %v3350
        %v3410 = vpack.c.b16 %v3353, %v3352
        %v3411 = vpack.c.b16 %v3355, %v3354
        %v3412 = vpack.c.b16 %v3357, %v3356
        %v3413 = vpack.c.b16 %v3359, %v3358
        %v3414 = vpack.c.b16 %v3361, %v3360
        %v3415 = vpack.c.b16 %v3363, %v3362
        %v3416 = vpack.c.b16 %v3365, %v3364
        %v3417 = vpack.c.b16 %v3367, %v3366
        %v3418 = vpack.c.b16 %v3369, %v3368
        %v3419 = vpack.c.b16 %v3371, %v3370
        %v3420 = vpack.c.b16 %v3373, %v3372
        %v3421 = vpack.c.b16 %v3375, %v3374
        %v3422 = vpack.c.b16 %v3377, %v3376
        %v3423 = vpack.c.b16 %v3379, %v3378
        %v3424 = vpack.c.b16 %v3381, %v3380
        %v3425 = vpack.c.b16 %v3383, %v3382
        %v3426 = vpack.c.b16 %v3385, %v3384
        %v3427 = vpack.c.b16 %v3387, %v3386
        %v3428 = vpack.c.b16 %v3389, %v3388
        %v3429 = vpack.c.b16 %v3391, %v3390
        %v3430 = vpack.c.b16 %v3393, %v3392
        %v3431 = vpack.c.b16 %v3395, %v3394
        %v3432 = vpack.c.b16 %v3397, %v3396
        %v3433 = vpack.c.b16 %v3399, %v3398
        %v3434 = vpack.c.b16 %v3401, %v3400
        %v3435 = vpack.c.b16 %v3403, %v3402
        %3468 = vmatprep.subr.bf16.mxu0 0
        %3469 = vmatpush1.bf16.msra.mxu0 %v3404
        %3470 = vmatprep.subr.bf16.mxu0 0
        %3471 = vmatpush1.bf16.msra.mxu0 %v3405
        %3472 = vmatprep.subr.bf16.mxu0 0
        %3473 = vmatpush1.bf16.msra.mxu0 %v3406
        %3474 = vmatprep.subr.bf16.mxu0 0
        %3475 = vmatpush1.bf16.msra.mxu0 %v3407
        %3476 = vmatprep.subr.bf16.mxu0 0
        %3477 = vmatpush1.bf16.msra.mxu0 %v3408
        %3478 = vmatprep.subr.bf16.mxu0 0
        %3479 = vmatpush1.bf16.msra.mxu0 %v3409
        %3480 = vmatprep.subr.bf16.mxu0 0
        %3481 = vmatpush1.bf16.msra.mxu0 %v3410
        %3482 = vmatprep.subr.bf16.mxu0 0
        %3483 = vmatpush1.bf16.msra.mxu0 %v3411
        %3484 = vmatprep.subr.bf16.mxu0 0
        %3485 = vmatpush1.bf16.msra.mxu0 %v3412
        %3486 = vmatprep.subr.bf16.mxu0 0
        %3487 = vmatpush1.bf16.msra.mxu0 %v3413
        %3488 = vmatprep.subr.bf16.mxu0 0
        %3489 = vmatpush1.bf16.msra.mxu0 %v3414
        %3490 = vmatprep.subr.bf16.mxu0 0
        %3491 = vmatpush1.bf16.msra.mxu0 %v3415
        %3492 = vmatprep.subr.bf16.mxu0 0
        %3493 = vmatpush1.bf16.msra.mxu0 %v3416
        %3494 = vmatprep.subr.bf16.mxu0 0
        %3495 = vmatpush1.bf16.msra.mxu0 %v3417
        %3496 = vmatprep.subr.bf16.mxu0 0
        %3497 = vmatpush1.bf16.msra.mxu0 %v3418
        %3498 = vmatprep.subr.bf16.mxu0 0
        %3499 = vmatpush1.bf16.msra.mxu0 %v3419
        %3500 = vmatprep.mubr.bf16.mxu0 %v3204
        %3501 = vmatmul.mubr.bf16.gmra.mrb[0].mxu0 %v3203
        %v3502 = vpop.f32.mrb[0].mxu0
        %v3503 = vadd.f32 %v3275, %v3502
        %v3504 = vpop.f32.mrb[0].mxu0
        %v3505 = vpop.f32.mrb[0].mxu0
        %v3506 = vpop.f32.mrb[0].mxu0
        %3507 = vdwg.mxu0
        %3508 = vmatprep.subr.bf16.mxu0 0
        %3509 = vmatpush1.bf16.msra.mxu0 %v3420
        %3510 = vmatprep.subr.bf16.mxu0 0
        %3511 = vmatpush1.bf16.msra.mxu0 %v3421
        %3512 = vmatprep.subr.bf16.mxu0 0
        %3513 = vmatpush1.bf16.msra.mxu0 %v3422
        %3514 = vmatprep.subr.bf16.mxu0 0
        %3515 = vmatpush1.bf16.msra.mxu0 %v3423
        %3516 = vmatprep.subr.bf16.mxu0 0
        %3517 = vmatpush1.bf16.msra.mxu0 %v3424
        %3518 = vmatprep.subr.bf16.mxu0 0
        %3519 = vmatpush1.bf16.msra.mxu0 %v3425
        %3520 = vmatprep.subr.bf16.mxu0 0
        %3521 = vmatpush1.bf16.msra.mxu0 %v3426
        %3522 = vmatprep.subr.bf16.mxu0 0
        %3523 = vmatpush1.bf16.msra.mxu0 %v3427
        %3524 = vmatprep.subr.bf16.mxu0 0
        %3525 = vmatpush1.bf16.msra.mxu0 %v3428
        %3526 = vmatprep.subr.bf16.mxu0 0
        %3527 = vmatpush1.bf16.msra.mxu0 %v3429
        %3528 = vmatprep.subr.bf16.mxu0 0
        %3529 = vmatpush1.bf16.msra.mxu0 %v3430
        %3530 = vmatprep.subr.bf16.mxu0 0
        %3531 = vmatpush1.bf16.msra.mxu0 %v3431
        %3532 = vmatprep.subr.bf16.mxu0 0
        %3533 = vmatpush1.bf16.msra.mxu0 %v3432
        %3534 = vmatprep.subr.bf16.mxu0 0
        %3535 = vmatpush1.bf16.msra.mxu0 %v3433
        %3536 = vmatprep.subr.bf16.mxu0 0
        %3537 = vmatpush1.bf16.msra.mxu0 %v3434
        %3538 = vmatprep.subr.bf16.mxu0 0
        %3539 = vmatpush1.bf16.msra.mxu0 %v3435
        %3540 = vmatprep.mubr.bf16.mxu0 %v3206
        %3541 = vmatmul.mubr.bf16.gmra.mrb[0].mxu0 %v3205
        %v3542 = vpop.f32.mrb[0].mxu0
        %v3543 = vadd.f32 %v3503, %v3542
        %v3544 = vpop.f32.mrb[0].mxu0
        %v3545 = vpop.f32.mrb[0].mxu0
        %v3546 = vpop.f32.mrb[0].mxu0
        %3547 = vdwg.mxu0
        %v3548 = vadd.f32 %v2899, %v3543
        %3549 = vadd.xlane.f32.xlu0 %v3548
        %v3550 = vpop.xlane.xlu0 %3549
        %v3551 = vmul.f32 %v3550, %v1362
        %v3552 = vsub.f32 %v3548, %v3551
        %v3553 = vmul.f32 %v3552, %v3552
        %3554 = vadd.xlane.f32.xlu0 %v3553
        %v3555 = vpop.xlane.xlu0 %3554
        %v3556 = vmul.f32 %v3555, %v1362
        %v3557 = vadd.f32 %v3556, 1e-05
        %v3558 = vrsqrt.pop %v3557
        %v3559 = vmul.f32 %v3552, %v3558
        %v3560 = vlaneseq
        %v3561 = vshrl.u32 %v3560, 7
        %v3562 = vsub.s32 4, %v3561
        %v3563 = vrot.slane %v2050, %v3562
        %v3564 = vmul.f32 %v3559, %v3563
        %v3565 = vlaneseq
        %v3566 = vshrl.u32 %v3565, 7
        %v3567 = vsub.s32 5, %v3566
        %v3568 = vrot.slane %v2050, %v3567
        %v3569 = vadd.f32 %v3564, %v3568
        %v3570 = vld [vmem:[%s11] sm:$0x1]
        %v3571 = vpack.c.bf16 %v3569, %v3569
        %v3572 = vld [vmem:[%s12] sm:$0x3]
        %3574 = vset.pattern.permute.xlu0 0
        %3575 = vperm.xlu0 %3574, %v3572
        %v3576 = vpop.permute.xlu0 %3575
        %3578 = vmatprep.subr.bf16.mxu0 0
        %3579 = vmatpush1.bf16.xpose.msra.mxu0 %v3571
        %3580 = vmatprep.subr.bf16.mxu0 0
        %3581 = vmatpush1.bf16.xpose.msra.mxu0 0
        %3582 = vmatprep.subr.bf16.mxu0 0
        %3583 = vmatpush1.bf16.xpose.msra.mxu0 0
        %3584 = vmatprep.subr.bf16.mxu0 0
        %3585 = vmatpush1.bf16.xpose.msra.mxu0 0
        %3586 = vmatprep.subr.bf16.mxu0 0
        %3587 = vmatpush1.bf16.xpose.msra.mxu0 0
        %3588 = vmatprep.subr.bf16.mxu0 0
        %3589 = vmatpush1.bf16.xpose.msra.mxu0 0
        %3590 = vmatprep.subr.bf16.mxu0 0
        %3591 = vmatpush1.bf16.xpose.msra.mxu0 0
        %3592 = vmatprep.subr.bf16.mxu0 0
        %3593 = vmatpush1.bf16.xpose.msra.mxu0 0
        %3594 = vmatprep.subr.bf16.mxu0 0
        %3595 = vmatpush1.bf16.xpose.msra.mxu0 0
        %3596 = vmatprep.subr.bf16.mxu0 0
        %3597 = vmatpush1.bf16.xpose.msra.mxu0 0
        %3598 = vmatprep.subr.bf16.mxu0 0
        %3599 = vmatpush1.bf16.xpose.msra.mxu0 0
        %3600 = vmatprep.subr.bf16.mxu0 0
        %3601 = vmatpush1.bf16.xpose.msra.mxu0 0
        %3602 = vmatprep.subr.bf16.mxu0 0
        %3603 = vmatpush1.bf16.xpose.msra.mxu0 0
        %3604 = vmatprep.subr.bf16.mxu0 0
        %3605 = vmatpush1.bf16.xpose.msra.mxu0 0
        %3606 = vmatprep.subr.bf16.mxu0 0
        %3607 = vmatpush1.bf16.xpose.msra.mxu0 0
        %3608 = vmatprep.subr.bf16.mxu0 0
        %3609 = vmatpush1.bf16.xpose.msra.mxu0 0
        %3610 = vmatprep.mubr.bf16.mxu0 0
        %3611 = vmatmul.mubr.bf16.gmra.mrb[0].mxu0 %v3570
        %v3612 = vpop.f32.mrb[0].mxu0
        %v3613 = vadd.f32 %v3576, %v3612
        %v3614 = vpop.f32.mrb[0].mxu0
        %v3615 = vpop.f32.mrb[0].mxu0
        %v3616 = vpop.f32.mrb[0].mxu0
        %3617 = vdwg.mxu0
        %vm3618 = vcmask 58368
        %3619 = vst.msk [vmem:[%s490] sm:$0x3] %vm3618, %v3613
        %s3620 = sand.u32 %s316, 1
        %s3621 = scalar_lea.sflag [#allocation4], %s3620
        %s3622 = sand.u32 %s316, 1
        %s3623 = smul.addr %s3622, 2
        %s3624 = scalar_lea.vmem [#allocation10], %s3623
        // Predicated region
        $region89: #{tpu_custom_call.1} parent=71 // pred_check
          %p3625 = pneg %p326
        $region90: #{tpu_custom_call.1} parent=71 // pred_check_branch
          %3627 = sbr.rel (%p3625) target = $region92
        $region91: #{tpu_custom_call.1} parent=71 // pred_region
          %s3629 = ssub.s32 32, 32
          %3630 = vsyncadd %s3621, %s3629
          %s3631 = smul.addr %s30, 32
          %s3632 = scalar_lea.hbm %s13, %s3631
          %s3634 = sshll.u32 %s3624, 4
          %s3635 = int_to_ptr.vmem [resolvable:$true] %s3634
          %3637 = dma.vmem_to_hbm [thread:$0]  %s3635, 32, %s3632, %s3621
        $region92: #{tpu_custom_call.1} parent=71 // pred_fallthru
          _
      $region72: #{tpu_custom_call.1} parent=5 // pred_fallthru
        _
      %p3638 = scmp.le.s32.totalorder 2, %s25
      // Predicated region
      $region93: #{tpu_custom_call.1} parent=5 // pred_check
        %p3639 = pneg %p3638
      $region94: #{tpu_custom_call.1} parent=5 // pred_check_branch
        %3641 = sbr.rel (%p3639) target = $region96
      $region95: #{tpu_custom_call.1} parent=5 // pred_region
        %s3642 = ssub.s32 %s25, 2
        // Predicated region
        $region97: #{tpu_custom_call.1} parent=95 // pred_check
          %p3643 = pneg %p332
        $region98: #{tpu_custom_call.1} parent=95 // pred_check_branch
          %3645 = sbr.rel (%p3643) target = $region100
        $region99: #{tpu_custom_call.1} parent=95 // pred_region
          %s3646 = sand.u32 %s317, 1
          %s3647 = scalar_lea.sflag [#allocation4], %s3646
          %s3648 = sand.u32 %s317, 1
          %s3649 = smul.addr %s3648, 2
          %s3650 = scalar_lea.vmem [#allocation10], %s3649
          %3651 = dma.done %s3647, 32
        $region100: #{tpu_custom_call.1} parent=95 // pred_fallthru
          _
      $region96: #{tpu_custom_call.1} parent=5 // pred_fallthru
        _
    $region6: #{tpu_custom_call.1} parent=1 // loop_footer
      %s29 = sadd.s32 1, %s25
    $region7: #{tpu_custom_call.1} parent=1 // loop_footer_branch
      %24 = sbr.rel target = $region3
    $region8: #{tpu_custom_call.1} parent=1 // loop_exit
      _
    %3652 = vsyncpa [#allocation3], 1
    %s3653 = scalar_lea.sflag [#allocation3], 1
    %3654 = vsyncpa %s3653, 1
    %3655 = vsyncpa [#allocation6], 1
    %3656 = vsyncpa [#allocation9], 1
    %3657 = vsyncpa [#allocation4], 1
    %s3658 = scalar_lea.sflag [#allocation4], 1
    %3659 = vsyncpa %s3658, 1

</llo_original>
